<compile_context>
chip_gen: v7x
topology: tpu7x:2x2x1
jax: 0.10.0
libtpu: 0.0.40
codegen_flags: <defaults>
</compile_context>

<pallas_src>
import functools
import math

import jax
import jax.numpy as jnp
from jax.experimental import pallas as pl
from jax.experimental.pallas import tpu as pltpu


_FC_ROW_BLOCK = 512        # big row tiles keep the fc matmul near the roofline
_MAX_TIME_BLOCK = 32       # timesteps processed per grid step of the recurrence


# ----------------------------------------------------------------------------
# LSTM cell math.  Gate columns are packed [i, f, o, g] so one sigmoid covers
# the first 3H columns and one tanh the last H.
# ----------------------------------------------------------------------------
def _lstm_cell(g, h, c, *, hidden, valid=None):
    H = hidden
    ifo = jax.nn.sigmoid(g[:, :3 * H])
    gg = jnp.tanh(g[:, 3 * H:])
    c_new = ifo[:, H:2 * H] * c + ifo[:, :H] * gg
    h_new = ifo[:, 2 * H:] * jnp.tanh(c_new)
    if valid is not None:
        # Padded timesteps hold state; the next layer re-masks and the final
        # [:T] slice discards those rows, matching the unpadded semantics.
        c_new = jnp.where(valid, c_new, c)
        h_new = jnp.where(valid, h_new, h)
    return h_new, c_new


def _recurrence(gf_all, gb_all, whh_ref, of_ref, ob_ref, h_scr, c_scr, *,
                hidden, time_block, batch, seq_len, padded):
    """Shared bidirectional recurrence over one time chunk.

    gf_all / gb_all: (TB*B, 4H) f32 pre-projected input gates for the chunk
    the forward / backward chain is walking.  The two chains are interleaved
    per step so their independent MXU/EUP work overlaps on the serial path.
    """
    H, B, TB = hidden, batch, time_block
    t = pl.program_id(0)
    n_t = pl.num_programs(0)

    @pl.when(t == 0)
    def _():
        h_scr[...] = jnp.zeros_like(h_scr)
        c_scr[...] = jnp.zeros_like(c_scr)

    whh_f = whh_ref[0]                       # (H, 4H) bf16, chunk-invariant
    whh_b = whh_ref[1]

    # Carry h/c as values across the statically unrolled chunk; the VMEM
    # scratch is only the cross-chunk carry (written once per chunk).
    h_f = h_scr[0]
    c_f = c_scr[0]
    h_b = h_scr[1]
    c_b = c_scr[1]

    fwd_base = t * TB                        # forward walks chunks 0 .. n_t-1
    bwd_base = (n_t - 1 - t) * TB            # backward walks chunks n_t-1 .. 0

    for j in range(TB):                      # static offsets -> aligned vld/vst
        jf = j                               # forward step within its chunk
        jb = TB - 1 - j                      # backward step within its chunk

        g_f = gf_all[jf * B:(jf + 1) * B] + jnp.dot(
            h_f.astype(jnp.bfloat16), whh_f, preferred_element_type=jnp.float32)
        g_b = gb_all[jb * B:(jb + 1) * B] + jnp.dot(
            h_b.astype(jnp.bfloat16), whh_b, preferred_element_type=jnp.float32)

        vf = ((fwd_base + jf) < seq_len) if padded else None
        vb = ((bwd_base + jb) < seq_len) if padded else None
        h_f, c_f = _lstm_cell(g_f, h_f, c_f, hidden=H, valid=vf)
        h_b, c_b = _lstm_cell(g_b, h_b, c_b, hidden=H, valid=vb)

        of_ref[jf * B:(jf + 1) * B, :] = h_f.astype(of_ref.dtype)
        ob_ref[jb * B:(jb + 1) * B, :] = h_b.astype(ob_ref.dtype)

    h_scr[0] = h_f
    c_scr[0] = c_f
    h_scr[1] = h_b
    c_scr[1] = c_b


def _bilstm_l0_kernel(xf_ref, xb_ref, wih_ref, whh_ref, bias_ref,
                      of_ref, ob_ref, h_scr, c_scr, **cfg):
    # Fused input projection: one (TB*B, D) @ (D, 4H) MXU matmul per direction
    # per grid step -- the gates never round-trip through HBM.
    gf_all = jnp.dot(xf_ref[...], wih_ref[0],
                     preferred_element_type=jnp.float32) + bias_ref[0]
    gb_all = jnp.dot(xb_ref[...], wih_ref[1],
                     preferred_element_type=jnp.float32) + bias_ref[1]
    _recurrence(gf_all, gb_all, whh_ref, of_ref, ob_ref, h_scr, c_scr, **cfg)


def _bilstm_ln_kernel(pff_ref, pbf_ref, pfb_ref, pbb_ref,
                      wa_ref, wb_ref, whh_ref, bias_ref,
                      of_ref, ob_ref, h_scr, c_scr, **cfg):
    # '[h_fwd | h_bwd] @ W_ih' computed as two matmuls, so the previous
    # layer's direction outputs are never concatenated in HBM.
    gf_all = (jnp.dot(pff_ref[...], wa_ref[0], preferred_element_type=jnp.float32)
              + jnp.dot(pbf_ref[...], wb_ref[0], preferred_element_type=jnp.float32)
              + bias_ref[0])
    gb_all = (jnp.dot(pfb_ref[...], wa_ref[1], preferred_element_type=jnp.float32)
              + jnp.dot(pbb_ref[...], wb_ref[1], preferred_element_type=jnp.float32)
              + bias_ref[1])
    _recurrence(gf_all, gb_all, whh_ref, of_ref, ob_ref, h_scr, c_scr, **cfg)


def _run_bilstm(kernel_fn, args, in_specs, *, rows, hidden, batch,
                time_block, t_pad, seq_len):
    n_t = t_pad // time_block
    rb = time_block * batch
    kernel = functools.partial(
        kernel_fn, hidden=hidden, time_block=time_block, batch=batch,
        seq_len=seq_len, padded=(seq_len != t_pad))
    row_fwd = lambda t: (t, 0)
    row_bwd = lambda t: (n_t - 1 - t, 0)
    return pl.pallas_call(
        kernel,
        out_shape=(jax.ShapeDtypeStruct((rows, hidden), jnp.bfloat16),
                   jax.ShapeDtypeStruct((rows, hidden), jnp.bfloat16)),
        grid_spec=pltpu.PrefetchScalarGridSpec(
            num_scalar_prefetch=0,
            grid=(n_t,),
            in_specs=in_specs,
            out_specs=[pl.BlockSpec((rb, hidden), row_fwd),
                       pl.BlockSpec((rb, hidden), row_bwd)],
            scratch_shapes=[pltpu.VMEM((2, batch, hidden), jnp.float32),  # h
                            pltpu.VMEM((2, batch, hidden), jnp.float32)],  # c
        ),
        compiler_params=pltpu.CompilerParams(
            # the single grid axis carries the recurrent state
            dimension_semantics=("arbitrary",)),
    )(*args)


def run_bilstm_l0(x2d, wih, whh, bias, *, batch, time_block, seq_len, t_pad):
    """x2d: (t_pad*B, D) bf16 (row = time*B + batch) -> (h_fwd, h_bwd)."""
    rows, D = x2d.shape
    G = whh.shape[-1]
    H = G // 4
    n_t = t_pad // time_block
    rb = time_block * batch
    row_fwd = lambda t: (t, 0)
    row_bwd = lambda t: (n_t - 1 - t, 0)
    const3 = lambda t: (0, 0, 0)
    in_specs = [
        pl.BlockSpec((rb, D), row_fwd),    # x rows consumed by the fwd chain
        pl.BlockSpec((rb, D), row_bwd),    # x rows consumed by the bwd chain
        pl.BlockSpec((2, D, G), const3),   # W_ih, both directions (invariant)
        pl.BlockSpec((2, H, G), const3),   # W_hh (invariant)
        pl.BlockSpec((2, 1, G), const3),   # fused bias (invariant)
    ]
    return _run_bilstm(_bilstm_l0_kernel, (x2d, x2d, wih, whh, bias), in_specs,
                       rows=rows, hidden=H, batch=batch, time_block=time_block,
                       t_pad=t_pad, seq_len=seq_len)


def run_bilstm_ln(hf2d, hb2d, wa, wb, whh, bias, *, batch, time_block,
                  seq_len, t_pad):
    """Layer > 0: inputs are the previous layer's per-direction slabs."""
    rows, Hp = hf2d.shape
    G = whh.shape[-1]
    H = G // 4
    n_t = t_pad // time_block
    rb = time_block * batch
    row_fwd = lambda t: (t, 0)
    row_bwd = lambda t: (n_t - 1 - t, 0)
    const3 = lambda t: (0, 0, 0)
    # NOTE (v7x, large H): for H >= ~1024 the (2, Hp, 4H) weight blocks should
    # additionally be K/N-tiled (extra grid axis + f32 accumulator) and/or
    # single-buffered to fit the 64 MiB/TC VMEM budget.
    in_specs = [
        pl.BlockSpec((rb, Hp), row_fwd),   # prev h_fwd rows, fwd chain's chunk
        pl.BlockSpec((rb, Hp), row_fwd),   # prev h_bwd rows, fwd chain's chunk
        pl.BlockSpec((rb, Hp), row_bwd),   # prev h_fwd rows, bwd chain's chunk
        pl.BlockSpec((rb, Hp), row_bwd),   # prev h_bwd rows, bwd chain's chunk
        pl.BlockSpec((2, Hp, G), const3),  # W_ih rows acting on h_fwd
        pl.BlockSpec((2, Hp, G), const3),  # W_ih rows acting on h_bwd
        pl.BlockSpec((2, H, G), const3),   # W_hh
        pl.BlockSpec((2, 1, G), const3),   # fused bias
    ]
    return _run_bilstm(_bilstm_ln_kernel,
                       (hf2d, hb2d, hf2d, hb2d, wa, wb, whh, bias), in_specs,
                       rows=rows, hidden=H, batch=batch, time_block=time_block,
                       t_pad=t_pad, seq_len=seq_len)


# ----------------------------------------------------------------------------
# Per-timestep Linear head: y = h_fwd @ W_top + h_bwd @ W_bot + b (lane-padded)
# ----------------------------------------------------------------------------
def _fc_kernel(a_ref, b_ref, wa_ref, wb_ref, bias_ref, o_ref):
    acc = jnp.dot(a_ref[...], wa_ref[...], preferred_element_type=jnp.float32)
    acc = acc + jnp.dot(b_ref[...], wb_ref[...],
                        preferred_element_type=jnp.float32)
    o_ref[...] = (acc + bias_ref[...]).astype(o_ref.dtype)


def run_fc(hf2d, hb2d, w_top, w_bot, bias):
    N, H = hf2d.shape
    O = w_top.shape[-1]
    tn = N if N <= _FC_ROW_BLOCK else _FC_ROW_BLOCK
    # A trailing partial row block (N % tn != 0) is handled by Pallas boundary
    # masking of the output store.
    return pl.pallas_call(
        _fc_kernel,
        out_shape=jax.ShapeDtypeStruct((N, O), jnp.float32),
        grid_spec=pltpu.PrefetchScalarGridSpec(
            num_scalar_prefetch=0,
            grid=(pl.cdiv(N, tn),),
            in_specs=[
                pl.BlockSpec((tn, H), lambda n: (n, 0)),
                pl.BlockSpec((tn, H), lambda n: (n, 0)),
                pl.BlockSpec((H, O), lambda n: (0, 0)),
                pl.BlockSpec((H, O), lambda n: (0, 0)),
                pl.BlockSpec((1, O), lambda n: (0, 0)),
            ],
            out_specs=pl.BlockSpec((tn, O), lambda n: (n, 0)),
        ),
        compiler_params=pltpu.CompilerParams(
            dimension_semantics=("parallel",)),
    )(hf2d, hb2d, w_top, w_bot, bias)


# ----------------------------------------------------------------------------
# Parameter construction (PyTorch-style U(-1/sqrt(H), 1/sqrt(H)); bf16 weights;
# gate columns permuted from PyTorch's [i, f, g, o] to [i, f, o, g]).
# ----------------------------------------------------------------------------
def init_params(key, input_dim, hidden_dim, hidden_layers, output_dim, lane=128):
    H = hidden_dim
    bound = 1.0 / math.sqrt(H)

    def reorder(w):
        # PyTorch packs gates as [i, f, g, o]; the kernel wants [i, f, o, g].
        return jnp.concatenate(
            [w[..., :2 * H], w[..., 3 * H:], w[..., 2 * H:3 * H]], axis=-1)

    layers = []
    for layer in range(hidden_layers):
        d_in = input_dim if layer == 0 else 2 * H
        wih_l, whh_l, b_l = [], [], []
        for _direction in range(2):
            key, k1, k2, k3, k4 = jax.random.split(key, 5)
            w_ih = jax.random.uniform(k1, (4 * H, d_in), jnp.float32, -bound, bound)
            w_hh = jax.random.uniform(k2, (4 * H, H), jnp.float32, -bound, bound)
            b_ih = jax.random.uniform(k3, (4 * H,), jnp.float32, -bound, bound)
            b_hh = jax.random.uniform(k4, (4 * H,), jnp.float32, -bound, bound)
            wih_l.append(reorder(w_ih.T))                 # (d_in, 4H)
            whh_l.append(reorder(w_hh.T))                 # (H, 4H)
            b_l.append(reorder(b_ih + b_hh)[None, :])     # (1, 4H) fused bias
        wih = jnp.stack(wih_l).astype(jnp.bfloat16)       # (2, d_in, 4H)
        lp = {
            "whh": jnp.stack(whh_l).astype(jnp.bfloat16),  # (2, H, 4H)
            "bias": jnp.stack(b_l).astype(jnp.float32),    # (2, 1, 4H)
        }
        if layer == 0:
            lp["wih"] = wih                                # (2, D, 4H)
        else:
            lp["wa"] = wih[:, :H, :]                       # rows acting on h_fwd
            lp["wb"] = wih[:, H:, :]                       # rows acting on h_bwd
        layers.append(lp)

    bound_fc = 1.0 / math.sqrt(2 * H)
    key, k1, k2 = jax.random.split(key, 3)
    fc_w = jax.random.uniform(k1, (output_dim, 2 * H), jnp.float32,
                              -bound_fc, bound_fc)
    fc_b = jax.random.uniform(k2, (output_dim,), jnp.float32, -bound_fc, bound_fc)
    o_pad = ((output_dim + lane - 1) // lane) * lane       # lane-dense fc output
    w_t = jnp.pad(fc_w.T, ((0, 0), (0, o_pad - output_dim)))   # (2H, O_pad)
    b_p = jnp.pad(fc_b, (0, o_pad - output_dim))
    return {
        "layers": layers,
        "fc_w_top": w_t[:H].astype(jnp.bfloat16),          # (H, O_pad)
        "fc_w_bot": w_t[H:].astype(jnp.bfloat16),          # (H, O_pad)
        "fc_b": b_p[None, :].astype(jnp.float32),          # (1, O_pad)
    }


# ----------------------------------------------------------------------------
# Full forward: bidirectional multi-layer LSTM + Linear on every timestep.
# ----------------------------------------------------------------------------
@functools.partial(jax.jit, static_argnames=("output_dim",))
def lstm_classifier_forward(x, params, *, output_dim):
    B, T, D = x.shape
    time_block = T if T <= _MAX_TIME_BLOCK else _MAX_TIME_BLOCK
    t_pad = pl.cdiv(T, time_block) * time_block
    b_pad = ((B + 7) // 8) * 8          # sublane padding: full VPU/MXU occupancy

    xt = jnp.transpose(x, (1, 0, 2)).astype(jnp.bfloat16)      # (T, B, D)
    xt = jnp.pad(xt, ((0, t_pad - T), (0, b_pad - B), (0, 0)))
    x2d = xt.reshape(t_pad * b_pad, D)                         # row = t*B_pad+b

    hf = hb = None
    for li, lp in enumerate(params["layers"]):
        if li == 0:
            hf, hb = run_bilstm_l0(x2d, lp["wih"], lp["whh"], lp["bias"],
                                   batch=b_pad, time_block=time_block,
                                   seq_len=T, t_pad=t_pad)
        else:
            hf, hb = run_bilstm_ln(hf, hb, lp["wa"], lp["wb"], lp["whh"],
                                   lp["bias"], batch=b_pad,
                                   time_block=time_block, seq_len=T,
                                   t_pad=t_pad)
        # (inter-layer dropout = identity at inference)

    y = run_fc(hf, hb, params["fc_w_top"], params["fc_w_bot"], params["fc_b"])
    o_pad = y.shape[-1]
    y = y.reshape(t_pad, b_pad, o_pad)[:T, :B, :output_dim]
    return jnp.transpose(y, (1, 0, 2))                          # (B, T, O)


# ----------------------------------------------------------------------------
# Pure-JAX f32 reference (same bf16-stored weights) for a sanity check.
# ----------------------------------------------------------------------------
def _reference_forward(x, params, output_dim):
    xt = jnp.transpose(x, (1, 0, 2)).astype(jnp.float32)        # (T, B, D)

    def run_dir(inp, wih, whh, b, reverse):
        T_, B_, _ = inp.shape
        H = whh.shape[0]
        h = jnp.zeros((B_, H), jnp.float32)
        c = jnp.zeros((B_, H), jnp.float32)
        out = [None] * T_
        order = range(T_ - 1, -1, -1) if reverse else range(T_)
        for t in order:
            g = inp[t] @ wih + h @ whh + b          # gate order [i, f, o, g]
            i = jax.nn.sigmoid(g[:, :H]); f = jax.nn.sigmoid(g[:, H:2 * H])
            o = jax.nn.sigmoid(g[:, 2 * H:3 * H]); gg = jnp.tanh(g[:, 3 * H:])
            c = f * c + i * gg
            h = o * jnp.tanh(c)
            out[t] = h
        return jnp.stack(out)

    cur = xt
    for li, lp in enumerate(params["layers"]):
        whh = lp["whh"].astype(jnp.float32)
        b = lp["bias"].astype(jnp.float32)
        if li == 0:
            wih = lp["wih"].astype(jnp.float32)
        else:
            wih = jnp.concatenate([lp["wa"], lp["wb"]], axis=1).astype(jnp.float32)
        hf = run_dir(cur, wih[0], whh[0], b[0], reverse=False)
        hb = run_dir(cur, wih[1], whh[1], b[1], reverse=True)
        cur = jnp.concatenate([hf, hb], axis=-1)

    w_top = params["fc_w_top"].astype(jnp.float32)
    w_bot = params["fc_w_bot"].astype(jnp.float32)
    fb = params["fc_b"][0].astype(jnp.float32)
    H = w_top.shape[0]
    y = cur[..., :H] @ w_top + cur[..., H:] @ w_bot + fb
    return jnp.transpose(y[:, :, :output_dim], (1, 0, 2))


if __name__ == "__main__":
    batch, seq = 2, 8
    input_dim, hidden_dim, hidden_layers, output_dim = 16, 32, 2, 4

    key = jax.random.PRNGKey(0)
    key, xk, pk = jax.random.split(key, 3)
    x = jax.random.normal(xk, (batch, seq, input_dim), jnp.float32)
    params = init_params(pk, input_dim, hidden_dim, hidden_layers, output_dim)

    y = lstm_classifier_forward(x, params, output_dim=output_dim)
    jax.block_until_ready(y)
    assert y.shape == (batch, seq, output_dim), y.shape

    y_ref = _reference_forward(x, params, output_dim)
    err = float(jnp.max(jnp.abs(y - y_ref)))
    assert err < 5e-2, f"max abs error vs reference: {err}"
    print("KERNEL_OK")
</pallas_src>

<mosaic_0001>
module attributes {stable_mosaic.version = 11 : i64} {
  func.func @_bilstm_l0_kernel(%arg0: i32, %arg1: memref<64x16xbf16, #tpu.memory_space<vmem>>, %arg2: memref<64x16xbf16, #tpu.memory_space<vmem>>, %arg3: memref<2x16x128xbf16, #tpu.memory_space<vmem>>, %arg4: memref<2x32x128xbf16, #tpu.memory_space<vmem>>, %arg5: memref<2x1x128xf32, #tpu.memory_space<vmem>>, %arg6: memref<64x32xbf16, #tpu.memory_space<vmem>>, %arg7: memref<64x32xbf16, #tpu.memory_space<vmem>>, %arg8: memref<2x8x32xf32, #tpu.memory_space<vmem>>, %arg9: memref<2x8x32xf32, #tpu.memory_space<vmem>>) attributes {dimension_semantics = [#tpu.dimension_semantics<arbitrary>], iteration_bounds = array<i64: 1>, scalar_prefetch = 0 : i64, scratch_operands = 2 : i64, tpu.core_type = #tpu.core_type<tc>, window_params = [{transform_indices = @transform_0, window_bounds = array<i64: 64, 16>}, {transform_indices = @transform_1, window_bounds = array<i64: 64, 16>}, {pipeline_mode = #tpu.pipeline_mode<synchronous>, transform_indices = @transform_2, window_bounds = array<i64: 2, 16, 128>}, {pipeline_mode = #tpu.pipeline_mode<synchronous>, transform_indices = @transform_3, window_bounds = array<i64: 2, 32, 128>}, {pipeline_mode = #tpu.pipeline_mode<synchronous>, transform_indices = @transform_4, window_bounds = array<i64: 2, 1, 128>}, {transform_indices = @transform_5, window_bounds = array<i64: 64, 32>}, {transform_indices = @transform_6, window_bounds = array<i64: 64, 32>}]} {
    %c0 = arith.constant 0 : index
    %c0_0 = arith.constant 0 : index
    %0 = vector.load %arg1[%c0, %c0_0] : memref<64x16xbf16, #tpu.memory_space<vmem>>, vector<64x16xbf16>
    %c0_1 = arith.constant 0 : index
    %c0_2 = arith.constant 0 : index
    %c0_3 = arith.constant 0 : index
    %1 = vector.load %arg3[%c0_1, %c0_2, %c0_3] : memref<2x16x128xbf16, #tpu.memory_space<vmem>>, vector<1x16x128xbf16>
    %2 = vector.shape_cast %1 : vector<1x16x128xbf16> to vector<16x128xbf16>
    %cst = arith.constant dense<0.000000e+00> : vector<64x128xf32>
    %3 = tpu.matmul %0, %2, %cst {dimension_numbers = #tpu.dot_dimension_numbers<[1], [0], [0], [1], [0, 0, 1, 1], [], []>} : vector<64x16xbf16>, vector<16x128xbf16>, vector<64x128xf32> -> vector<64x128xf32>
    %c0_4 = arith.constant 0 : index
    %c0_5 = arith.constant 0 : index
    %c0_6 = arith.constant 0 : index
    %4 = vector.load %arg5[%c0_4, %c0_5, %c0_6] : memref<2x1x128xf32, #tpu.memory_space<vmem>>, vector<1x1x128xf32>
    %5 = vector.shape_cast %4 : vector<1x1x128xf32> to vector<1x128xf32>
    %6 = vector.broadcast %5 : vector<1x128xf32> to vector<64x128xf32>
    %7 = arith.addf %3, %6 : vector<64x128xf32>
    %c0_7 = arith.constant 0 : index
    %c0_8 = arith.constant 0 : index
    %8 = vector.load %arg2[%c0_7, %c0_8] : memref<64x16xbf16, #tpu.memory_space<vmem>>, vector<64x16xbf16>
    %c1 = arith.constant 1 : index
    %c0_9 = arith.constant 0 : index
    %c0_10 = arith.constant 0 : index
    %9 = vector.load %arg3[%c1, %c0_9, %c0_10] : memref<2x16x128xbf16, #tpu.memory_space<vmem>>, vector<1x16x128xbf16>
    %10 = vector.shape_cast %9 : vector<1x16x128xbf16> to vector<16x128xbf16>
    %cst_11 = arith.constant dense<0.000000e+00> : vector<64x128xf32>
    %11 = tpu.matmul %8, %10, %cst_11 {dimension_numbers = #tpu.dot_dimension_numbers<[1], [0], [0], [1], [0, 0, 1, 1], [], []>} : vector<64x16xbf16>, vector<16x128xbf16>, vector<64x128xf32> -> vector<64x128xf32>
    %c1_12 = arith.constant 1 : index
    %c0_13 = arith.constant 0 : index
    %c0_14 = arith.constant 0 : index
    %12 = vector.load %arg5[%c1_12, %c0_13, %c0_14] : memref<2x1x128xf32, #tpu.memory_space<vmem>>, vector<1x1x128xf32>
    %13 = vector.shape_cast %12 : vector<1x1x128xf32> to vector<1x128xf32>
    %14 = vector.broadcast %13 : vector<1x128xf32> to vector<64x128xf32>
    %15 = arith.addf %11, %14 : vector<64x128xf32>
    %c0_i32 = arith.constant 0 : i32
    %16 = arith.cmpi eq, %arg0, %c0_i32 : i32
    %17 = arith.extui %16 : i1 to i32
    %c0_i32_15 = arith.constant 0 : i32
    %18 = arith.cmpi ne, %17, %c0_i32_15 : i32
    scf.if %18 {
      %cst_103 = arith.constant 0.000000e+00 : f32
      %395 = vector.broadcast %cst_103 : f32 to vector<2x8x32xf32>
      %c0_104 = arith.constant 0 : index
      %c0_105 = arith.constant 0 : index
      %c0_106 = arith.constant 0 : index
      %396 = vector.load %arg8[%c0_104, %c0_105, %c0_106] : memref<2x8x32xf32, #tpu.memory_space<vmem>>, vector<2x8x32xf32>
      tpu.vector_store %arg8[%c0_104, %c0_105, %c0_106], %395 {strides = array<i32>} : memref<2x8x32xf32, #tpu.memory_space<vmem>>, vector<2x8x32xf32>,
      %cst_107 = arith.constant 0.000000e+00 : f32
      %397 = vector.broadcast %cst_107 : f32 to vector<2x8x32xf32>
      %c0_108 = arith.constant 0 : index
      %c0_109 = arith.constant 0 : index
      %c0_110 = arith.constant 0 : index
      %398 = vector.load %arg9[%c0_108, %c0_109, %c0_110] : memref<2x8x32xf32, #tpu.memory_space<vmem>>, vector<2x8x32xf32>
      tpu.vector_store %arg9[%c0_108, %c0_109, %c0_110], %397 {strides = array<i32>} : memref<2x8x32xf32, #tpu.memory_space<vmem>>, vector<2x8x32xf32>,
    } else {
    }
    %c0_16 = arith.constant 0 : index
    %c0_17 = arith.constant 0 : index
    %c0_18 = arith.constant 0 : index
    %19 = vector.load %arg4[%c0_16, %c0_17, %c0_18] : memref<2x32x128xbf16, #tpu.memory_space<vmem>>, vector<1x32x128xbf16>
    %20 = vector.shape_cast %19 : vector<1x32x128xbf16> to vector<32x128xbf16>
    %c1_19 = arith.constant 1 : index
    %c0_20 = arith.constant 0 : index
    %c0_21 = arith.constant 0 : index
    %21 = vector.load %arg4[%c1_19, %c0_20, %c0_21] : memref<2x32x128xbf16, #tpu.memory_space<vmem>>, vector<1x32x128xbf16>
    %22 = vector.shape_cast %21 : vector<1x32x128xbf16> to vector<32x128xbf16>
    %c0_22 = arith.constant 0 : index
    %c0_23 = arith.constant 0 : index
    %c0_24 = arith.constant 0 : index
    %23 = vector.load %arg8[%c0_22, %c0_23, %c0_24] : memref<2x8x32xf32, #tpu.memory_space<vmem>>, vector<1x8x32xf32>
    %24 = vector.shape_cast %23 : vector<1x8x32xf32> to vector<8x32xf32>
    %c0_25 = arith.constant 0 : index
    %c0_26 = arith.constant 0 : index
    %c0_27 = arith.constant 0 : index
    %25 = vector.load %arg9[%c0_25, %c0_26, %c0_27] : memref<2x8x32xf32, #tpu.memory_space<vmem>>, vector<1x8x32xf32>
    %26 = vector.shape_cast %25 : vector<1x8x32xf32> to vector<8x32xf32>
    %c1_28 = arith.constant 1 : index
    %c0_29 = arith.constant 0 : index
    %c0_30 = arith.constant 0 : index
    %27 = vector.load %arg8[%c1_28, %c0_29, %c0_30] : memref<2x8x32xf32, #tpu.memory_space<vmem>>, vector<1x8x32xf32>
    %28 = vector.shape_cast %27 : vector<1x8x32xf32> to vector<8x32xf32>
    %c1_31 = arith.constant 1 : index
    %c0_32 = arith.constant 0 : index
    %c0_33 = arith.constant 0 : index
    %29 = vector.load %arg9[%c1_31, %c0_32, %c0_33] : memref<2x8x32xf32, #tpu.memory_space<vmem>>, vector<1x8x32xf32>
    %30 = vector.shape_cast %29 : vector<1x8x32xf32> to vector<8x32xf32>
    %31 = vector.extract_strided_slice %7 {offsets = [0, 0], sizes = [8, 128], strides = [1, 1]} : vector<64x128xf32> to vector<8x128xf32>
    %32 = arith.truncf %24 : vector<8x32xf32> to vector<8x32xbf16>
    %cst_34 = arith.constant dense<0.000000e+00> : vector<8x128xf32>
    %33 = tpu.matmul %32, %20, %cst_34 {dimension_numbers = #tpu.dot_dimension_numbers<[1], [0], [0], [1], [0, 0, 1, 1], [], []>} : vector<8x32xbf16>, vector<32x128xbf16>, vector<8x128xf32> -> vector<8x128xf32>
    %34 = arith.addf %31, %33 : vector<8x128xf32>
    %35 = vector.extract_strided_slice %15 {offsets = [56, 0], sizes = [8, 128], strides = [1, 1]} : vector<64x128xf32> to vector<8x128xf32>
    %36 = arith.truncf %28 : vector<8x32xf32> to vector<8x32xbf16>
    %cst_35 = arith.constant dense<0.000000e+00> : vector<8x128xf32>
    %37 = tpu.matmul %36, %22, %cst_35 {dimension_numbers = #tpu.dot_dimension_numbers<[1], [0], [0], [1], [0, 0, 1, 1], [], []>} : vector<8x32xbf16>, vector<32x128xbf16>, vector<8x128xf32> -> vector<8x128xf32>
    %38 = arith.addf %35, %37 : vector<8x128xf32>
    %39 = vector.extract_strided_slice %34 {offsets = [0, 0], sizes = [8, 96], strides = [1, 1]} : vector<8x128xf32> to vector<8x96xf32>
    %40 = arith.negf %39 : vector<8x96xf32>
    %41 = math.exp %40 : vector<8x96xf32>
    %cst_36 = arith.constant 1.000000e+00 : f32
    %42 = vector.broadcast %cst_36 : f32 to vector<8x96xf32>
    %43 = arith.addf %42, %41 : vector<8x96xf32>
    %44 = arith.divf %42, %43 : vector<8x96xf32>
    %45 = vector.extract_strided_slice %34 {offsets = [0, 96], sizes = [8, 32], strides = [1, 1]} : vector<8x128xf32> to vector<8x32xf32>
    %46 = math.tanh %45 : vector<8x32xf32>
    %47 = vector.extract_strided_slice %44 {offsets = [0, 32], sizes = [8, 32], strides = [1, 1]} : vector<8x96xf32> to vector<8x32xf32>
    %48 = arith.mulf %47, %26 : vector<8x32xf32>
    %49 = vector.extract_strided_slice %44 {offsets = [0, 0], sizes = [8, 32], strides = [1, 1]} : vector<8x96xf32> to vector<8x32xf32>
    %50 = arith.mulf %49, %46 : vector<8x32xf32>
    %51 = arith.addf %48, %50 : vector<8x32xf32>
    %52 = vector.extract_strided_slice %44 {offsets = [0, 64], sizes = [8, 32], strides = [1, 1]} : vector<8x96xf32> to vector<8x32xf32>
    %53 = math.tanh %51 : vector<8x32xf32>
    %54 = arith.mulf %52, %53 : vector<8x32xf32>
    %55 = vector.extract_strided_slice %38 {offsets = [0, 0], sizes = [8, 96], strides = [1, 1]} : vector<8x128xf32> to vector<8x96xf32>
    %56 = arith.negf %55 : vector<8x96xf32>
    %57 = math.exp %56 : vector<8x96xf32>
    %cst_37 = arith.constant 1.000000e+00 : f32
    %58 = vector.broadcast %cst_37 : f32 to vector<8x96xf32>
    %59 = arith.addf %58, %57 : vector<8x96xf32>
    %60 = arith.divf %58, %59 : vector<8x96xf32>
    %61 = vector.extract_strided_slice %38 {offsets = [0, 96], sizes = [8, 32], strides = [1, 1]} : vector<8x128xf32> to vector<8x32xf32>
    %62 = math.tanh %61 : vector<8x32xf32>
    %63 = vector.extract_strided_slice %60 {offsets = [0, 32], sizes = [8, 32], strides = [1, 1]} : vector<8x96xf32> to vector<8x32xf32>
    %64 = arith.mulf %63, %30 : vector<8x32xf32>
    %65 = vector.extract_strided_slice %60 {offsets = [0, 0], sizes = [8, 32], strides = [1, 1]} : vector<8x96xf32> to vector<8x32xf32>
    %66 = arith.mulf %65, %62 : vector<8x32xf32>
    %67 = arith.addf %64, %66 : vector<8x32xf32>
    %68 = vector.extract_strided_slice %60 {offsets = [0, 64], sizes = [8, 32], strides = [1, 1]} : vector<8x96xf32> to vector<8x32xf32>
    %69 = math.tanh %67 : vector<8x32xf32>
    %70 = arith.mulf %68, %69 : vector<8x32xf32>
    %71 = arith.truncf %54 : vector<8x32xf32> to vector<8x32xbf16>
    %c0_38 = arith.constant 0 : index
    %c0_39 = arith.constant 0 : index
    %72 = vector.load %arg6[%c0_38, %c0_39] : memref<64x32xbf16, #tpu.memory_space<vmem>>, vector<8x32xbf16>
    tpu.vector_store %arg6[%c0_38, %c0_39], %71 {strides = array<i32>} : memref<64x32xbf16, #tpu.memory_space<vmem>>, vector<8x32xbf16>,
    %73 = arith.truncf %70 : vector<8x32xf32> to vector<8x32xbf16>
    %c56 = arith.constant 56 : index
    %c0_40 = arith.constant 0 : index
    %74 = vector.load %arg7[%c56, %c0_40] : memref<64x32xbf16, #tpu.memory_space<vmem>>, vector<8x32xbf16>
    tpu.vector_store %arg7[%c56, %c0_40], %73 {strides = array<i32>} : memref<64x32xbf16, #tpu.memory_space<vmem>>, vector<8x32xbf16>,
    %75 = vector.extract_strided_slice %7 {offsets = [8, 0], sizes = [8, 128], strides = [1, 1]} : vector<64x128xf32> to vector<8x128xf32>
    %76 = arith.truncf %54 : vector<8x32xf32> to vector<8x32xbf16>
    %cst_41 = arith.constant dense<0.000000e+00> : vector<8x128xf32>
    %77 = tpu.matmul %76, %20, %cst_41 {dimension_numbers = #tpu.dot_dimension_numbers<[1], [0], [0], [1], [0, 0, 1, 1], [], []>} : vector<8x32xbf16>, vector<32x128xbf16>, vector<8x128xf32> -> vector<8x128xf32>
    %78 = arith.addf %75, %77 : vector<8x128xf32>
    %79 = vector.extract_strided_slice %15 {offsets = [48, 0], sizes = [8, 128], strides = [1, 1]} : vector<64x128xf32> to vector<8x128xf32>
    %80 = arith.truncf %70 : vector<8x32xf32> to vector<8x32xbf16>
    %cst_42 = arith.constant dense<0.000000e+00> : vector<8x128xf32>
    %81 = tpu.matmul %80, %22, %cst_42 {dimension_numbers = #tpu.dot_dimension_numbers<[1], [0], [0], [1], [0, 0, 1, 1], [], []>} : vector<8x32xbf16>, vector<32x128xbf16>, vector<8x128xf32> -> vector<8x128xf32>
    %82 = arith.addf %79, %81 : vector<8x128xf32>
    %83 = vector.extract_strided_slice %78 {offsets = [0, 0], sizes = [8, 96], strides = [1, 1]} : vector<8x128xf32> to vector<8x96xf32>
    %84 = arith.negf %83 : vector<8x96xf32>
    %85 = math.exp %84 : vector<8x96xf32>
    %cst_43 = arith.constant 1.000000e+00 : f32
    %86 = vector.broadcast %cst_43 : f32 to vector<8x96xf32>
    %87 = arith.addf %86, %85 : vector<8x96xf32>
    %88 = arith.divf %86, %87 : vector<8x96xf32>
    %89 = vector.extract_strided_slice %78 {offsets = [0, 96], sizes = [8, 32], strides = [1, 1]} : vector<8x128xf32> to vector<8x32xf32>
    %90 = math.tanh %89 : vector<8x32xf32>
    %91 = vector.extract_strided_slice %88 {offsets = [0, 32], sizes = [8, 32], strides = [1, 1]} : vector<8x96xf32> to vector<8x32xf32>
    %92 = arith.mulf %91, %51 : vector<8x32xf32>
    %93 = vector.extract_strided_slice %88 {offsets = [0, 0], sizes = [8, 32], strides = [1, 1]} : vector<8x96xf32> to vector<8x32xf32>
    %94 = arith.mulf %93, %90 : vector<8x32xf32>
    %95 = arith.addf %92, %94 : vector<8x32xf32>
    %96 = vector.extract_strided_slice %88 {offsets = [0, 64], sizes = [8, 32], strides = [1, 1]} : vector<8x96xf32> to vector<8x32xf32>
    %97 = math.tanh %95 : vector<8x32xf32>
    %98 = arith.mulf %96, %97 : vector<8x32xf32>
    %99 = vector.extract_strided_slice %82 {offsets = [0, 0], sizes = [8, 96], strides = [1, 1]} : vector<8x128xf32> to vector<8x96xf32>
    %100 = arith.negf %99 : vector<8x96xf32>
    %101 = math.exp %100 : vector<8x96xf32>
    %cst_44 = arith.constant 1.000000e+00 : f32
    %102 = vector.broadcast %cst_44 : f32 to vector<8x96xf32>
    %103 = arith.addf %102, %101 : vector<8x96xf32>
    %104 = arith.divf %102, %103 : vector<8x96xf32>
    %105 = vector.extract_strided_slice %82 {offsets = [0, 96], sizes = [8, 32], strides = [1, 1]} : vector<8x128xf32> to vector<8x32xf32>
    %106 = math.tanh %105 : vector<8x32xf32>
    %107 = vector.extract_strided_slice %104 {offsets = [0, 32], sizes = [8, 32], strides = [1, 1]} : vector<8x96xf32> to vector<8x32xf32>
    %108 = arith.mulf %107, %67 : vector<8x32xf32>
    %109 = vector.extract_strided_slice %104 {offsets = [0, 0], sizes = [8, 32], strides = [1, 1]} : vector<8x96xf32> to vector<8x32xf32>
    %110 = arith.mulf %109, %106 : vector<8x32xf32>
    %111 = arith.addf %108, %110 : vector<8x32xf32>
    %112 = vector.extract_strided_slice %104 {offsets = [0, 64], sizes = [8, 32], strides = [1, 1]} : vector<8x96xf32> to vector<8x32xf32>
    %113 = math.tanh %111 : vector<8x32xf32>
    %114 = arith.mulf %112, %113 : vector<8x32xf32>
    %115 = arith.truncf %98 : vector<8x32xf32> to vector<8x32xbf16>
    %c8 = arith.constant 8 : index
    %c0_45 = arith.constant 0 : index
    %116 = vector.load %arg6[%c8, %c0_45] : memref<64x32xbf16, #tpu.memory_space<vmem>>, vector<8x32xbf16>
    tpu.vector_store %arg6[%c8, %c0_45], %115 {strides = array<i32>} : memref<64x32xbf16, #tpu.memory_space<vmem>>, vector<8x32xbf16>,
    %117 = arith.truncf %114 : vector<8x32xf32> to vector<8x32xbf16>
    %c48 = arith.constant 48 : index
    %c0_46 = arith.constant 0 : index
    %118 = vector.load %arg7[%c48, %c0_46] : memref<64x32xbf16, #tpu.memory_space<vmem>>, vector<8x32xbf16>
    tpu.vector_store %arg7[%c48, %c0_46], %117 {strides = array<i32>} : memref<64x32xbf16, #tpu.memory_space<vmem>>, vector<8x32xbf16>,
    %119 = vector.extract_strided_slice %7 {offsets = [16, 0], sizes = [8, 128], strides = [1, 1]} : vector<64x128xf32> to vector<8x128xf32>
    %120 = arith.truncf %98 : vector<8x32xf32> to vector<8x32xbf16>
    %cst_47 = arith.constant dense<0.000000e+00> : vector<8x128xf32>
    %121 = tpu.matmul %120, %20, %cst_47 {dimension_numbers = #tpu.dot_dimension_numbers<[1], [0], [0], [1], [0, 0, 1, 1], [], []>} : vector<8x32xbf16>, vector<32x128xbf16>, vector<8x128xf32> -> vector<8x128xf32>
    %122 = arith.addf %119, %121 : vector<8x128xf32>
    %123 = vector.extract_strided_slice %15 {offsets = [40, 0], sizes = [8, 128], strides = [1, 1]} : vector<64x128xf32> to vector<8x128xf32>
    %124 = arith.truncf %114 : vector<8x32xf32> to vector<8x32xbf16>
    %cst_48 = arith.constant dense<0.000000e+00> : vector<8x128xf32>
    %125 = tpu.matmul %124, %22, %cst_48 {dimension_numbers = #tpu.dot_dimension_numbers<[1], [0], [0], [1], [0, 0, 1, 1], [], []>} : vector<8x32xbf16>, vector<32x128xbf16>, vector<8x128xf32> -> vector<8x128xf32>
    %126 = arith.addf %123, %125 : vector<8x128xf32>
    %127 = vector.extract_strided_slice %122 {offsets = [0, 0], sizes = [8, 96], strides = [1, 1]} : vector<8x128xf32> to vector<8x96xf32>
    %128 = arith.negf %127 : vector<8x96xf32>
    %129 = math.exp %128 : vector<8x96xf32>
    %cst_49 = arith.constant 1.000000e+00 : f32
    %130 = vector.broadcast %cst_49 : f32 to vector<8x96xf32>
    %131 = arith.addf %130, %129 : vector<8x96xf32>
    %132 = arith.divf %130, %131 : vector<8x96xf32>
    %133 = vector.extract_strided_slice %122 {offsets = [0, 96], sizes = [8, 32], strides = [1, 1]} : vector<8x128xf32> to vector<8x32xf32>
    %134 = math.tanh %133 : vector<8x32xf32>
    %135 = vector.extract_strided_slice %132 {offsets = [0, 32], sizes = [8, 32], strides = [1, 1]} : vector<8x96xf32> to vector<8x32xf32>
    %136 = arith.mulf %135, %95 : vector<8x32xf32>
    %137 = vector.extract_strided_slice %132 {offsets = [0, 0], sizes = [8, 32], strides = [1, 1]} : vector<8x96xf32> to vector<8x32xf32>
    %138 = arith.mulf %137, %134 : vector<8x32xf32>
    %139 = arith.addf %136, %138 : vector<8x32xf32>
    %140 = vector.extract_strided_slice %132 {offsets = [0, 64], sizes = [8, 32], strides = [1, 1]} : vector<8x96xf32> to vector<8x32xf32>
    %141 = math.tanh %139 : vector<8x32xf32>
    %142 = arith.mulf %140, %141 : vector<8x32xf32>
    %143 = vector.extract_strided_slice %126 {offsets = [0, 0], sizes = [8, 96], strides = [1, 1]} : vector<8x128xf32> to vector<8x96xf32>
    %144 = arith.negf %143 : vector<8x96xf32>
    %145 = math.exp %144 : vector<8x96xf32>
    %cst_50 = arith.constant 1.000000e+00 : f32
    %146 = vector.broadcast %cst_50 : f32 to vector<8x96xf32>
    %147 = arith.addf %146, %145 : vector<8x96xf32>
    %148 = arith.divf %146, %147 : vector<8x96xf32>
    %149 = vector.extract_strided_slice %126 {offsets = [0, 96], sizes = [8, 32], strides = [1, 1]} : vector<8x128xf32> to vector<8x32xf32>
    %150 = math.tanh %149 : vector<8x32xf32>
    %151 = vector.extract_strided_slice %148 {offsets = [0, 32], sizes = [8, 32], strides = [1, 1]} : vector<8x96xf32> to vector<8x32xf32>
    %152 = arith.mulf %151, %111 : vector<8x32xf32>
    %153 = vector.extract_strided_slice %148 {offsets = [0, 0], sizes = [8, 32], strides = [1, 1]} : vector<8x96xf32> to vector<8x32xf32>
    %154 = arith.mulf %153, %150 : vector<8x32xf32>
    %155 = arith.addf %152, %154 : vector<8x32xf32>
    %156 = vector.extract_strided_slice %148 {offsets = [0, 64], sizes = [8, 32], strides = [1, 1]} : vector<8x96xf32> to vector<8x32xf32>
    %157 = math.tanh %155 : vector<8x32xf32>
    %158 = arith.mulf %156, %157 : vector<8x32xf32>
    %159 = arith.truncf %142 : vector<8x32xf32> to vector<8x32xbf16>
    %c16 = arith.constant 16 : index
    %c0_51 = arith.constant 0 : index
    %160 = vector.load %arg6[%c16, %c0_51] : memref<64x32xbf16, #tpu.memory_space<vmem>>, vector<8x32xbf16>
    tpu.vector_store %arg6[%c16, %c0_51], %159 {strides = array<i32>} : memref<64x32xbf16, #tpu.memory_space<vmem>>, vector<8x32xbf16>,
    %161 = arith.truncf %158 : vector<8x32xf32> to vector<8x32xbf16>
    %c40 = arith.constant 40 : index
    %c0_52 = arith.constant 0 : index
    %162 = vector.load %arg7[%c40, %c0_52] : memref<64x32xbf16, #tpu.memory_space<vmem>>, vector<8x32xbf16>
    tpu.vector_store %arg7[%c40, %c0_52], %161 {strides = array<i32>} : memref<64x32xbf16, #tpu.memory_space<vmem>>, vector<8x32xbf16>,
    %163 = vector.extract_strided_slice %7 {offsets = [24, 0], sizes = [8, 128], strides = [1, 1]} : vector<64x128xf32> to vector<8x128xf32>
    %164 = arith.truncf %142 : vector<8x32xf32> to vector<8x32xbf16>
    %cst_53 = arith.constant dense<0.000000e+00> : vector<8x128xf32>
    %165 = tpu.matmul %164, %20, %cst_53 {dimension_numbers = #tpu.dot_dimension_numbers<[1], [0], [0], [1], [0, 0, 1, 1], [], []>} : vector<8x32xbf16>, vector<32x128xbf16>, vector<8x128xf32> -> vector<8x128xf32>
    %166 = arith.addf %163, %165 : vector<8x128xf32>
    %167 = vector.extract_strided_slice %15 {offsets = [32, 0], sizes = [8, 128], strides = [1, 1]} : vector<64x128xf32> to vector<8x128xf32>
    %168 = arith.truncf %158 : vector<8x32xf32> to vector<8x32xbf16>
    %cst_54 = arith.constant dense<0.000000e+00> : vector<8x128xf32>
    %169 = tpu.matmul %168, %22, %cst_54 {dimension_numbers = #tpu.dot_dimension_numbers<[1], [0], [0], [1], [0, 0, 1, 1], [], []>} : vector<8x32xbf16>, vector<32x128xbf16>, vector<8x128xf32> -> vector<8x128xf32>
    %170 = arith.addf %167, %169 : vector<8x128xf32>
    %171 = vector.extract_strided_slice %166 {offsets = [0, 0], sizes = [8, 96], strides = [1, 1]} : vector<8x128xf32> to vector<8x96xf32>
    %172 = arith.negf %171 : vector<8x96xf32>
    %173 = math.exp %172 : vector<8x96xf32>
    %cst_55 = arith.constant 1.000000e+00 : f32
    %174 = vector.broadcast %cst_55 : f32 to vector<8x96xf32>
    %175 = arith.addf %174, %173 : vector<8x96xf32>
    %176 = arith.divf %174, %175 : vector<8x96xf32>
    %177 = vector.extract_strided_slice %166 {offsets = [0, 96], sizes = [8, 32], strides = [1, 1]} : vector<8x128xf32> to vector<8x32xf32>
    %178 = math.tanh %177 : vector<8x32xf32>
    %179 = vector.extract_strided_slice %176 {offsets = [0, 32], sizes = [8, 32], strides = [1, 1]} : vector<8x96xf32> to vector<8x32xf32>
    %180 = arith.mulf %179, %139 : vector<8x32xf32>
    %181 = vector.extract_strided_slice %176 {offsets = [0, 0], sizes = [8, 32], strides = [1, 1]} : vector<8x96xf32> to vector<8x32xf32>
    %182 = arith.mulf %181, %178 : vector<8x32xf32>
    %183 = arith.addf %180, %182 : vector<8x32xf32>
    %184 = vector.extract_strided_slice %176 {offsets = [0, 64], sizes = [8, 32], strides = [1, 1]} : vector<8x96xf32> to vector<8x32xf32>
    %185 = math.tanh %183 : vector<8x32xf32>
    %186 = arith.mulf %184, %185 : vector<8x32xf32>
    %187 = vector.extract_strided_slice %170 {offsets = [0, 0], sizes = [8, 96], strides = [1, 1]} : vector<8x128xf32> to vector<8x96xf32>
    %188 = arith.negf %187 : vector<8x96xf32>
    %189 = math.exp %188 : vector<8x96xf32>
    %cst_56 = arith.constant 1.000000e+00 : f32
    %190 = vector.broadcast %cst_56 : f32 to vector<8x96xf32>
    %191 = arith.addf %190, %189 : vector<8x96xf32>
    %192 = arith.divf %190, %191 : vector<8x96xf32>
    %193 = vector.extract_strided_slice %170 {offsets = [0, 96], sizes = [8, 32], strides = [1, 1]} : vector<8x128xf32> to vector<8x32xf32>
    %194 = math.tanh %193 : vector<8x32xf32>
    %195 = vector.extract_strided_slice %192 {offsets = [0, 32], sizes = [8, 32], strides = [1, 1]} : vector<8x96xf32> to vector<8x32xf32>
    %196 = arith.mulf %195, %155 : vector<8x32xf32>
    %197 = vector.extract_strided_slice %192 {offsets = [0, 0], sizes = [8, 32], strides = [1, 1]} : vector<8x96xf32> to vector<8x32xf32>
    %198 = arith.mulf %197, %194 : vector<8x32xf32>
    %199 = arith.addf %196, %198 : vector<8x32xf32>
    %200 = vector.extract_strided_slice %192 {offsets = [0, 64], sizes = [8, 32], strides = [1, 1]} : vector<8x96xf32> to vector<8x32xf32>
    %201 = math.tanh %199 : vector<8x32xf32>
    %202 = arith.mulf %200, %201 : vector<8x32xf32>
    %203 = arith.truncf %186 : vector<8x32xf32> to vector<8x32xbf16>
    %c24 = arith.constant 24 : index
    %c0_57 = arith.constant 0 : index
    %204 = vector.load %arg6[%c24, %c0_57] : memref<64x32xbf16, #tpu.memory_space<vmem>>, vector<8x32xbf16>
    tpu.vector_store %arg6[%c24, %c0_57], %203 {strides = array<i32>} : memref<64x32xbf16, #tpu.memory_space<vmem>>, vector<8x32xbf16>,
    %205 = arith.truncf %202 : vector<8x32xf32> to vector<8x32xbf16>
    %c32 = arith.constant 32 : index
    %c0_58 = arith.constant 0 : index
    %206 = vector.load %arg7[%c32, %c0_58] : memref<64x32xbf16, #tpu.memory_space<vmem>>, vector<8x32xbf16>
    tpu.vector_store %arg7[%c32, %c0_58], %205 {strides = array<i32>} : memref<64x32xbf16, #tpu.memory_space<vmem>>, vector<8x32xbf16>,
    %207 = vector.extract_strided_slice %7 {offsets = [32, 0], sizes = [8, 128], strides = [1, 1]} : vector<64x128xf32> to vector<8x128xf32>
    %208 = arith.truncf %186 : vector<8x32xf32> to vector<8x32xbf16>
    %cst_59 = arith.constant dense<0.000000e+00> : vector<8x128xf32>
    %209 = tpu.matmul %208, %20, %cst_59 {dimension_numbers = #tpu.dot_dimension_numbers<[1], [0], [0], [1], [0, 0, 1, 1], [], []>} : vector<8x32xbf16>, vector<32x128xbf16>, vector<8x128xf32> -> vector<8x128xf32>
    %210 = arith.addf %207, %209 : vector<8x128xf32>
    %211 = vector.extract_strided_slice %15 {offsets = [24, 0], sizes = [8, 128], strides = [1, 1]} : vector<64x128xf32> to vector<8x128xf32>
    %212 = arith.truncf %202 : vector<8x32xf32> to vector<8x32xbf16>
    %cst_60 = arith.constant dense<0.000000e+00> : vector<8x128xf32>
    %213 = tpu.matmul %212, %22, %cst_60 {dimension_numbers = #tpu.dot_dimension_numbers<[1], [0], [0], [1], [0, 0, 1, 1], [], []>} : vector<8x32xbf16>, vector<32x128xbf16>, vector<8x128xf32> -> vector<8x128xf32>
    %214 = arith.addf %211, %213 : vector<8x128xf32>
    %215 = vector.extract_strided_slice %210 {offsets = [0, 0], sizes = [8, 96], strides = [1, 1]} : vector<8x128xf32> to vector<8x96xf32>
    %216 = arith.negf %215 : vector<8x96xf32>
    %217 = math.exp %216 : vector<8x96xf32>
    %cst_61 = arith.constant 1.000000e+00 : f32
    %218 = vector.broadcast %cst_61 : f32 to vector<8x96xf32>
    %219 = arith.addf %218, %217 : vector<8x96xf32>
    %220 = arith.divf %218, %219 : vector<8x96xf32>
    %221 = vector.extract_strided_slice %210 {offsets = [0, 96], sizes = [8, 32], strides = [1, 1]} : vector<8x128xf32> to vector<8x32xf32>
    %222 = math.tanh %221 : vector<8x32xf32>
    %223 = vector.extract_strided_slice %220 {offsets = [0, 32], sizes = [8, 32], strides = [1, 1]} : vector<8x96xf32> to vector<8x32xf32>
    %224 = arith.mulf %223, %183 : vector<8x32xf32>
    %225 = vector.extract_strided_slice %220 {offsets = [0, 0], sizes = [8, 32], strides = [1, 1]} : vector<8x96xf32> to vector<8x32xf32>
    %226 = arith.mulf %225, %222 : vector<8x32xf32>
    %227 = arith.addf %224, %226 : vector<8x32xf32>
    %228 = vector.extract_strided_slice %220 {offsets = [0, 64], sizes = [8, 32], strides = [1, 1]} : vector<8x96xf32> to vector<8x32xf32>
    %229 = math.tanh %227 : vector<8x32xf32>
    %230 = arith.mulf %228, %229 : vector<8x32xf32>
    %231 = vector.extract_strided_slice %214 {offsets = [0, 0], sizes = [8, 96], strides = [1, 1]} : vector<8x128xf32> to vector<8x96xf32>
    %232 = arith.negf %231 : vector<8x96xf32>
    %233 = math.exp %232 : vector<8x96xf32>
    %cst_62 = arith.constant 1.000000e+00 : f32
    %234 = vector.broadcast %cst_62 : f32 to vector<8x96xf32>
    %235 = arith.addf %234, %233 : vector<8x96xf32>
    %236 = arith.divf %234, %235 : vector<8x96xf32>
    %237 = vector.extract_strided_slice %214 {offsets = [0, 96], sizes = [8, 32], strides = [1, 1]} : vector<8x128xf32> to vector<8x32xf32>
    %238 = math.tanh %237 : vector<8x32xf32>
    %239 = vector.extract_strided_slice %236 {offsets = [0, 32], sizes = [8, 32], strides = [1, 1]} : vector<8x96xf32> to vector<8x32xf32>
    %240 = arith.mulf %239, %199 : vector<8x32xf32>
    %241 = vector.extract_strided_slice %236 {offsets = [0, 0], sizes = [8, 32], strides = [1, 1]} : vector<8x96xf32> to vector<8x32xf32>
    %242 = arith.mulf %241, %238 : vector<8x32xf32>
    %243 = arith.addf %240, %242 : vector<8x32xf32>
    %244 = vector.extract_strided_slice %236 {offsets = [0, 64], sizes = [8, 32], strides = [1, 1]} : vector<8x96xf32> to vector<8x32xf32>
    %245 = math.tanh %243 : vector<8x32xf32>
    %246 = arith.mulf %244, %245 : vector<8x32xf32>
    %247 = arith.truncf %230 : vector<8x32xf32> to vector<8x32xbf16>
    %c32_63 = arith.constant 32 : index
    %c0_64 = arith.constant 0 : index
    %248 = vector.load %arg6[%c32_63, %c0_64] : memref<64x32xbf16, #tpu.memory_space<vmem>>, vector<8x32xbf16>
    tpu.vector_store %arg6[%c32_63, %c0_64], %247 {strides = array<i32>} : memref<64x32xbf16, #tpu.memory_space<vmem>>, vector<8x32xbf16>,
    %249 = arith.truncf %246 : vector<8x32xf32> to vector<8x32xbf16>
    %c24_65 = arith.constant 24 : index
    %c0_66 = arith.constant 0 : index
    %250 = vector.load %arg7[%c24_65, %c0_66] : memref<64x32xbf16, #tpu.memory_space<vmem>>, vector<8x32xbf16>
    tpu.vector_store %arg7[%c24_65, %c0_66], %249 {strides = array<i32>} : memref<64x32xbf16, #tpu.memory_space<vmem>>, vector<8x32xbf16>,
    %251 = vector.extract_strided_slice %7 {offsets = [40, 0], sizes = [8, 128], strides = [1, 1]} : vector<64x128xf32> to vector<8x128xf32>
    %252 = arith.truncf %230 : vector<8x32xf32> to vector<8x32xbf16>
    %cst_67 = arith.constant dense<0.000000e+00> : vector<8x128xf32>
    %253 = tpu.matmul %252, %20, %cst_67 {dimension_numbers = #tpu.dot_dimension_numbers<[1], [0], [0], [1], [0, 0, 1, 1], [], []>} : vector<8x32xbf16>, vector<32x128xbf16>, vector<8x128xf32> -> vector<8x128xf32>
    %254 = arith.addf %251, %253 : vector<8x128xf32>
    %255 = vector.extract_strided_slice %15 {offsets = [16, 0], sizes = [8, 128], strides = [1, 1]} : vector<64x128xf32> to vector<8x128xf32>
    %256 = arith.truncf %246 : vector<8x32xf32> to vector<8x32xbf16>
    %cst_68 = arith.constant dense<0.000000e+00> : vector<8x128xf32>
    %257 = tpu.matmul %256, %22, %cst_68 {dimension_numbers = #tpu.dot_dimension_numbers<[1], [0], [0], [1], [0, 0, 1, 1], [], []>} : vector<8x32xbf16>, vector<32x128xbf16>, vector<8x128xf32> -> vector<8x128xf32>
    %258 = arith.addf %255, %257 : vector<8x128xf32>
    %259 = vector.extract_strided_slice %254 {offsets = [0, 0], sizes = [8, 96], strides = [1, 1]} : vector<8x128xf32> to vector<8x96xf32>
    %260 = arith.negf %259 : vector<8x96xf32>
    %261 = math.exp %260 : vector<8x96xf32>
    %cst_69 = arith.constant 1.000000e+00 : f32
    %262 = vector.broadcast %cst_69 : f32 to vector<8x96xf32>
    %263 = arith.addf %262, %261 : vector<8x96xf32>
    %264 = arith.divf %262, %263 : vector<8x96xf32>
    %265 = vector.extract_strided_slice %254 {offsets = [0, 96], sizes = [8, 32], strides = [1, 1]} : vector<8x128xf32> to vector<8x32xf32>
    %266 = math.tanh %265 : vector<8x32xf32>
    %267 = vector.extract_strided_slice %264 {offsets = [0, 32], sizes = [8, 32], strides = [1, 1]} : vector<8x96xf32> to vector<8x32xf32>
    %268 = arith.mulf %267, %227 : vector<8x32xf32>
    %269 = vector.extract_strided_slice %264 {offsets = [0, 0], sizes = [8, 32], strides = [1, 1]} : vector<8x96xf32> to vector<8x32xf32>
    %270 = arith.mulf %269, %266 : vector<8x32xf32>
    %271 = arith.addf %268, %270 : vector<8x32xf32>
    %272 = vector.extract_strided_slice %264 {offsets = [0, 64], sizes = [8, 32], strides = [1, 1]} : vector<8x96xf32> to vector<8x32xf32>
    %273 = math.tanh %271 : vector<8x32xf32>
    %274 = arith.mulf %272, %273 : vector<8x32xf32>
    %275 = vector.extract_strided_slice %258 {offsets = [0, 0], sizes = [8, 96], strides = [1, 1]} : vector<8x128xf32> to vector<8x96xf32>
    %276 = arith.negf %275 : vector<8x96xf32>
    %277 = math.exp %276 : vector<8x96xf32>
    %cst_70 = arith.constant 1.000000e+00 : f32
    %278 = vector.broadcast %cst_70 : f32 to vector<8x96xf32>
    %279 = arith.addf %278, %277 : vector<8x96xf32>
    %280 = arith.divf %278, %279 : vector<8x96xf32>
    %281 = vector.extract_strided_slice %258 {offsets = [0, 96], sizes = [8, 32], strides = [1, 1]} : vector<8x128xf32> to vector<8x32xf32>
    %282 = math.tanh %281 : vector<8x32xf32>
    %283 = vector.extract_strided_slice %280 {offsets = [0, 32], sizes = [8, 32], strides = [1, 1]} : vector<8x96xf32> to vector<8x32xf32>
    %284 = arith.mulf %283, %243 : vector<8x32xf32>
    %285 = vector.extract_strided_slice %280 {offsets = [0, 0], sizes = [8, 32], strides = [1, 1]} : vector<8x96xf32> to vector<8x32xf32>
    %286 = arith.mulf %285, %282 : vector<8x32xf32>
    %287 = arith.addf %284, %286 : vector<8x32xf32>
    %288 = vector.extract_strided_slice %280 {offsets = [0, 64], sizes = [8, 32], strides = [1, 1]} : vector<8x96xf32> to vector<8x32xf32>
    %289 = math.tanh %287 : vector<8x32xf32>
    %290 = arith.mulf %288, %289 : vector<8x32xf32>
    %291 = arith.truncf %274 : vector<8x32xf32> to vector<8x32xbf16>
    %c40_71 = arith.constant 40 : index
    %c0_72 = arith.constant 0 : index
    %292 = vector.load %arg6[%c40_71, %c0_72] : memref<64x32xbf16, #tpu.memory_space<vmem>>, vector<8x32xbf16>
    tpu.vector_store %arg6[%c40_71, %c0_72], %291 {strides = array<i32>} : memref<64x32xbf16, #tpu.memory_space<vmem>>, vector<8x32xbf16>,
    %293 = arith.truncf %290 : vector<8x32xf32> to vector<8x32xbf16>
    %c16_73 = arith.constant 16 : index
    %c0_74 = arith.constant 0 : index
    %294 = vector.load %arg7[%c16_73, %c0_74] : memref<64x32xbf16, #tpu.memory_space<vmem>>, vector<8x32xbf16>
    tpu.vector_store %arg7[%c16_73, %c0_74], %293 {strides = array<i32>} : memref<64x32xbf16, #tpu.memory_space<vmem>>, vector<8x32xbf16>,
    %295 = vector.extract_strided_slice %7 {offsets = [48, 0], sizes = [8, 128], strides = [1, 1]} : vector<64x128xf32> to vector<8x128xf32>
    %296 = arith.truncf %274 : vector<8x32xf32> to vector<8x32xbf16>
    %cst_75 = arith.constant dense<0.000000e+00> : vector<8x128xf32>
    %297 = tpu.matmul %296, %20, %cst_75 {dimension_numbers = #tpu.dot_dimension_numbers<[1], [0], [0], [1], [0, 0, 1, 1], [], []>} : vector<8x32xbf16>, vector<32x128xbf16>, vector<8x128xf32> -> vector<8x128xf32>
    %298 = arith.addf %295, %297 : vector<8x128xf32>
    %299 = vector.extract_strided_slice %15 {offsets = [8, 0], sizes = [8, 128], strides = [1, 1]} : vector<64x128xf32> to vector<8x128xf32>
    %300 = arith.truncf %290 : vector<8x32xf32> to vector<8x32xbf16>
    %cst_76 = arith.constant dense<0.000000e+00> : vector<8x128xf32>
    %301 = tpu.matmul %300, %22, %cst_76 {dimension_numbers = #tpu.dot_dimension_numbers<[1], [0], [0], [1], [0, 0, 1, 1], [], []>} : vector<8x32xbf16>, vector<32x128xbf16>, vector<8x128xf32> -> vector<8x128xf32>
    %302 = arith.addf %299, %301 : vector<8x128xf32>
    %303 = vector.extract_strided_slice %298 {offsets = [0, 0], sizes = [8, 96], strides = [1, 1]} : vector<8x128xf32> to vector<8x96xf32>
    %304 = arith.negf %303 : vector<8x96xf32>
    %305 = math.exp %304 : vector<8x96xf32>
    %cst_77 = arith.constant 1.000000e+00 : f32
    %306 = vector.broadcast %cst_77 : f32 to vector<8x96xf32>
    %307 = arith.addf %306, %305 : vector<8x96xf32>
    %308 = arith.divf %306, %307 : vector<8x96xf32>
    %309 = vector.extract_strided_slice %298 {offsets = [0, 96], sizes = [8, 32], strides = [1, 1]} : vector<8x128xf32> to vector<8x32xf32>
    %310 = math.tanh %309 : vector<8x32xf32>
    %311 = vector.extract_strided_slice %308 {offsets = [0, 32], sizes = [8, 32], strides = [1, 1]} : vector<8x96xf32> to vector<8x32xf32>
    %312 = arith.mulf %311, %271 : vector<8x32xf32>
    %313 = vector.extract_strided_slice %308 {offsets = [0, 0], sizes = [8, 32], strides = [1, 1]} : vector<8x96xf32> to vector<8x32xf32>
    %314 = arith.mulf %313, %310 : vector<8x32xf32>
    %315 = arith.addf %312, %314 : vector<8x32xf32>
    %316 = vector.extract_strided_slice %308 {offsets = [0, 64], sizes = [8, 32], strides = [1, 1]} : vector<8x96xf32> to vector<8x32xf32>
    %317 = math.tanh %315 : vector<8x32xf32>
    %318 = arith.mulf %316, %317 : vector<8x32xf32>
    %319 = vector.extract_strided_slice %302 {offsets = [0, 0], sizes = [8, 96], strides = [1, 1]} : vector<8x128xf32> to vector<8x96xf32>
    %320 = arith.negf %319 : vector<8x96xf32>
    %321 = math.exp %320 : vector<8x96xf32>
    %cst_78 = arith.constant 1.000000e+00 : f32
    %322 = vector.broadcast %cst_78 : f32 to vector<8x96xf32>
    %323 = arith.addf %322, %321 : vector<8x96xf32>
    %324 = arith.divf %322, %323 : vector<8x96xf32>
    %325 = vector.extract_strided_slice %302 {offsets = [0, 96], sizes = [8, 32], strides = [1, 1]} : vector<8x128xf32> to vector<8x32xf32>
    %326 = math.tanh %325 : vector<8x32xf32>
    %327 = vector.extract_strided_slice %324 {offsets = [0, 32], sizes = [8, 32], strides = [1, 1]} : vector<8x96xf32> to vector<8x32xf32>
    %328 = arith.mulf %327, %287 : vector<8x32xf32>
    %329 = vector.extract_strided_slice %324 {offsets = [0, 0], sizes = [8, 32], strides = [1, 1]} : vector<8x96xf32> to vector<8x32xf32>
    %330 = arith.mulf %329, %326 : vector<8x32xf32>
    %331 = arith.addf %328, %330 : vector<8x32xf32>
    %332 = vector.extract_strided_slice %324 {offsets = [0, 64], sizes = [8, 32], strides = [1, 1]} : vector<8x96xf32> to vector<8x32xf32>
    %333 = math.tanh %331 : vector<8x32xf32>
    %334 = arith.mulf %332, %333 : vector<8x32xf32>
    %335 = arith.truncf %318 : vector<8x32xf32> to vector<8x32xbf16>
    %c48_79 = arith.constant 48 : index
    %c0_80 = arith.constant 0 : index
    %336 = vector.load %arg6[%c48_79, %c0_80] : memref<64x32xbf16, #tpu.memory_space<vmem>>, vector<8x32xbf16>
    tpu.vector_store %arg6[%c48_79, %c0_80], %335 {strides = array<i32>} : memref<64x32xbf16, #tpu.memory_space<vmem>>, vector<8x32xbf16>,
    %337 = arith.truncf %334 : vector<8x32xf32> to vector<8x32xbf16>
    %c8_81 = arith.constant 8 : index
    %c0_82 = arith.constant 0 : index
    %338 = vector.load %arg7[%c8_81, %c0_82] : memref<64x32xbf16, #tpu.memory_space<vmem>>, vector<8x32xbf16>
    tpu.vector_store %arg7[%c8_81, %c0_82], %337 {strides = array<i32>} : memref<64x32xbf16, #tpu.memory_space<vmem>>, vector<8x32xbf16>,
    %339 = vector.extract_strided_slice %7 {offsets = [56, 0], sizes = [8, 128], strides = [1, 1]} : vector<64x128xf32> to vector<8x128xf32>
    %340 = arith.truncf %318 : vector<8x32xf32> to vector<8x32xbf16>
    %cst_83 = arith.constant dense<0.000000e+00> : vector<8x128xf32>
    %341 = tpu.matmul %340, %20, %cst_83 {dimension_numbers = #tpu.dot_dimension_numbers<[1], [0], [0], [1], [0, 0, 1, 1], [], []>} : vector<8x32xbf16>, vector<32x128xbf16>, vector<8x128xf32> -> vector<8x128xf32>
    %342 = arith.addf %339, %341 : vector<8x128xf32>
    %343 = vector.extract_strided_slice %15 {offsets = [0, 0], sizes = [8, 128], strides = [1, 1]} : vector<64x128xf32> to vector<8x128xf32>
    %344 = arith.truncf %334 : vector<8x32xf32> to vector<8x32xbf16>
    %cst_84 = arith.constant dense<0.000000e+00> : vector<8x128xf32>
    %345 = tpu.matmul %344, %22, %cst_84 {dimension_numbers = #tpu.dot_dimension_numbers<[1], [0], [0], [1], [0, 0, 1, 1], [], []>} : vector<8x32xbf16>, vector<32x128xbf16>, vector<8x128xf32> -> vector<8x128xf32>
    %346 = arith.addf %343, %345 : vector<8x128xf32>
    %347 = vector.extract_strided_slice %342 {offsets = [0, 0], sizes = [8, 96], strides = [1, 1]} : vector<8x128xf32> to vector<8x96xf32>
    %348 = arith.negf %347 : vector<8x96xf32>
    %349 = math.exp %348 : vector<8x96xf32>
    %cst_85 = arith.constant 1.000000e+00 : f32
    %350 = vector.broadcast %cst_85 : f32 to vector<8x96xf32>
    %351 = arith.addf %350, %349 : vector<8x96xf32>
    %352 = arith.divf %350, %351 : vector<8x96xf32>
    %353 = vector.extract_strided_slice %342 {offsets = [0, 96], sizes = [8, 32], strides = [1, 1]} : vector<8x128xf32> to vector<8x32xf32>
    %354 = math.tanh %353 : vector<8x32xf32>
    %355 = vector.extract_strided_slice %352 {offsets = [0, 32], sizes = [8, 32], strides = [1, 1]} : vector<8x96xf32> to vector<8x32xf32>
    %356 = arith.mulf %355, %315 : vector<8x32xf32>
    %357 = vector.extract_strided_slice %352 {offsets = [0, 0], sizes = [8, 32], strides = [1, 1]} : vector<8x96xf32> to vector<8x32xf32>
    %358 = arith.mulf %357, %354 : vector<8x32xf32>
    %359 = arith.addf %356, %358 : vector<8x32xf32>
    %360 = vector.extract_strided_slice %352 {offsets = [0, 64], sizes = [8, 32], strides = [1, 1]} : vector<8x96xf32> to vector<8x32xf32>
    %361 = math.tanh %359 : vector<8x32xf32>
    %362 = arith.mulf %360, %361 : vector<8x32xf32>
    %363 = vector.extract_strided_slice %346 {offsets = [0, 0], sizes = [8, 96], strides = [1, 1]} : vector<8x128xf32> to vector<8x96xf32>
    %364 = arith.negf %363 : vector<8x96xf32>
    %365 = math.exp %364 : vector<8x96xf32>
    %cst_86 = arith.constant 1.000000e+00 : f32
    %366 = vector.broadcast %cst_86 : f32 to vector<8x96xf32>
    %367 = arith.addf %366, %365 : vector<8x96xf32>
    %368 = arith.divf %366, %367 : vector<8x96xf32>
    %369 = vector.extract_strided_slice %346 {offsets = [0, 96], sizes = [8, 32], strides = [1, 1]} : vector<8x128xf32> to vector<8x32xf32>
    %370 = math.tanh %369 : vector<8x32xf32>
    %371 = vector.extract_strided_slice %368 {offsets = [0, 32], sizes = [8, 32], strides = [1, 1]} : vector<8x96xf32> to vector<8x32xf32>
    %372 = arith.mulf %371, %331 : vector<8x32xf32>
    %373 = vector.extract_strided_slice %368 {offsets = [0, 0], sizes = [8, 32], strides = [1, 1]} : vector<8x96xf32> to vector<8x32xf32>
    %374 = arith.mulf %373, %370 : vector<8x32xf32>
    %375 = arith.addf %372, %374 : vector<8x32xf32>
    %376 = vector.extract_strided_slice %368 {offsets = [0, 64], sizes = [8, 32], strides = [1, 1]} : vector<8x96xf32> to vector<8x32xf32>
    %377 = math.tanh %375 : vector<8x32xf32>
    %378 = arith.mulf %376, %377 : vector<8x32xf32>
    %379 = arith.truncf %362 : vector<8x32xf32> to vector<8x32xbf16>
    %c56_87 = arith.constant 56 : index
    %c0_88 = arith.constant 0 : index
    %380 = vector.load %arg6[%c56_87, %c0_88] : memref<64x32xbf16, #tpu.memory_space<vmem>>, vector<8x32xbf16>
    tpu.vector_store %arg6[%c56_87, %c0_88], %379 {strides = array<i32>} : memref<64x32xbf16, #tpu.memory_space<vmem>>, vector<8x32xbf16>,
    %381 = arith.truncf %378 : vector<8x32xf32> to vector<8x32xbf16>
    %c0_89 = arith.constant 0 : index
    %c0_90 = arith.constant 0 : index
    %382 = vector.load %arg7[%c0_89, %c0_90] : memref<64x32xbf16, #tpu.memory_space<vmem>>, vector<8x32xbf16>
    tpu.vector_store %arg7[%c0_89, %c0_90], %381 {strides = array<i32>} : memref<64x32xbf16, #tpu.memory_space<vmem>>, vector<8x32xbf16>,
    %c0_91 = arith.constant 0 : index
    %c0_92 = arith.constant 0 : index
    %c0_93 = arith.constant 0 : index
    %383 = vector.load %arg8[%c0_91, %c0_92, %c0_93] : memref<2x8x32xf32, #tpu.memory_space<vmem>>, vector<1x8x32xf32>
    %384 = vector.shape_cast %383 : vector<1x8x32xf32> to vector<8x32xf32>
    %385 = vector.shape_cast %362 : vector<8x32xf32> to vector<1x8x32xf32>
    tpu.vector_store %arg8[%c0_91, %c0_92, %c0_93], %385 {strides = array<i32>} : memref<2x8x32xf32, #tpu.memory_space<vmem>>, vector<1x8x32xf32>,
    %c0_94 = arith.constant 0 : index
    %c0_95 = arith.constant 0 : index
    %c0_96 = arith.constant 0 : index
    %386 = vector.load %arg9[%c0_94, %c0_95, %c0_96] : memref<2x8x32xf32, #tpu.memory_space<vmem>>, vector<1x8x32xf32>
    %387 = vector.shape_cast %386 : vector<1x8x32xf32> to vector<8x32xf32>
    %388 = vector.shape_cast %359 : vector<8x32xf32> to vector<1x8x32xf32>
    tpu.vector_store %arg9[%c0_94, %c0_95, %c0_96], %388 {strides = array<i32>} : memref<2x8x32xf32, #tpu.memory_space<vmem>>, vector<1x8x32xf32>,
    %c1_97 = arith.constant 1 : index
    %c0_98 = arith.constant 0 : index
    %c0_99 = arith.constant 0 : index
    %389 = vector.load %arg8[%c1_97, %c0_98, %c0_99] : memref<2x8x32xf32, #tpu.memory_space<vmem>>, vector<1x8x32xf32>
    %390 = vector.shape_cast %389 : vector<1x8x32xf32> to vector<8x32xf32>
    %391 = vector.shape_cast %378 : vector<8x32xf32> to vector<1x8x32xf32>
    tpu.vector_store %arg8[%c1_97, %c0_98, %c0_99], %391 {strides = array<i32>} : memref<2x8x32xf32, #tpu.memory_space<vmem>>, vector<1x8x32xf32>,
    %c1_100 = arith.constant 1 : index
    %c0_101 = arith.constant 0 : index
    %c0_102 = arith.constant 0 : index
    %392 = vector.load %arg9[%c1_100, %c0_101, %c0_102] : memref<2x8x32xf32, #tpu.memory_space<vmem>>, vector<1x8x32xf32>
    %393 = vector.shape_cast %392 : vector<1x8x32xf32> to vector<8x32xf32>
    %394 = vector.shape_cast %375 : vector<8x32xf32> to vector<1x8x32xf32>
    tpu.vector_store %arg9[%c1_100, %c0_101, %c0_102], %394 {strides = array<i32>} : memref<2x8x32xf32, #tpu.memory_space<vmem>>, vector<1x8x32xf32>,
    return
  }
  func.func @transform_0(%arg0: i32) -> (i32, i32) {
    %c0_i32 = arith.constant 0 : i32
    %c0_i32_0 = arith.constant 0 : i32
    return %arg0, %c0_i32 : i32, i32
  }
  func.func @transform_1(%arg0: i32) -> (i32, i32) {
    %c0_i32 = arith.constant 0 : i32
    %0 = arith.subi %c0_i32, %arg0 : i32
    %c0_i32_0 = arith.constant 0 : i32
    %c0_i32_1 = arith.constant 0 : i32
    return %0, %c0_i32_0 : i32, i32
  }
  func.func @transform_2(%arg0: i32) -> (i32, i32, i32) {
    %c0_i32 = arith.constant 0 : i32
    %c0_i32_0 = arith.constant 0 : i32
    %c0_i32_1 = arith.constant 0 : i32
    %c0_i32_2 = arith.constant 0 : i32
    return %c0_i32, %c0_i32_0, %c0_i32_1 : i32, i32, i32
  }
  func.func @transform_3(%arg0: i32) -> (i32, i32, i32) {
    %c0_i32 = arith.constant 0 : i32
    %c0_i32_0 = arith.constant 0 : i32
    %c0_i32_1 = arith.constant 0 : i32
    %c0_i32_2 = arith.constant 0 : i32
    return %c0_i32, %c0_i32_0, %c0_i32_1 : i32, i32, i32
  }
  func.func @transform_4(%arg0: i32) -> (i32, i32, i32) {
    %c0_i32 = arith.constant 0 : i32
    %c0_i32_0 = arith.constant 0 : i32
    %c0_i32_1 = arith.constant 0 : i32
    %c0_i32_2 = arith.constant 0 : i32
    return %c0_i32, %c0_i32_0, %c0_i32_1 : i32, i32, i32
  }
  func.func @transform_5(%arg0: i32) -> (i32, i32) {
    %c0_i32 = arith.constant 0 : i32
    %c0_i32_0 = arith.constant 0 : i32
    return %arg0, %c0_i32 : i32, i32
  }
  func.func @transform_6(%arg0: i32) -> (i32, i32) {
    %c0_i32 = arith.constant 0 : i32
    %0 = arith.subi %c0_i32, %arg0 : i32
    %c0_i32_0 = arith.constant 0 : i32
    %c0_i32_1 = arith.constant 0 : i32
    return %0, %c0_i32_0 : i32, i32
  }
}

module attributes {stable_mosaic.version = 11 : i64} {
  func.func @_bilstm_ln_kernel(%arg0: i32, %arg1: memref<64x32xbf16, #tpu.memory_space<vmem>>, %arg2: memref<64x32xbf16, #tpu.memory_space<vmem>>, %arg3: memref<64x32xbf16, #tpu.memory_space<vmem>>, %arg4: memref<64x32xbf16, #tpu.memory_space<vmem>>, %arg5: memref<2x32x128xbf16, #tpu.memory_space<vmem>>, %arg6: memref<2x32x128xbf16, #tpu.memory_space<vmem>>, %arg7: memref<2x32x128xbf16, #tpu.memory_space<vmem>>, %arg8: memref<2x1x128xf32, #tpu.memory_space<vmem>>, %arg9: memref<64x32xbf16, #tpu.memory_space<vmem>>, %arg10: memref<64x32xbf16, #tpu.memory_space<vmem>>, %arg11: memref<2x8x32xf32, #tpu.memory_space<vmem>>, %arg12: memref<2x8x32xf32, #tpu.memory_space<vmem>>) attributes {dimension_semantics = [#tpu.dimension_semantics<arbitrary>], iteration_bounds = array<i64: 1>, scalar_prefetch = 0 : i64, scratch_operands = 2 : i64, tpu.core_type = #tpu.core_type<tc>, window_params = [{transform_indices = @transform_0, window_bounds = array<i64: 64, 32>}, {transform_indices = @transform_1, window_bounds = array<i64: 64, 32>}, {transform_indices = @transform_2, window_bounds = array<i64: 64, 32>}, {transform_indices = @transform_3, window_bounds = array<i64: 64, 32>}, {pipeline_mode = #tpu.pipeline_mode<synchronous>, transform_indices = @transform_4, window_bounds = array<i64: 2, 32, 128>}, {pipeline_mode = #tpu.pipeline_mode<synchronous>, transform_indices = @transform_5, window_bounds = array<i64: 2, 32, 128>}, {pipeline_mode = #tpu.pipeline_mode<synchronous>, transform_indices = @transform_6, window_bounds = array<i64: 2, 32, 128>}, {pipeline_mode = #tpu.pipeline_mode<synchronous>, transform_indices = @transform_7, window_bounds = array<i64: 2, 1, 128>}, {transform_indices = @transform_8, window_bounds = array<i64: 64, 32>}, {transform_indices = @transform_9, window_bounds = array<i64: 64, 32>}]} {
    %c0 = arith.constant 0 : index
    %c0_0 = arith.constant 0 : index
    %0 = vector.load %arg1[%c0, %c0_0] : memref<64x32xbf16, #tpu.memory_space<vmem>>, vector<64x32xbf16>
    %c0_1 = arith.constant 0 : index
    %c0_2 = arith.constant 0 : index
    %c0_3 = arith.constant 0 : index
    %1 = vector.load %arg5[%c0_1, %c0_2, %c0_3] : memref<2x32x128xbf16, #tpu.memory_space<vmem>>, vector<1x32x128xbf16>
    %2 = vector.shape_cast %1 : vector<1x32x128xbf16> to vector<32x128xbf16>
    %cst = arith.constant dense<0.000000e+00> : vector<64x128xf32>
    %3 = tpu.matmul %0, %2, %cst {dimension_numbers = #tpu.dot_dimension_numbers<[1], [0], [0], [1], [0, 0, 1, 1], [], []>} : vector<64x32xbf16>, vector<32x128xbf16>, vector<64x128xf32> -> vector<64x128xf32>
    %c0_4 = arith.constant 0 : index
    %c0_5 = arith.constant 0 : index
    %4 = vector.load %arg2[%c0_4, %c0_5] : memref<64x32xbf16, #tpu.memory_space<vmem>>, vector<64x32xbf16>
    %c0_6 = arith.constant 0 : index
    %c0_7 = arith.constant 0 : index
    %c0_8 = arith.constant 0 : index
    %5 = vector.load %arg6[%c0_6, %c0_7, %c0_8] : memref<2x32x128xbf16, #tpu.memory_space<vmem>>, vector<1x32x128xbf16>
    %6 = vector.shape_cast %5 : vector<1x32x128xbf16> to vector<32x128xbf16>
    %cst_9 = arith.constant dense<0.000000e+00> : vector<64x128xf32>
    %7 = tpu.matmul %4, %6, %cst_9 {dimension_numbers = #tpu.dot_dimension_numbers<[1], [0], [0], [1], [0, 0, 1, 1], [], []>} : vector<64x32xbf16>, vector<32x128xbf16>, vector<64x128xf32> -> vector<64x128xf32>
    %8 = arith.addf %3, %7 : vector<64x128xf32>
    %c0_10 = arith.constant 0 : index
    %c0_11 = arith.constant 0 : index
    %c0_12 = arith.constant 0 : index
    %9 = vector.load %arg8[%c0_10, %c0_11, %c0_12] : memref<2x1x128xf32, #tpu.memory_space<vmem>>, vector<1x1x128xf32>
    %10 = vector.shape_cast %9 : vector<1x1x128xf32> to vector<1x128xf32>
    %11 = vector.broadcast %10 : vector<1x128xf32> to vector<64x128xf32>
    %12 = arith.addf %8, %11 : vector<64x128xf32>
    %c0_13 = arith.constant 0 : index
    %c0_14 = arith.constant 0 : index
    %13 = vector.load %arg3[%c0_13, %c0_14] : memref<64x32xbf16, #tpu.memory_space<vmem>>, vector<64x32xbf16>
    %c1 = arith.constant 1 : index
    %c0_15 = arith.constant 0 : index
    %c0_16 = arith.constant 0 : index
    %14 = vector.load %arg5[%c1, %c0_15, %c0_16] : memref<2x32x128xbf16, #tpu.memory_space<vmem>>, vector<1x32x128xbf16>
    %15 = vector.shape_cast %14 : vector<1x32x128xbf16> to vector<32x128xbf16>
    %cst_17 = arith.constant dense<0.000000e+00> : vector<64x128xf32>
    %16 = tpu.matmul %13, %15, %cst_17 {dimension_numbers = #tpu.dot_dimension_numbers<[1], [0], [0], [1], [0, 0, 1, 1], [], []>} : vector<64x32xbf16>, vector<32x128xbf16>, vector<64x128xf32> -> vector<64x128xf32>
    %c0_18 = arith.constant 0 : index
    %c0_19 = arith.constant 0 : index
    %17 = vector.load %arg4[%c0_18, %c0_19] : memref<64x32xbf16, #tpu.memory_space<vmem>>, vector<64x32xbf16>
    %c1_20 = arith.constant 1 : index
    %c0_21 = arith.constant 0 : index
    %c0_22 = arith.constant 0 : index
    %18 = vector.load %arg6[%c1_20, %c0_21, %c0_22] : memref<2x32x128xbf16, #tpu.memory_space<vmem>>, vector<1x32x128xbf16>
    %19 = vector.shape_cast %18 : vector<1x32x128xbf16> to vector<32x128xbf16>
    %cst_23 = arith.constant dense<0.000000e+00> : vector<64x128xf32>
    %20 = tpu.matmul %17, %19, %cst_23 {dimension_numbers = #tpu.dot_dimension_numbers<[1], [0], [0], [1], [0, 0, 1, 1], [], []>} : vector<64x32xbf16>, vector<32x128xbf16>, vector<64x128xf32> -> vector<64x128xf32>
    %21 = arith.addf %16, %20 : vector<64x128xf32>
    %c1_24 = arith.constant 1 : index
    %c0_25 = arith.constant 0 : index
    %c0_26 = arith.constant 0 : index
    %22 = vector.load %arg8[%c1_24, %c0_25, %c0_26] : memref<2x1x128xf32, #tpu.memory_space<vmem>>, vector<1x1x128xf32>
    %23 = vector.shape_cast %22 : vector<1x1x128xf32> to vector<1x128xf32>
    %24 = vector.broadcast %23 : vector<1x128xf32> to vector<64x128xf32>
    %25 = arith.addf %21, %24 : vector<64x128xf32>
    %c0_i32 = arith.constant 0 : i32
    %26 = arith.cmpi eq, %arg0, %c0_i32 : i32
    %27 = arith.extui %26 : i1 to i32
    %c0_i32_27 = arith.constant 0 : i32
    %28 = arith.cmpi ne, %27, %c0_i32_27 : i32
    scf.if %28 {
      %cst_115 = arith.constant 0.000000e+00 : f32
      %405 = vector.broadcast %cst_115 : f32 to vector<2x8x32xf32>
      %c0_116 = arith.constant 0 : index
      %c0_117 = arith.constant 0 : index
      %c0_118 = arith.constant 0 : index
      %406 = vector.load %arg11[%c0_116, %c0_117, %c0_118] : memref<2x8x32xf32, #tpu.memory_space<vmem>>, vector<2x8x32xf32>
      tpu.vector_store %arg11[%c0_116, %c0_117, %c0_118], %405 {strides = array<i32>} : memref<2x8x32xf32, #tpu.memory_space<vmem>>, vector<2x8x32xf32>,
      %cst_119 = arith.constant 0.000000e+00 : f32
      %407 = vector.broadcast %cst_119 : f32 to vector<2x8x32xf32>
      %c0_120 = arith.constant 0 : index
      %c0_121 = arith.constant 0 : index
      %c0_122 = arith.constant 0 : index
      %408 = vector.load %arg12[%c0_120, %c0_121, %c0_122] : memref<2x8x32xf32, #tpu.memory_space<vmem>>, vector<2x8x32xf32>
      tpu.vector_store %arg12[%c0_120, %c0_121, %c0_122], %407 {strides = array<i32>} : memref<2x8x32xf32, #tpu.memory_space<vmem>>, vector<2x8x32xf32>,
    } else {
    }
    %c0_28 = arith.constant 0 : index
    %c0_29 = arith.constant 0 : index
    %c0_30 = arith.constant 0 : index
    %29 = vector.load %arg7[%c0_28, %c0_29, %c0_30] : memref<2x32x128xbf16, #tpu.memory_space<vmem>>, vector<1x32x128xbf16>
    %30 = vector.shape_cast %29 : vector<1x32x128xbf16> to vector<32x128xbf16>
    %c1_31 = arith.constant 1 : index
    %c0_32 = arith.constant 0 : index
    %c0_33 = arith.constant 0 : index
    %31 = vector.load %arg7[%c1_31, %c0_32, %c0_33] : memref<2x32x128xbf16, #tpu.memory_space<vmem>>, vector<1x32x128xbf16>
    %32 = vector.shape_cast %31 : vector<1x32x128xbf16> to vector<32x128xbf16>
    %c0_34 = arith.constant 0 : index
    %c0_35 = arith.constant 0 : index
    %c0_36 = arith.constant 0 : index
    %33 = vector.load %arg11[%c0_34, %c0_35, %c0_36] : memref<2x8x32xf32, #tpu.memory_space<vmem>>, vector<1x8x32xf32>
    %34 = vector.shape_cast %33 : vector<1x8x32xf32> to vector<8x32xf32>
    %c0_37 = arith.constant 0 : index
    %c0_38 = arith.constant 0 : index
    %c0_39 = arith.constant 0 : index
    %35 = vector.load %arg12[%c0_37, %c0_38, %c0_39] : memref<2x8x32xf32, #tpu.memory_space<vmem>>, vector<1x8x32xf32>
    %36 = vector.shape_cast %35 : vector<1x8x32xf32> to vector<8x32xf32>
    %c1_40 = arith.constant 1 : index
    %c0_41 = arith.constant 0 : index
    %c0_42 = arith.constant 0 : index
    %37 = vector.load %arg11[%c1_40, %c0_41, %c0_42] : memref<2x8x32xf32, #tpu.memory_space<vmem>>, vector<1x8x32xf32>
    %38 = vector.shape_cast %37 : vector<1x8x32xf32> to vector<8x32xf32>
    %c1_43 = arith.constant 1 : index
    %c0_44 = arith.constant 0 : index
    %c0_45 = arith.constant 0 : index
    %39 = vector.load %arg12[%c1_43, %c0_44, %c0_45] : memref<2x8x32xf32, #tpu.memory_space<vmem>>, vector<1x8x32xf32>
    %40 = vector.shape_cast %39 : vector<1x8x32xf32> to vector<8x32xf32>
    %41 = vector.extract_strided_slice %12 {offsets = [0, 0], sizes = [8, 128], strides = [1, 1]} : vector<64x128xf32> to vector<8x128xf32>
    %42 = arith.truncf %34 : vector<8x32xf32> to vector<8x32xbf16>
    %cst_46 = arith.constant dense<0.000000e+00> : vector<8x128xf32>
    %43 = tpu.matmul %42, %30, %cst_46 {dimension_numbers = #tpu.dot_dimension_numbers<[1], [0], [0], [1], [0, 0, 1, 1], [], []>} : vector<8x32xbf16>, vector<32x128xbf16>, vector<8x128xf32> -> vector<8x128xf32>
    %44 = arith.addf %41, %43 : vector<8x128xf32>
    %45 = vector.extract_strided_slice %25 {offsets = [56, 0], sizes = [8, 128], strides = [1, 1]} : vector<64x128xf32> to vector<8x128xf32>
    %46 = arith.truncf %38 : vector<8x32xf32> to vector<8x32xbf16>
    %cst_47 = arith.constant dense<0.000000e+00> : vector<8x128xf32>
    %47 = tpu.matmul %46, %32, %cst_47 {dimension_numbers = #tpu.dot_dimension_numbers<[1], [0], [0], [1], [0, 0, 1, 1], [], []>} : vector<8x32xbf16>, vector<32x128xbf16>, vector<8x128xf32> -> vector<8x128xf32>
    %48 = arith.addf %45, %47 : vector<8x128xf32>
    %49 = vector.extract_strided_slice %44 {offsets = [0, 0], sizes = [8, 96], strides = [1, 1]} : vector<8x128xf32> to vector<8x96xf32>
    %50 = arith.negf %49 : vector<8x96xf32>
    %51 = math.exp %50 : vector<8x96xf32>
    %cst_48 = arith.constant 1.000000e+00 : f32
    %52 = vector.broadcast %cst_48 : f32 to vector<8x96xf32>
    %53 = arith.addf %52, %51 : vector<8x96xf32>
    %54 = arith.divf %52, %53 : vector<8x96xf32>
    %55 = vector.extract_strided_slice %44 {offsets = [0, 96], sizes = [8, 32], strides = [1, 1]} : vector<8x128xf32> to vector<8x32xf32>
    %56 = math.tanh %55 : vector<8x32xf32>
    %57 = vector.extract_strided_slice %54 {offsets = [0, 32], sizes = [8, 32], strides = [1, 1]} : vector<8x96xf32> to vector<8x32xf32>
    %58 = arith.mulf %57, %36 : vector<8x32xf32>
    %59 = vector.extract_strided_slice %54 {offsets = [0, 0], sizes = [8, 32], strides = [1, 1]} : vector<8x96xf32> to vector<8x32xf32>
    %60 = arith.mulf %59, %56 : vector<8x32xf32>
    %61 = arith.addf %58, %60 : vector<8x32xf32>
    %62 = vector.extract_strided_slice %54 {offsets = [0, 64], sizes = [8, 32], strides = [1, 1]} : vector<8x96xf32> to vector<8x32xf32>
    %63 = math.tanh %61 : vector<8x32xf32>
    %64 = arith.mulf %62, %63 : vector<8x32xf32>
    %65 = vector.extract_strided_slice %48 {offsets = [0, 0], sizes = [8, 96], strides = [1, 1]} : vector<8x128xf32> to vector<8x96xf32>
    %66 = arith.negf %65 : vector<8x96xf32>
    %67 = math.exp %66 : vector<8x96xf32>
    %cst_49 = arith.constant 1.000000e+00 : f32
    %68 = vector.broadcast %cst_49 : f32 to vector<8x96xf32>
    %69 = arith.addf %68, %67 : vector<8x96xf32>
    %70 = arith.divf %68, %69 : vector<8x96xf32>
    %71 = vector.extract_strided_slice %48 {offsets = [0, 96], sizes = [8, 32], strides = [1, 1]} : vector<8x128xf32> to vector<8x32xf32>
    %72 = math.tanh %71 : vector<8x32xf32>
    %73 = vector.extract_strided_slice %70 {offsets = [0, 32], sizes = [8, 32], strides = [1, 1]} : vector<8x96xf32> to vector<8x32xf32>
    %74 = arith.mulf %73, %40 : vector<8x32xf32>
    %75 = vector.extract_strided_slice %70 {offsets = [0, 0], sizes = [8, 32], strides = [1, 1]} : vector<8x96xf32> to vector<8x32xf32>
    %76 = arith.mulf %75, %72 : vector<8x32xf32>
    %77 = arith.addf %74, %76 : vector<8x32xf32>
    %78 = vector.extract_strided_slice %70 {offsets = [0, 64], sizes = [8, 32], strides = [1, 1]} : vector<8x96xf32> to vector<8x32xf32>
    %79 = math.tanh %77 : vector<8x32xf32>
    %80 = arith.mulf %78, %79 : vector<8x32xf32>
    %81 = arith.truncf %64 : vector<8x32xf32> to vector<8x32xbf16>
    %c0_50 = arith.constant 0 : index
    %c0_51 = arith.constant 0 : index
    %82 = vector.load %arg9[%c0_50, %c0_51] : memref<64x32xbf16, #tpu.memory_space<vmem>>, vector<8x32xbf16>
    tpu.vector_store %arg9[%c0_50, %c0_51], %81 {strides = array<i32>} : memref<64x32xbf16, #tpu.memory_space<vmem>>, vector<8x32xbf16>,
    %83 = arith.truncf %80 : vector<8x32xf32> to vector<8x32xbf16>
    %c56 = arith.constant 56 : index
    %c0_52 = arith.constant 0 : index
    %84 = vector.load %arg10[%c56, %c0_52] : memref<64x32xbf16, #tpu.memory_space<vmem>>, vector<8x32xbf16>
    tpu.vector_store %arg10[%c56, %c0_52], %83 {strides = array<i32>} : memref<64x32xbf16, #tpu.memory_space<vmem>>, vector<8x32xbf16>,
    %85 = vector.extract_strided_slice %12 {offsets = [8, 0], sizes = [8, 128], strides = [1, 1]} : vector<64x128xf32> to vector<8x128xf32>
    %86 = arith.truncf %64 : vector<8x32xf32> to vector<8x32xbf16>
    %cst_53 = arith.constant dense<0.000000e+00> : vector<8x128xf32>
    %87 = tpu.matmul %86, %30, %cst_53 {dimension_numbers = #tpu.dot_dimension_numbers<[1], [0], [0], [1], [0, 0, 1, 1], [], []>} : vector<8x32xbf16>, vector<32x128xbf16>, vector<8x128xf32> -> vector<8x128xf32>
    %88 = arith.addf %85, %87 : vector<8x128xf32>
    %89 = vector.extract_strided_slice %25 {offsets = [48, 0], sizes = [8, 128], strides = [1, 1]} : vector<64x128xf32> to vector<8x128xf32>
    %90 = arith.truncf %80 : vector<8x32xf32> to vector<8x32xbf16>
    %cst_54 = arith.constant dense<0.000000e+00> : vector<8x128xf32>
    %91 = tpu.matmul %90, %32, %cst_54 {dimension_numbers = #tpu.dot_dimension_numbers<[1], [0], [0], [1], [0, 0, 1, 1], [], []>} : vector<8x32xbf16>, vector<32x128xbf16>, vector<8x128xf32> -> vector<8x128xf32>
    %92 = arith.addf %89, %91 : vector<8x128xf32>
    %93 = vector.extract_strided_slice %88 {offsets = [0, 0], sizes = [8, 96], strides = [1, 1]} : vector<8x128xf32> to vector<8x96xf32>
    %94 = arith.negf %93 : vector<8x96xf32>
    %95 = math.exp %94 : vector<8x96xf32>
    %cst_55 = arith.constant 1.000000e+00 : f32
    %96 = vector.broadcast %cst_55 : f32 to vector<8x96xf32>
    %97 = arith.addf %96, %95 : vector<8x96xf32>
    %98 = arith.divf %96, %97 : vector<8x96xf32>
    %99 = vector.extract_strided_slice %88 {offsets = [0, 96], sizes = [8, 32], strides = [1, 1]} : vector<8x128xf32> to vector<8x32xf32>
    %100 = math.tanh %99 : vector<8x32xf32>
    %101 = vector.extract_strided_slice %98 {offsets = [0, 32], sizes = [8, 32], strides = [1, 1]} : vector<8x96xf32> to vector<8x32xf32>
    %102 = arith.mulf %101, %61 : vector<8x32xf32>
    %103 = vector.extract_strided_slice %98 {offsets = [0, 0], sizes = [8, 32], strides = [1, 1]} : vector<8x96xf32> to vector<8x32xf32>
    %104 = arith.mulf %103, %100 : vector<8x32xf32>
    %105 = arith.addf %102, %104 : vector<8x32xf32>
    %106 = vector.extract_strided_slice %98 {offsets = [0, 64], sizes = [8, 32], strides = [1, 1]} : vector<8x96xf32> to vector<8x32xf32>
    %107 = math.tanh %105 : vector<8x32xf32>
    %108 = arith.mulf %106, %107 : vector<8x32xf32>
    %109 = vector.extract_strided_slice %92 {offsets = [0, 0], sizes = [8, 96], strides = [1, 1]} : vector<8x128xf32> to vector<8x96xf32>
    %110 = arith.negf %109 : vector<8x96xf32>
    %111 = math.exp %110 : vector<8x96xf32>
    %cst_56 = arith.constant 1.000000e+00 : f32
    %112 = vector.broadcast %cst_56 : f32 to vector<8x96xf32>
    %113 = arith.addf %112, %111 : vector<8x96xf32>
    %114 = arith.divf %112, %113 : vector<8x96xf32>
    %115 = vector.extract_strided_slice %92 {offsets = [0, 96], sizes = [8, 32], strides = [1, 1]} : vector<8x128xf32> to vector<8x32xf32>
    %116 = math.tanh %115 : vector<8x32xf32>
    %117 = vector.extract_strided_slice %114 {offsets = [0, 32], sizes = [8, 32], strides = [1, 1]} : vector<8x96xf32> to vector<8x32xf32>
    %118 = arith.mulf %117, %77 : vector<8x32xf32>
    %119 = vector.extract_strided_slice %114 {offsets = [0, 0], sizes = [8, 32], strides = [1, 1]} : vector<8x96xf32> to vector<8x32xf32>
    %120 = arith.mulf %119, %116 : vector<8x32xf32>
    %121 = arith.addf %118, %120 : vector<8x32xf32>
    %122 = vector.extract_strided_slice %114 {offsets = [0, 64], sizes = [8, 32], strides = [1, 1]} : vector<8x96xf32> to vector<8x32xf32>
    %123 = math.tanh %121 : vector<8x32xf32>
    %124 = arith.mulf %122, %123 : vector<8x32xf32>
    %125 = arith.truncf %108 : vector<8x32xf32> to vector<8x32xbf16>
    %c8 = arith.constant 8 : index
    %c0_57 = arith.constant 0 : index
    %126 = vector.load %arg9[%c8, %c0_57] : memref<64x32xbf16, #tpu.memory_space<vmem>>, vector<8x32xbf16>
    tpu.vector_store %arg9[%c8, %c0_57], %125 {strides = array<i32>} : memref<64x32xbf16, #tpu.memory_space<vmem>>, vector<8x32xbf16>,
    %127 = arith.truncf %124 : vector<8x32xf32> to vector<8x32xbf16>
    %c48 = arith.constant 48 : index
    %c0_58 = arith.constant 0 : index
    %128 = vector.load %arg10[%c48, %c0_58] : memref<64x32xbf16, #tpu.memory_space<vmem>>, vector<8x32xbf16>
    tpu.vector_store %arg10[%c48, %c0_58], %127 {strides = array<i32>} : memref<64x32xbf16, #tpu.memory_space<vmem>>, vector<8x32xbf16>,
    %129 = vector.extract_strided_slice %12 {offsets = [16, 0], sizes = [8, 128], strides = [1, 1]} : vector<64x128xf32> to vector<8x128xf32>
    %130 = arith.truncf %108 : vector<8x32xf32> to vector<8x32xbf16>
    %cst_59 = arith.constant dense<0.000000e+00> : vector<8x128xf32>
    %131 = tpu.matmul %130, %30, %cst_59 {dimension_numbers = #tpu.dot_dimension_numbers<[1], [0], [0], [1], [0, 0, 1, 1], [], []>} : vector<8x32xbf16>, vector<32x128xbf16>, vector<8x128xf32> -> vector<8x128xf32>
    %132 = arith.addf %129, %131 : vector<8x128xf32>
    %133 = vector.extract_strided_slice %25 {offsets = [40, 0], sizes = [8, 128], strides = [1, 1]} : vector<64x128xf32> to vector<8x128xf32>
    %134 = arith.truncf %124 : vector<8x32xf32> to vector<8x32xbf16>
    %cst_60 = arith.constant dense<0.000000e+00> : vector<8x128xf32>
    %135 = tpu.matmul %134, %32, %cst_60 {dimension_numbers = #tpu.dot_dimension_numbers<[1], [0], [0], [1], [0, 0, 1, 1], [], []>} : vector<8x32xbf16>, vector<32x128xbf16>, vector<8x128xf32> -> vector<8x128xf32>
    %136 = arith.addf %133, %135 : vector<8x128xf32>
    %137 = vector.extract_strided_slice %132 {offsets = [0, 0], sizes = [8, 96], strides = [1, 1]} : vector<8x128xf32> to vector<8x96xf32>
    %138 = arith.negf %137 : vector<8x96xf32>
    %139 = math.exp %138 : vector<8x96xf32>
    %cst_61 = arith.constant 1.000000e+00 : f32
    %140 = vector.broadcast %cst_61 : f32 to vector<8x96xf32>
    %141 = arith.addf %140, %139 : vector<8x96xf32>
    %142 = arith.divf %140, %141 : vector<8x96xf32>
    %143 = vector.extract_strided_slice %132 {offsets = [0, 96], sizes = [8, 32], strides = [1, 1]} : vector<8x128xf32> to vector<8x32xf32>
    %144 = math.tanh %143 : vector<8x32xf32>
    %145 = vector.extract_strided_slice %142 {offsets = [0, 32], sizes = [8, 32], strides = [1, 1]} : vector<8x96xf32> to vector<8x32xf32>
    %146 = arith.mulf %145, %105 : vector<8x32xf32>
    %147 = vector.extract_strided_slice %142 {offsets = [0, 0], sizes = [8, 32], strides = [1, 1]} : vector<8x96xf32> to vector<8x32xf32>
    %148 = arith.mulf %147, %144 : vector<8x32xf32>
    %149 = arith.addf %146, %148 : vector<8x32xf32>
    %150 = vector.extract_strided_slice %142 {offsets = [0, 64], sizes = [8, 32], strides = [1, 1]} : vector<8x96xf32> to vector<8x32xf32>
    %151 = math.tanh %149 : vector<8x32xf32>
    %152 = arith.mulf %150, %151 : vector<8x32xf32>
    %153 = vector.extract_strided_slice %136 {offsets = [0, 0], sizes = [8, 96], strides = [1, 1]} : vector<8x128xf32> to vector<8x96xf32>
    %154 = arith.negf %153 : vector<8x96xf32>
    %155 = math.exp %154 : vector<8x96xf32>
    %cst_62 = arith.constant 1.000000e+00 : f32
    %156 = vector.broadcast %cst_62 : f32 to vector<8x96xf32>
    %157 = arith.addf %156, %155 : vector<8x96xf32>
    %158 = arith.divf %156, %157 : vector<8x96xf32>
    %159 = vector.extract_strided_slice %136 {offsets = [0, 96], sizes = [8, 32], strides = [1, 1]} : vector<8x128xf32> to vector<8x32xf32>
    %160 = math.tanh %159 : vector<8x32xf32>
    %161 = vector.extract_strided_slice %158 {offsets = [0, 32], sizes = [8, 32], strides = [1, 1]} : vector<8x96xf32> to vector<8x32xf32>
    %162 = arith.mulf %161, %121 : vector<8x32xf32>
    %163 = vector.extract_strided_slice %158 {offsets = [0, 0], sizes = [8, 32], strides = [1, 1]} : vector<8x96xf32> to vector<8x32xf32>
    %164 = arith.mulf %163, %160 : vector<8x32xf32>
    %165 = arith.addf %162, %164 : vector<8x32xf32>
    %166 = vector.extract_strided_slice %158 {offsets = [0, 64], sizes = [8, 32], strides = [1, 1]} : vector<8x96xf32> to vector<8x32xf32>
    %167 = math.tanh %165 : vector<8x32xf32>
    %168 = arith.mulf %166, %167 : vector<8x32xf32>
    %169 = arith.truncf %152 : vector<8x32xf32> to vector<8x32xbf16>
    %c16 = arith.constant 16 : index
    %c0_63 = arith.constant 0 : index
    %170 = vector.load %arg9[%c16, %c0_63] : memref<64x32xbf16, #tpu.memory_space<vmem>>, vector<8x32xbf16>
    tpu.vector_store %arg9[%c16, %c0_63], %169 {strides = array<i32>} : memref<64x32xbf16, #tpu.memory_space<vmem>>, vector<8x32xbf16>,
    %171 = arith.truncf %168 : vector<8x32xf32> to vector<8x32xbf16>
    %c40 = arith.constant 40 : index
    %c0_64 = arith.constant 0 : index
    %172 = vector.load %arg10[%c40, %c0_64] : memref<64x32xbf16, #tpu.memory_space<vmem>>, vector<8x32xbf16>
    tpu.vector_store %arg10[%c40, %c0_64], %171 {strides = array<i32>} : memref<64x32xbf16, #tpu.memory_space<vmem>>, vector<8x32xbf16>,
    %173 = vector.extract_strided_slice %12 {offsets = [24, 0], sizes = [8, 128], strides = [1, 1]} : vector<64x128xf32> to vector<8x128xf32>
    %174 = arith.truncf %152 : vector<8x32xf32> to vector<8x32xbf16>
    %cst_65 = arith.constant dense<0.000000e+00> : vector<8x128xf32>
    %175 = tpu.matmul %174, %30, %cst_65 {dimension_numbers = #tpu.dot_dimension_numbers<[1], [0], [0], [1], [0, 0, 1, 1], [], []>} : vector<8x32xbf16>, vector<32x128xbf16>, vector<8x128xf32> -> vector<8x128xf32>
    %176 = arith.addf %173, %175 : vector<8x128xf32>
    %177 = vector.extract_strided_slice %25 {offsets = [32, 0], sizes = [8, 128], strides = [1, 1]} : vector<64x128xf32> to vector<8x128xf32>
    %178 = arith.truncf %168 : vector<8x32xf32> to vector<8x32xbf16>
    %cst_66 = arith.constant dense<0.000000e+00> : vector<8x128xf32>
    %179 = tpu.matmul %178, %32, %cst_66 {dimension_numbers = #tpu.dot_dimension_numbers<[1], [0], [0], [1], [0, 0, 1, 1], [], []>} : vector<8x32xbf16>, vector<32x128xbf16>, vector<8x128xf32> -> vector<8x128xf32>
    %180 = arith.addf %177, %179 : vector<8x128xf32>
    %181 = vector.extract_strided_slice %176 {offsets = [0, 0], sizes = [8, 96], strides = [1, 1]} : vector<8x128xf32> to vector<8x96xf32>
    %182 = arith.negf %181 : vector<8x96xf32>
    %183 = math.exp %182 : vector<8x96xf32>
    %cst_67 = arith.constant 1.000000e+00 : f32
    %184 = vector.broadcast %cst_67 : f32 to vector<8x96xf32>
    %185 = arith.addf %184, %183 : vector<8x96xf32>
    %186 = arith.divf %184, %185 : vector<8x96xf32>
    %187 = vector.extract_strided_slice %176 {offsets = [0, 96], sizes = [8, 32], strides = [1, 1]} : vector<8x128xf32> to vector<8x32xf32>
    %188 = math.tanh %187 : vector<8x32xf32>
    %189 = vector.extract_strided_slice %186 {offsets = [0, 32], sizes = [8, 32], strides = [1, 1]} : vector<8x96xf32> to vector<8x32xf32>
    %190 = arith.mulf %189, %149 : vector<8x32xf32>
    %191 = vector.extract_strided_slice %186 {offsets = [0, 0], sizes = [8, 32], strides = [1, 1]} : vector<8x96xf32> to vector<8x32xf32>
    %192 = arith.mulf %191, %188 : vector<8x32xf32>
    %193 = arith.addf %190, %192 : vector<8x32xf32>
    %194 = vector.extract_strided_slice %186 {offsets = [0, 64], sizes = [8, 32], strides = [1, 1]} : vector<8x96xf32> to vector<8x32xf32>
    %195 = math.tanh %193 : vector<8x32xf32>
    %196 = arith.mulf %194, %195 : vector<8x32xf32>
    %197 = vector.extract_strided_slice %180 {offsets = [0, 0], sizes = [8, 96], strides = [1, 1]} : vector<8x128xf32> to vector<8x96xf32>
    %198 = arith.negf %197 : vector<8x96xf32>
    %199 = math.exp %198 : vector<8x96xf32>
    %cst_68 = arith.constant 1.000000e+00 : f32
    %200 = vector.broadcast %cst_68 : f32 to vector<8x96xf32>
    %201 = arith.addf %200, %199 : vector<8x96xf32>
    %202 = arith.divf %200, %201 : vector<8x96xf32>
    %203 = vector.extract_strided_slice %180 {offsets = [0, 96], sizes = [8, 32], strides = [1, 1]} : vector<8x128xf32> to vector<8x32xf32>
    %204 = math.tanh %203 : vector<8x32xf32>
    %205 = vector.extract_strided_slice %202 {offsets = [0, 32], sizes = [8, 32], strides = [1, 1]} : vector<8x96xf32> to vector<8x32xf32>
    %206 = arith.mulf %205, %165 : vector<8x32xf32>
    %207 = vector.extract_strided_slice %202 {offsets = [0, 0], sizes = [8, 32], strides = [1, 1]} : vector<8x96xf32> to vector<8x32xf32>
    %208 = arith.mulf %207, %204 : vector<8x32xf32>
    %209 = arith.addf %206, %208 : vector<8x32xf32>
    %210 = vector.extract_strided_slice %202 {offsets = [0, 64], sizes = [8, 32], strides = [1, 1]} : vector<8x96xf32> to vector<8x32xf32>
    %211 = math.tanh %209 : vector<8x32xf32>
    %212 = arith.mulf %210, %211 : vector<8x32xf32>
    %213 = arith.truncf %196 : vector<8x32xf32> to vector<8x32xbf16>
    %c24 = arith.constant 24 : index
    %c0_69 = arith.constant 0 : index
    %214 = vector.load %arg9[%c24, %c0_69] : memref<64x32xbf16, #tpu.memory_space<vmem>>, vector<8x32xbf16>
    tpu.vector_store %arg9[%c24, %c0_69], %213 {strides = array<i32>} : memref<64x32xbf16, #tpu.memory_space<vmem>>, vector<8x32xbf16>,
    %215 = arith.truncf %212 : vector<8x32xf32> to vector<8x32xbf16>
    %c32 = arith.constant 32 : index
    %c0_70 = arith.constant 0 : index
    %216 = vector.load %arg10[%c32, %c0_70] : memref<64x32xbf16, #tpu.memory_space<vmem>>, vector<8x32xbf16>
    tpu.vector_store %arg10[%c32, %c0_70], %215 {strides = array<i32>} : memref<64x32xbf16, #tpu.memory_space<vmem>>, vector<8x32xbf16>,
    %217 = vector.extract_strided_slice %12 {offsets = [32, 0], sizes = [8, 128], strides = [1, 1]} : vector<64x128xf32> to vector<8x128xf32>
    %218 = arith.truncf %196 : vector<8x32xf32> to vector<8x32xbf16>
    %cst_71 = arith.constant dense<0.000000e+00> : vector<8x128xf32>
    %219 = tpu.matmul %218, %30, %cst_71 {dimension_numbers = #tpu.dot_dimension_numbers<[1], [0], [0], [1], [0, 0, 1, 1], [], []>} : vector<8x32xbf16>, vector<32x128xbf16>, vector<8x128xf32> -> vector<8x128xf32>
    %220 = arith.addf %217, %219 : vector<8x128xf32>
    %221 = vector.extract_strided_slice %25 {offsets = [24, 0], sizes = [8, 128], strides = [1, 1]} : vector<64x128xf32> to vector<8x128xf32>
    %222 = arith.truncf %212 : vector<8x32xf32> to vector<8x32xbf16>
    %cst_72 = arith.constant dense<0.000000e+00> : vector<8x128xf32>
    %223 = tpu.matmul %222, %32, %cst_72 {dimension_numbers = #tpu.dot_dimension_numbers<[1], [0], [0], [1], [0, 0, 1, 1], [], []>} : vector<8x32xbf16>, vector<32x128xbf16>, vector<8x128xf32> -> vector<8x128xf32>
    %224 = arith.addf %221, %223 : vector<8x128xf32>
    %225 = vector.extract_strided_slice %220 {offsets = [0, 0], sizes = [8, 96], strides = [1, 1]} : vector<8x128xf32> to vector<8x96xf32>
    %226 = arith.negf %225 : vector<8x96xf32>
    %227 = math.exp %226 : vector<8x96xf32>
    %cst_73 = arith.constant 1.000000e+00 : f32
    %228 = vector.broadcast %cst_73 : f32 to vector<8x96xf32>
    %229 = arith.addf %228, %227 : vector<8x96xf32>
    %230 = arith.divf %228, %229 : vector<8x96xf32>
    %231 = vector.extract_strided_slice %220 {offsets = [0, 96], sizes = [8, 32], strides = [1, 1]} : vector<8x128xf32> to vector<8x32xf32>
    %232 = math.tanh %231 : vector<8x32xf32>
    %233 = vector.extract_strided_slice %230 {offsets = [0, 32], sizes = [8, 32], strides = [1, 1]} : vector<8x96xf32> to vector<8x32xf32>
    %234 = arith.mulf %233, %193 : vector<8x32xf32>
    %235 = vector.extract_strided_slice %230 {offsets = [0, 0], sizes = [8, 32], strides = [1, 1]} : vector<8x96xf32> to vector<8x32xf32>
    %236 = arith.mulf %235, %232 : vector<8x32xf32>
    %237 = arith.addf %234, %236 : vector<8x32xf32>
    %238 = vector.extract_strided_slice %230 {offsets = [0, 64], sizes = [8, 32], strides = [1, 1]} : vector<8x96xf32> to vector<8x32xf32>
    %239 = math.tanh %237 : vector<8x32xf32>
    %240 = arith.mulf %238, %239 : vector<8x32xf32>
    %241 = vector.extract_strided_slice %224 {offsets = [0, 0], sizes = [8, 96], strides = [1, 1]} : vector<8x128xf32> to vector<8x96xf32>
    %242 = arith.negf %241 : vector<8x96xf32>
    %243 = math.exp %242 : vector<8x96xf32>
    %cst_74 = arith.constant 1.000000e+00 : f32
    %244 = vector.broadcast %cst_74 : f32 to vector<8x96xf32>
    %245 = arith.addf %244, %243 : vector<8x96xf32>
    %246 = arith.divf %244, %245 : vector<8x96xf32>
    %247 = vector.extract_strided_slice %224 {offsets = [0, 96], sizes = [8, 32], strides = [1, 1]} : vector<8x128xf32> to vector<8x32xf32>
    %248 = math.tanh %247 : vector<8x32xf32>
    %249 = vector.extract_strided_slice %246 {offsets = [0, 32], sizes = [8, 32], strides = [1, 1]} : vector<8x96xf32> to vector<8x32xf32>
    %250 = arith.mulf %249, %209 : vector<8x32xf32>
    %251 = vector.extract_strided_slice %246 {offsets = [0, 0], sizes = [8, 32], strides = [1, 1]} : vector<8x96xf32> to vector<8x32xf32>
    %252 = arith.mulf %251, %248 : vector<8x32xf32>
    %253 = arith.addf %250, %252 : vector<8x32xf32>
    %254 = vector.extract_strided_slice %246 {offsets = [0, 64], sizes = [8, 32], strides = [1, 1]} : vector<8x96xf32> to vector<8x32xf32>
    %255 = math.tanh %253 : vector<8x32xf32>
    %256 = arith.mulf %254, %255 : vector<8x32xf32>
    %257 = arith.truncf %240 : vector<8x32xf32> to vector<8x32xbf16>
    %c32_75 = arith.constant 32 : index
    %c0_76 = arith.constant 0 : index
    %258 = vector.load %arg9[%c32_75, %c0_76] : memref<64x32xbf16, #tpu.memory_space<vmem>>, vector<8x32xbf16>
    tpu.vector_store %arg9[%c32_75, %c0_76], %257 {strides = array<i32>} : memref<64x32xbf16, #tpu.memory_space<vmem>>, vector<8x32xbf16>,
    %259 = arith.truncf %256 : vector<8x32xf32> to vector<8x32xbf16>
    %c24_77 = arith.constant 24 : index
    %c0_78 = arith.constant 0 : index
    %260 = vector.load %arg10[%c24_77, %c0_78] : memref<64x32xbf16, #tpu.memory_space<vmem>>, vector<8x32xbf16>
    tpu.vector_store %arg10[%c24_77, %c0_78], %259 {strides = array<i32>} : memref<64x32xbf16, #tpu.memory_space<vmem>>, vector<8x32xbf16>,
    %261 = vector.extract_strided_slice %12 {offsets = [40, 0], sizes = [8, 128], strides = [1, 1]} : vector<64x128xf32> to vector<8x128xf32>
    %262 = arith.truncf %240 : vector<8x32xf32> to vector<8x32xbf16>
    %cst_79 = arith.constant dense<0.000000e+00> : vector<8x128xf32>
    %263 = tpu.matmul %262, %30, %cst_79 {dimension_numbers = #tpu.dot_dimension_numbers<[1], [0], [0], [1], [0, 0, 1, 1], [], []>} : vector<8x32xbf16>, vector<32x128xbf16>, vector<8x128xf32> -> vector<8x128xf32>
    %264 = arith.addf %261, %263 : vector<8x128xf32>
    %265 = vector.extract_strided_slice %25 {offsets = [16, 0], sizes = [8, 128], strides = [1, 1]} : vector<64x128xf32> to vector<8x128xf32>
    %266 = arith.truncf %256 : vector<8x32xf32> to vector<8x32xbf16>
    %cst_80 = arith.constant dense<0.000000e+00> : vector<8x128xf32>
    %267 = tpu.matmul %266, %32, %cst_80 {dimension_numbers = #tpu.dot_dimension_numbers<[1], [0], [0], [1], [0, 0, 1, 1], [], []>} : vector<8x32xbf16>, vector<32x128xbf16>, vector<8x128xf32> -> vector<8x128xf32>
    %268 = arith.addf %265, %267 : vector<8x128xf32>
    %269 = vector.extract_strided_slice %264 {offsets = [0, 0], sizes = [8, 96], strides = [1, 1]} : vector<8x128xf32> to vector<8x96xf32>
    %270 = arith.negf %269 : vector<8x96xf32>
    %271 = math.exp %270 : vector<8x96xf32>
    %cst_81 = arith.constant 1.000000e+00 : f32
    %272 = vector.broadcast %cst_81 : f32 to vector<8x96xf32>
    %273 = arith.addf %272, %271 : vector<8x96xf32>
    %274 = arith.divf %272, %273 : vector<8x96xf32>
    %275 = vector.extract_strided_slice %264 {offsets = [0, 96], sizes = [8, 32], strides = [1, 1]} : vector<8x128xf32> to vector<8x32xf32>
    %276 = math.tanh %275 : vector<8x32xf32>
    %277 = vector.extract_strided_slice %274 {offsets = [0, 32], sizes = [8, 32], strides = [1, 1]} : vector<8x96xf32> to vector<8x32xf32>
    %278 = arith.mulf %277, %237 : vector<8x32xf32>
    %279 = vector.extract_strided_slice %274 {offsets = [0, 0], sizes = [8, 32], strides = [1, 1]} : vector<8x96xf32> to vector<8x32xf32>
    %280 = arith.mulf %279, %276 : vector<8x32xf32>
    %281 = arith.addf %278, %280 : vector<8x32xf32>
    %282 = vector.extract_strided_slice %274 {offsets = [0, 64], sizes = [8, 32], strides = [1, 1]} : vector<8x96xf32> to vector<8x32xf32>
    %283 = math.tanh %281 : vector<8x32xf32>
    %284 = arith.mulf %282, %283 : vector<8x32xf32>
    %285 = vector.extract_strided_slice %268 {offsets = [0, 0], sizes = [8, 96], strides = [1, 1]} : vector<8x128xf32> to vector<8x96xf32>
    %286 = arith.negf %285 : vector<8x96xf32>
    %287 = math.exp %286 : vector<8x96xf32>
    %cst_82 = arith.constant 1.000000e+00 : f32
    %288 = vector.broadcast %cst_82 : f32 to vector<8x96xf32>
    %289 = arith.addf %288, %287 : vector<8x96xf32>
    %290 = arith.divf %288, %289 : vector<8x96xf32>
    %291 = vector.extract_strided_slice %268 {offsets = [0, 96], sizes = [8, 32], strides = [1, 1]} : vector<8x128xf32> to vector<8x32xf32>
    %292 = math.tanh %291 : vector<8x32xf32>
    %293 = vector.extract_strided_slice %290 {offsets = [0, 32], sizes = [8, 32], strides = [1, 1]} : vector<8x96xf32> to vector<8x32xf32>
    %294 = arith.mulf %293, %253 : vector<8x32xf32>
    %295 = vector.extract_strided_slice %290 {offsets = [0, 0], sizes = [8, 32], strides = [1, 1]} : vector<8x96xf32> to vector<8x32xf32>
    %296 = arith.mulf %295, %292 : vector<8x32xf32>
    %297 = arith.addf %294, %296 : vector<8x32xf32>
    %298 = vector.extract_strided_slice %290 {offsets = [0, 64], sizes = [8, 32], strides = [1, 1]} : vector<8x96xf32> to vector<8x32xf32>
    %299 = math.tanh %297 : vector<8x32xf32>
    %300 = arith.mulf %298, %299 : vector<8x32xf32>
    %301 = arith.truncf %284 : vector<8x32xf32> to vector<8x32xbf16>
    %c40_83 = arith.constant 40 : index
    %c0_84 = arith.constant 0 : index
    %302 = vector.load %arg9[%c40_83, %c0_84] : memref<64x32xbf16, #tpu.memory_space<vmem>>, vector<8x32xbf16>
    tpu.vector_store %arg9[%c40_83, %c0_84], %301 {strides = array<i32>} : memref<64x32xbf16, #tpu.memory_space<vmem>>, vector<8x32xbf16>,
    %303 = arith.truncf %300 : vector<8x32xf32> to vector<8x32xbf16>
    %c16_85 = arith.constant 16 : index
    %c0_86 = arith.constant 0 : index
    %304 = vector.load %arg10[%c16_85, %c0_86] : memref<64x32xbf16, #tpu.memory_space<vmem>>, vector<8x32xbf16>
    tpu.vector_store %arg10[%c16_85, %c0_86], %303 {strides = array<i32>} : memref<64x32xbf16, #tpu.memory_space<vmem>>, vector<8x32xbf16>,
    %305 = vector.extract_strided_slice %12 {offsets = [48, 0], sizes = [8, 128], strides = [1, 1]} : vector<64x128xf32> to vector<8x128xf32>
    %306 = arith.truncf %284 : vector<8x32xf32> to vector<8x32xbf16>
    %cst_87 = arith.constant dense<0.000000e+00> : vector<8x128xf32>
    %307 = tpu.matmul %306, %30, %cst_87 {dimension_numbers = #tpu.dot_dimension_numbers<[1], [0], [0], [1], [0, 0, 1, 1], [], []>} : vector<8x32xbf16>, vector<32x128xbf16>, vector<8x128xf32> -> vector<8x128xf32>
    %308 = arith.addf %305, %307 : vector<8x128xf32>
    %309 = vector.extract_strided_slice %25 {offsets = [8, 0], sizes = [8, 128], strides = [1, 1]} : vector<64x128xf32> to vector<8x128xf32>
    %310 = arith.truncf %300 : vector<8x32xf32> to vector<8x32xbf16>
    %cst_88 = arith.constant dense<0.000000e+00> : vector<8x128xf32>
    %311 = tpu.matmul %310, %32, %cst_88 {dimension_numbers = #tpu.dot_dimension_numbers<[1], [0], [0], [1], [0, 0, 1, 1], [], []>} : vector<8x32xbf16>, vector<32x128xbf16>, vector<8x128xf32> -> vector<8x128xf32>
    %312 = arith.addf %309, %311 : vector<8x128xf32>
    %313 = vector.extract_strided_slice %308 {offsets = [0, 0], sizes = [8, 96], strides = [1, 1]} : vector<8x128xf32> to vector<8x96xf32>
    %314 = arith.negf %313 : vector<8x96xf32>
    %315 = math.exp %314 : vector<8x96xf32>
    %cst_89 = arith.constant 1.000000e+00 : f32
    %316 = vector.broadcast %cst_89 : f32 to vector<8x96xf32>
    %317 = arith.addf %316, %315 : vector<8x96xf32>
    %318 = arith.divf %316, %317 : vector<8x96xf32>
    %319 = vector.extract_strided_slice %308 {offsets = [0, 96], sizes = [8, 32], strides = [1, 1]} : vector<8x128xf32> to vector<8x32xf32>
    %320 = math.tanh %319 : vector<8x32xf32>
    %321 = vector.extract_strided_slice %318 {offsets = [0, 32], sizes = [8, 32], strides = [1, 1]} : vector<8x96xf32> to vector<8x32xf32>
    %322 = arith.mulf %321, %281 : vector<8x32xf32>
    %323 = vector.extract_strided_slice %318 {offsets = [0, 0], sizes = [8, 32], strides = [1, 1]} : vector<8x96xf32> to vector<8x32xf32>
    %324 = arith.mulf %323, %320 : vector<8x32xf32>
    %325 = arith.addf %322, %324 : vector<8x32xf32>
    %326 = vector.extract_strided_slice %318 {offsets = [0, 64], sizes = [8, 32], strides = [1, 1]} : vector<8x96xf32> to vector<8x32xf32>
    %327 = math.tanh %325 : vector<8x32xf32>
    %328 = arith.mulf %326, %327 : vector<8x32xf32>
    %329 = vector.extract_strided_slice %312 {offsets = [0, 0], sizes = [8, 96], strides = [1, 1]} : vector<8x128xf32> to vector<8x96xf32>
    %330 = arith.negf %329 : vector<8x96xf32>
    %331 = math.exp %330 : vector<8x96xf32>
    %cst_90 = arith.constant 1.000000e+00 : f32
    %332 = vector.broadcast %cst_90 : f32 to vector<8x96xf32>
    %333 = arith.addf %332, %331 : vector<8x96xf32>
    %334 = arith.divf %332, %333 : vector<8x96xf32>
    %335 = vector.extract_strided_slice %312 {offsets = [0, 96], sizes = [8, 32], strides = [1, 1]} : vector<8x128xf32> to vector<8x32xf32>
    %336 = math.tanh %335 : vector<8x32xf32>
    %337 = vector.extract_strided_slice %334 {offsets = [0, 32], sizes = [8, 32], strides = [1, 1]} : vector<8x96xf32> to vector<8x32xf32>
    %338 = arith.mulf %337, %297 : vector<8x32xf32>
    %339 = vector.extract_strided_slice %334 {offsets = [0, 0], sizes = [8, 32], strides = [1, 1]} : vector<8x96xf32> to vector<8x32xf32>
    %340 = arith.mulf %339, %336 : vector<8x32xf32>
    %341 = arith.addf %338, %340 : vector<8x32xf32>
    %342 = vector.extract_strided_slice %334 {offsets = [0, 64], sizes = [8, 32], strides = [1, 1]} : vector<8x96xf32> to vector<8x32xf32>
    %343 = math.tanh %341 : vector<8x32xf32>
    %344 = arith.mulf %342, %343 : vector<8x32xf32>
    %345 = arith.truncf %328 : vector<8x32xf32> to vector<8x32xbf16>
    %c48_91 = arith.constant 48 : index
    %c0_92 = arith.constant 0 : index
    %346 = vector.load %arg9[%c48_91, %c0_92] : memref<64x32xbf16, #tpu.memory_space<vmem>>, vector<8x32xbf16>
    tpu.vector_store %arg9[%c48_91, %c0_92], %345 {strides = array<i32>} : memref<64x32xbf16, #tpu.memory_space<vmem>>, vector<8x32xbf16>,
    %347 = arith.truncf %344 : vector<8x32xf32> to vector<8x32xbf16>
    %c8_93 = arith.constant 8 : index
    %c0_94 = arith.constant 0 : index
    %348 = vector.load %arg10[%c8_93, %c0_94] : memref<64x32xbf16, #tpu.memory_space<vmem>>, vector<8x32xbf16>
    tpu.vector_store %arg10[%c8_93, %c0_94], %347 {strides = array<i32>} : memref<64x32xbf16, #tpu.memory_space<vmem>>, vector<8x32xbf16>,
    %349 = vector.extract_strided_slice %12 {offsets = [56, 0], sizes = [8, 128], strides = [1, 1]} : vector<64x128xf32> to vector<8x128xf32>
    %350 = arith.truncf %328 : vector<8x32xf32> to vector<8x32xbf16>
    %cst_95 = arith.constant dense<0.000000e+00> : vector<8x128xf32>
    %351 = tpu.matmul %350, %30, %cst_95 {dimension_numbers = #tpu.dot_dimension_numbers<[1], [0], [0], [1], [0, 0, 1, 1], [], []>} : vector<8x32xbf16>, vector<32x128xbf16>, vector<8x128xf32> -> vector<8x128xf32>
    %352 = arith.addf %349, %351 : vector<8x128xf32>
    %353 = vector.extract_strided_slice %25 {offsets = [0, 0], sizes = [8, 128], strides = [1, 1]} : vector<64x128xf32> to vector<8x128xf32>
    %354 = arith.truncf %344 : vector<8x32xf32> to vector<8x32xbf16>
    %cst_96 = arith.constant dense<0.000000e+00> : vector<8x128xf32>
    %355 = tpu.matmul %354, %32, %cst_96 {dimension_numbers = #tpu.dot_dimension_numbers<[1], [0], [0], [1], [0, 0, 1, 1], [], []>} : vector<8x32xbf16>, vector<32x128xbf16>, vector<8x128xf32> -> vector<8x128xf32>
    %356 = arith.addf %353, %355 : vector<8x128xf32>
    %357 = vector.extract_strided_slice %352 {offsets = [0, 0], sizes = [8, 96], strides = [1, 1]} : vector<8x128xf32> to vector<8x96xf32>
    %358 = arith.negf %357 : vector<8x96xf32>
    %359 = math.exp %358 : vector<8x96xf32>
    %cst_97 = arith.constant 1.000000e+00 : f32
    %360 = vector.broadcast %cst_97 : f32 to vector<8x96xf32>
    %361 = arith.addf %360, %359 : vector<8x96xf32>
    %362 = arith.divf %360, %361 : vector<8x96xf32>
    %363 = vector.extract_strided_slice %352 {offsets = [0, 96], sizes = [8, 32], strides = [1, 1]} : vector<8x128xf32> to vector<8x32xf32>
    %364 = math.tanh %363 : vector<8x32xf32>
    %365 = vector.extract_strided_slice %362 {offsets = [0, 32], sizes = [8, 32], strides = [1, 1]} : vector<8x96xf32> to vector<8x32xf32>
    %366 = arith.mulf %365, %325 : vector<8x32xf32>
    %367 = vector.extract_strided_slice %362 {offsets = [0, 0], sizes = [8, 32], strides = [1, 1]} : vector<8x96xf32> to vector<8x32xf32>
    %368 = arith.mulf %367, %364 : vector<8x32xf32>
    %369 = arith.addf %366, %368 : vector<8x32xf32>
    %370 = vector.extract_strided_slice %362 {offsets = [0, 64], sizes = [8, 32], strides = [1, 1]} : vector<8x96xf32> to vector<8x32xf32>
    %371 = math.tanh %369 : vector<8x32xf32>
    %372 = arith.mulf %370, %371 : vector<8x32xf32>
    %373 = vector.extract_strided_slice %356 {offsets = [0, 0], sizes = [8, 96], strides = [1, 1]} : vector<8x128xf32> to vector<8x96xf32>
    %374 = arith.negf %373 : vector<8x96xf32>
    %375 = math.exp %374 : vector<8x96xf32>
    %cst_98 = arith.constant 1.000000e+00 : f32
    %376 = vector.broadcast %cst_98 : f32 to vector<8x96xf32>
    %377 = arith.addf %376, %375 : vector<8x96xf32>
    %378 = arith.divf %376, %377 : vector<8x96xf32>
    %379 = vector.extract_strided_slice %356 {offsets = [0, 96], sizes = [8, 32], strides = [1, 1]} : vector<8x128xf32> to vector<8x32xf32>
    %380 = math.tanh %379 : vector<8x32xf32>
    %381 = vector.extract_strided_slice %378 {offsets = [0, 32], sizes = [8, 32], strides = [1, 1]} : vector<8x96xf32> to vector<8x32xf32>
    %382 = arith.mulf %381, %341 : vector<8x32xf32>
    %383 = vector.extract_strided_slice %378 {offsets = [0, 0], sizes = [8, 32], strides = [1, 1]} : vector<8x96xf32> to vector<8x32xf32>
    %384 = arith.mulf %383, %380 : vector<8x32xf32>
    %385 = arith.addf %382, %384 : vector<8x32xf32>
    %386 = vector.extract_strided_slice %378 {offsets = [0, 64], sizes = [8, 32], strides = [1, 1]} : vector<8x96xf32> to vector<8x32xf32>
    %387 = math.tanh %385 : vector<8x32xf32>
    %388 = arith.mulf %386, %387 : vector<8x32xf32>
    %389 = arith.truncf %372 : vector<8x32xf32> to vector<8x32xbf16>
    %c56_99 = arith.constant 56 : index
    %c0_100 = arith.constant 0 : index
    %390 = vector.load %arg9[%c56_99, %c0_100] : memref<64x32xbf16, #tpu.memory_space<vmem>>, vector<8x32xbf16>
    tpu.vector_store %arg9[%c56_99, %c0_100], %389 {strides = array<i32>} : memref<64x32xbf16, #tpu.memory_space<vmem>>, vector<8x32xbf16>,
    %391 = arith.truncf %388 : vector<8x32xf32> to vector<8x32xbf16>
    %c0_101 = arith.constant 0 : index
    %c0_102 = arith.constant 0 : index
    %392 = vector.load %arg10[%c0_101, %c0_102] : memref<64x32xbf16, #tpu.memory_space<vmem>>, vector<8x32xbf16>
    tpu.vector_store %arg10[%c0_101, %c0_102], %391 {strides = array<i32>} : memref<64x32xbf16, #tpu.memory_space<vmem>>, vector<8x32xbf16>,
    %c0_103 = arith.constant 0 : index
    %c0_104 = arith.constant 0 : index
    %c0_105 = arith.constant 0 : index
    %393 = vector.load %arg11[%c0_103, %c0_104, %c0_105] : memref<2x8x32xf32, #tpu.memory_space<vmem>>, vector<1x8x32xf32>
    %394 = vector.shape_cast %393 : vector<1x8x32xf32> to vector<8x32xf32>
    %395 = vector.shape_cast %372 : vector<8x32xf32> to vector<1x8x32xf32>
    tpu.vector_store %arg11[%c0_103, %c0_104, %c0_105], %395 {strides = array<i32>} : memref<2x8x32xf32, #tpu.memory_space<vmem>>, vector<1x8x32xf32>,
    %c0_106 = arith.constant 0 : index
    %c0_107 = arith.constant 0 : index
    %c0_108 = arith.constant 0 : index
    %396 = vector.load %arg12[%c0_106, %c0_107, %c0_108] : memref<2x8x32xf32, #tpu.memory_space<vmem>>, vector<1x8x32xf32>
    %397 = vector.shape_cast %396 : vector<1x8x32xf32> to vector<8x32xf32>
    %398 = vector.shape_cast %369 : vector<8x32xf32> to vector<1x8x32xf32>
    tpu.vector_store %arg12[%c0_106, %c0_107, %c0_108], %398 {strides = array<i32>} : memref<2x8x32xf32, #tpu.memory_space<vmem>>, vector<1x8x32xf32>,
    %c1_109 = arith.constant 1 : index
    %c0_110 = arith.constant 0 : index
    %c0_111 = arith.constant 0 : index
    %399 = vector.load %arg11[%c1_109, %c0_110, %c0_111] : memref<2x8x32xf32, #tpu.memory_space<vmem>>, vector<1x8x32xf32>
    %400 = vector.shape_cast %399 : vector<1x8x32xf32> to vector<8x32xf32>
    %401 = vector.shape_cast %388 : vector<8x32xf32> to vector<1x8x32xf32>
    tpu.vector_store %arg11[%c1_109, %c0_110, %c0_111], %401 {strides = array<i32>} : memref<2x8x32xf32, #tpu.memory_space<vmem>>, vector<1x8x32xf32>,
    %c1_112 = arith.constant 1 : index
    %c0_113 = arith.constant 0 : index
    %c0_114 = arith.constant 0 : index
    %402 = vector.load %arg12[%c1_112, %c0_113, %c0_114] : memref<2x8x32xf32, #tpu.memory_space<vmem>>, vector<1x8x32xf32>
    %403 = vector.shape_cast %402 : vector<1x8x32xf32> to vector<8x32xf32>
    %404 = vector.shape_cast %385 : vector<8x32xf32> to vector<1x8x32xf32>
    tpu.vector_store %arg12[%c1_112, %c0_113, %c0_114], %404 {strides = array<i32>} : memref<2x8x32xf32, #tpu.memory_space<vmem>>, vector<1x8x32xf32>,
    return
  }
  func.func @transform_0(%arg0: i32) -> (i32, i32) {
    %c0_i32 = arith.constant 0 : i32
    %c0_i32_0 = arith.constant 0 : i32
    return %arg0, %c0_i32 : i32, i32
  }
  func.func @transform_1(%arg0: i32) -> (i32, i32) {
    %c0_i32 = arith.constant 0 : i32
    %c0_i32_0 = arith.constant 0 : i32
    return %arg0, %c0_i32 : i32, i32
  }
  func.func @transform_2(%arg0: i32) -> (i32, i32) {
    %c0_i32 = arith.constant 0 : i32
    %0 = arith.subi %c0_i32, %arg0 : i32
    %c0_i32_0 = arith.constant 0 : i32
    %c0_i32_1 = arith.constant 0 : i32
    return %0, %c0_i32_0 : i32, i32
  }
  func.func @transform_3(%arg0: i32) -> (i32, i32) {
    %c0_i32 = arith.constant 0 : i32
    %0 = arith.subi %c0_i32, %arg0 : i32
    %c0_i32_0 = arith.constant 0 : i32
    %c0_i32_1 = arith.constant 0 : i32
    return %0, %c0_i32_0 : i32, i32
  }
  func.func @transform_4(%arg0: i32) -> (i32, i32, i32) {
    %c0_i32 = arith.constant 0 : i32
    %c0_i32_0 = arith.constant 0 : i32
    %c0_i32_1 = arith.constant 0 : i32
    %c0_i32_2 = arith.constant 0 : i32
    return %c0_i32, %c0_i32_0, %c0_i32_1 : i32, i32, i32
  }
  func.func @transform_5(%arg0: i32) -> (i32, i32, i32) {
    %c0_i32 = arith.constant 0 : i32
    %c0_i32_0 = arith.constant 0 : i32
    %c0_i32_1 = arith.constant 0 : i32
    %c0_i32_2 = arith.constant 0 : i32
    return %c0_i32, %c0_i32_0, %c0_i32_1 : i32, i32, i32
  }
  func.func @transform_6(%arg0: i32) -> (i32, i32, i32) {
    %c0_i32 = arith.constant 0 : i32
    %c0_i32_0 = arith.constant 0 : i32
    %c0_i32_1 = arith.constant 0 : i32
    %c0_i32_2 = arith.constant 0 : i32
    return %c0_i32, %c0_i32_0, %c0_i32_1 : i32, i32, i32
  }
  func.func @transform_7(%arg0: i32) -> (i32, i32, i32) {
    %c0_i32 = arith.constant 0 : i32
    %c0_i32_0 = arith.constant 0 : i32
    %c0_i32_1 = arith.constant 0 : i32
    %c0_i32_2 = arith.constant 0 : i32
    return %c0_i32, %c0_i32_0, %c0_i32_1 : i32, i32, i32
  }
  func.func @transform_8(%arg0: i32) -> (i32, i32) {
    %c0_i32 = arith.constant 0 : i32
    %c0_i32_0 = arith.constant 0 : i32
    return %arg0, %c0_i32 : i32, i32
  }
  func.func @transform_9(%arg0: i32) -> (i32, i32) {
    %c0_i32 = arith.constant 0 : i32
    %0 = arith.subi %c0_i32, %arg0 : i32
    %c0_i32_0 = arith.constant 0 : i32
    %c0_i32_1 = arith.constant 0 : i32
    return %0, %c0_i32_0 : i32, i32
  }
}

module attributes {stable_mosaic.version = 11 : i64} {
  func.func @_fc_kernel(%arg0: i32, %arg1: memref<64x32xbf16, #tpu.memory_space<vmem>>, %arg2: memref<64x32xbf16, #tpu.memory_space<vmem>>, %arg3: memref<32x128xbf16, #tpu.memory_space<vmem>>, %arg4: memref<32x128xbf16, #tpu.memory_space<vmem>>, %arg5: memref<1x128xf32, #tpu.memory_space<vmem>>, %arg6: memref<64x128xf32, #tpu.memory_space<vmem>>) attributes {dimension_semantics = [#tpu.dimension_semantics<parallel>], iteration_bounds = array<i64: 1>, scalar_prefetch = 0 : i64, scratch_operands = 0 : i64, tpu.core_type = #tpu.core_type<tc>, window_params = [{transform_indices = @transform_0, window_bounds = array<i64: 64, 32>}, {transform_indices = @transform_1, window_bounds = array<i64: 64, 32>}, {pipeline_mode = #tpu.pipeline_mode<synchronous>, transform_indices = @transform_2, window_bounds = array<i64: 32, 128>}, {pipeline_mode = #tpu.pipeline_mode<synchronous>, transform_indices = @transform_3, window_bounds = array<i64: 32, 128>}, {pipeline_mode = #tpu.pipeline_mode<synchronous>, transform_indices = @transform_4, window_bounds = array<i64: 1, 128>}, {transform_indices = @transform_5, window_bounds = array<i64: 64, 128>}]} {
    %c0 = arith.constant 0 : index
    %c0_0 = arith.constant 0 : index
    %0 = vector.load %arg1[%c0, %c0_0] : memref<64x32xbf16, #tpu.memory_space<vmem>>, vector<64x32xbf16>
    %c0_1 = arith.constant 0 : index
    %c0_2 = arith.constant 0 : index
    %1 = vector.load %arg3[%c0_1, %c0_2] : memref<32x128xbf16, #tpu.memory_space<vmem>>, vector<32x128xbf16>
    %cst = arith.constant dense<0.000000e+00> : vector<64x128xf32>
    %2 = tpu.matmul %0, %1, %cst {dimension_numbers = #tpu.dot_dimension_numbers<[1], [0], [0], [1], [0, 0, 1, 1], [], []>} : vector<64x32xbf16>, vector<32x128xbf16>, vector<64x128xf32> -> vector<64x128xf32>
    %c0_3 = arith.constant 0 : index
    %c0_4 = arith.constant 0 : index
    %3 = vector.load %arg2[%c0_3, %c0_4] : memref<64x32xbf16, #tpu.memory_space<vmem>>, vector<64x32xbf16>
    %c0_5 = arith.constant 0 : index
    %c0_6 = arith.constant 0 : index
    %4 = vector.load %arg4[%c0_5, %c0_6] : memref<32x128xbf16, #tpu.memory_space<vmem>>, vector<32x128xbf16>
    %cst_7 = arith.constant dense<0.000000e+00> : vector<64x128xf32>
    %5 = tpu.matmul %3, %4, %cst_7 {dimension_numbers = #tpu.dot_dimension_numbers<[1], [0], [0], [1], [0, 0, 1, 1], [], []>} : vector<64x32xbf16>, vector<32x128xbf16>, vector<64x128xf32> -> vector<64x128xf32>
    %6 = arith.addf %2, %5 : vector<64x128xf32>
    %c0_8 = arith.constant 0 : index
    %c0_9 = arith.constant 0 : index
    %7 = vector.load %arg5[%c0_8, %c0_9] : memref<1x128xf32, #tpu.memory_space<vmem>>, vector<1x128xf32>
    %8 = vector.broadcast %7 : vector<1x128xf32> to vector<64x128xf32>
    %9 = arith.addf %6, %8 : vector<64x128xf32>
    %c0_10 = arith.constant 0 : index
    %c0_11 = arith.constant 0 : index
    %10 = vector.load %arg6[%c0_10, %c0_11] : memref<64x128xf32, #tpu.memory_space<vmem>>, vector<64x128xf32>
    tpu.vector_store %arg6[%c0_10, %c0_11], %9 {strides = array<i32>} : memref<64x128xf32, #tpu.memory_space<vmem>>, vector<64x128xf32>,
    return
  }
  func.func @transform_0(%arg0: i32) -> (i32, i32) {
    %c0_i32 = arith.constant 0 : i32
    %c0_i32_0 = arith.constant 0 : i32
    return %arg0, %c0_i32 : i32, i32
  }
  func.func @transform_1(%arg0: i32) -> (i32, i32) {
    %c0_i32 = arith.constant 0 : i32
    %c0_i32_0 = arith.constant 0 : i32
    return %arg0, %c0_i32 : i32, i32
  }
  func.func @transform_2(%arg0: i32) -> (i32, i32) {
    %c0_i32 = arith.constant 0 : i32
    %c0_i32_0 = arith.constant 0 : i32
    %c0_i32_1 = arith.constant 0 : i32
    return %c0_i32, %c0_i32_0 : i32, i32
  }
  func.func @transform_3(%arg0: i32) -> (i32, i32) {
    %c0_i32 = arith.constant 0 : i32
    %c0_i32_0 = arith.constant 0 : i32
    %c0_i32_1 = arith.constant 0 : i32
    return %c0_i32, %c0_i32_0 : i32, i32
  }
  func.func @transform_4(%arg0: i32) -> (i32, i32) {
    %c0_i32 = arith.constant 0 : i32
    %c0_i32_0 = arith.constant 0 : i32
    %c0_i32_1 = arith.constant 0 : i32
    return %c0_i32, %c0_i32_0 : i32, i32
  }
  func.func @transform_5(%arg0: i32) -> (i32, i32) {
    %c0_i32 = arith.constant 0 : i32
    %c0_i32_0 = arith.constant 0 : i32
    return %arg0, %c0_i32 : i32, i32
  }
}

</mosaic_0001>

<llo_original>
// kernel: lstm_classifier_forward.5
$region0: #{lstm_classifier_forward.5}
  #allocation0 [shape = 'u32[]', space=smem, size = 0x4, offset = 0x4, fixed_abs, tag = 'smem constant byte address 0x4 - core index']
  #allocation1 [shape = 'u32[144,128]{1,0:T(1,128)}', space=vmem, size = 0x12000, scoped, tag = 'internal scratch']
  %s0 = inlined_call_operand.vmem [shape: bf16[64,32], index: 0, kind: input, shape index: {}]
  %s1 = inlined_call_operand.vmem [shape: bf16[64,32], index: 1, kind: input, shape index: {}]
  %s2 = inlined_call_operand.vmem [shape: bf16[32,128], index: 2, kind: input, shape index: {}]
  %s3 = inlined_call_operand.vmem [shape: bf16[32,128], index: 3, kind: input, shape index: {}]
  %s4 = inlined_call_operand.vmem [shape: f32[1,128], index: 4, kind: input, shape index: {}]
  %s5 = inlined_call_operand.vmem [shape: f32[64,128], index: 5, kind: output, shape index: {}]
  %s6 = sld [smem:[#allocation0]]
  $region30: #{lstm_classifier_forward.5} parent=0
    _
  %s8 = ssub.s32 1, %s6
  %s9 = scalar_select 0, %s8, %s6
  // Predicated region
  $region2: #{lstm_classifier_forward.5} parent=0 // pred_check
    _
  $region3: #{lstm_classifier_forward.5} parent=0 // pred_check_branch
    %11 = sbr.rel (0) target = $region5
  $region4: #{lstm_classifier_forward.5} parent=0 // pred_region
    _
  $region5: #{lstm_classifier_forward.5} parent=0 // pred_fallthru
    _
  // Predicated region
  $region6: #{lstm_classifier_forward.5} parent=0 // pred_check
    _
  $region7: #{lstm_classifier_forward.5} parent=0 // pred_check_branch
    %13 = sbr.rel (0) target = $region9
  $region8: #{lstm_classifier_forward.5} parent=0 // pred_region
    _
  $region9: #{lstm_classifier_forward.5} parent=0 // pred_fallthru
    _
  // Predicated region
  $region10: #{lstm_classifier_forward.5} parent=0 // pred_check
    _
  $region11: #{lstm_classifier_forward.5} parent=0 // pred_check_branch
    %15 = sbr.rel (0) target = $region13
  $region12: #{lstm_classifier_forward.5} parent=0 // pred_region
    _
  $region13: #{lstm_classifier_forward.5} parent=0 // pred_fallthru
    _
  // Predicated region
  $region14: #{lstm_classifier_forward.5} parent=0 // pred_check
    _
  $region15: #{lstm_classifier_forward.5} parent=0 // pred_check_branch
    %17 = sbr.rel (0) target = $region17
  $region16: #{lstm_classifier_forward.5} parent=0 // pred_region
    _
  $region17: #{lstm_classifier_forward.5} parent=0 // pred_fallthru
    _
  // Predicated region
  $region18: #{lstm_classifier_forward.5} parent=0 // pred_check
    _
  $region19: #{lstm_classifier_forward.5} parent=0 // pred_check_branch
    %19 = sbr.rel (0) target = $region21
  $region20: #{lstm_classifier_forward.5} parent=0 // pred_region
    _
  $region21: #{lstm_classifier_forward.5} parent=0 // pred_fallthru
    _
  %v21 = vld [vmem:[%s0] sm:$0xf]
  %v22 = vld [vmem:[%s0 + $0x4] sm:$0xf]
  %v23 = vld [vmem:[%s0 + $0x8] sm:$0xf]
  %v24 = vld [vmem:[%s0 + $0xc] sm:$0xf]
  %v25 = vld [vmem:[%s0 + $0x10] sm:$0xf]
  %v26 = vld [vmem:[%s0 + $0x14] sm:$0xf]
  %v27 = vld [vmem:[%s0 + $0x18] sm:$0xf]
  %v28 = vld [vmem:[%s0 + $0x1c] sm:$0xf]
  %v29 = vld [vmem:[%s2] sm:$0xf]
  %v30 = vld [vmem:[%s2 + $0x4] sm:$0xf]
  %v31 = vld [vmem:[%s2 + $0x8] sm:$0xf]
  %v32 = vld [vmem:[%s2 + $0xc] sm:$0xf]
  %v33 = vld [vmem:[%s1] sm:$0xf]
  %v34 = vld [vmem:[%s1 + $0x4] sm:$0xf]
  %v35 = vld [vmem:[%s1 + $0x8] sm:$0xf]
  %v36 = vld [vmem:[%s1 + $0xc] sm:$0xf]
  %v37 = vld [vmem:[%s1 + $0x10] sm:$0xf]
  %v38 = vld [vmem:[%s1 + $0x14] sm:$0xf]
  %v39 = vld [vmem:[%s1 + $0x18] sm:$0xf]
  %v40 = vld [vmem:[%s1 + $0x1c] sm:$0xf]
  %v41 = vld [vmem:[%s3] sm:$0xf]
  %v42 = vld [vmem:[%s3 + $0x4] sm:$0xf]
  %v43 = vld [vmem:[%s3 + $0x8] sm:$0xf]
  %v44 = vld [vmem:[%s3 + $0xc] sm:$0xf]
  %v53 = vunpack.c.l.b16 %v33
  %v54 = vunpack.c.l.b16 %v34
  %v55 = vunpack.c.l.b16 %v35
  %v56 = vunpack.c.l.b16 %v36
  %v57 = vunpack.c.l.b16 %v37
  %v58 = vunpack.c.l.b16 %v38
  %v59 = vunpack.c.l.b16 %v39
  %v60 = vunpack.c.l.b16 %v40
  %v61 = vpack.c.b16 %v54, %v53
  %v62 = vpack.c.b16 %v56, %v55
  %v63 = vpack.c.b16 %v58, %v57
  %v64 = vpack.c.b16 %v60, %v59
  %v69 = vunpack.c.l.b16 %v41
  %v70 = vunpack.c.l.b16 %v42
  %v71 = vunpack.c.l.b16 %v43
  %v72 = vunpack.c.l.b16 %v44
  %v73 = vpack.c.b16 %v70, %v69
  %v74 = vpack.c.b16 %v72, %v71
  %vm77 = vcmask 261120
  %v79 = vsel %vm77, %v61, 0
  %v82 = vsel %vm77, %v62, 0
  %v85 = vsel %vm77, %v63, 0
  %v88 = vsel %vm77, %v64, 0
  %90 = vmatprep.subr.bf16.mxu0 0
  %91 = vmatpush1.bf16.msra.mxu0 %v73
  %92 = vmatprep.subr.bf16.mxu0 0
  %93 = vmatpush1.bf16.msra.mxu0 %v74
  %94 = vmatprep.subr.bf16.mxu0 0
  %95 = vmatpush1.bf16.msra.mxu0 0
  %96 = vmatprep.subr.bf16.mxu0 0
  %97 = vmatpush1.bf16.msra.mxu0 0
  %98 = vmatprep.subr.bf16.mxu0 0
  %99 = vmatpush1.bf16.msra.mxu0 0
  %100 = vmatprep.subr.bf16.mxu0 0
  %101 = vmatpush1.bf16.msra.mxu0 0
  %102 = vmatprep.subr.bf16.mxu0 0
  %103 = vmatpush1.bf16.msra.mxu0 0
  %104 = vmatprep.subr.bf16.mxu0 0
  %105 = vmatpush1.bf16.msra.mxu0 0
  %106 = vmatprep.subr.bf16.mxu0 0
  %107 = vmatpush1.bf16.msra.mxu0 0
  %108 = vmatprep.subr.bf16.mxu0 0
  %109 = vmatpush1.bf16.msra.mxu0 0
  %110 = vmatprep.subr.bf16.mxu0 0
  %111 = vmatpush1.bf16.msra.mxu0 0
  %112 = vmatprep.subr.bf16.mxu0 0
  %113 = vmatpush1.bf16.msra.mxu0 0
  %114 = vmatprep.subr.bf16.mxu0 0
  %115 = vmatpush1.bf16.msra.mxu0 0
  %116 = vmatprep.subr.bf16.mxu0 0
  %117 = vmatpush1.bf16.msra.mxu0 0
  %118 = vmatprep.subr.bf16.mxu0 0
  %119 = vmatpush1.bf16.msra.mxu0 0
  %120 = vmatprep.subr.bf16.mxu0 0
  %121 = vmatpush1.bf16.msra.mxu0 0
  %122 = vmatprep.mubr.bf16.mxu0 0
  %123 = vmatmul.mubr.bf16.gmra.mrb[0].mxu0 %v79
  %v124 = vpop.f32.mrb[0].mxu0
  %v125 = vadd.f32 0.0, %v124
  %v126 = vpop.f32.mrb[0].mxu0
  %v127 = vpop.f32.mrb[0].mxu0
  %v128 = vadd.f32 0.0, %v127
  %v129 = vpop.f32.mrb[0].mxu0
  %130 = vmatprep.mubr.bf16.mxu0 0
  %131 = vmatmul.mubr.bf16.gmra.mrb[0].mxu0 %v82
  %v132 = vpop.f32.mrb[0].mxu0
  %v133 = vadd.f32 0.0, %v132
  %v134 = vpop.f32.mrb[0].mxu0
  %v135 = vpop.f32.mrb[0].mxu0
  %v136 = vadd.f32 0.0, %v135
  %v137 = vpop.f32.mrb[0].mxu0
  %138 = vmatprep.mubr.bf16.mxu0 0
  %139 = vmatmul.mubr.bf16.gmra.mrb[0].mxu0 %v85
  %v140 = vpop.f32.mrb[0].mxu0
  %v141 = vadd.f32 0.0, %v140
  %v142 = vpop.f32.mrb[0].mxu0
  %v143 = vpop.f32.mrb[0].mxu0
  %v144 = vadd.f32 0.0, %v143
  %v145 = vpop.f32.mrb[0].mxu0
  %146 = vmatprep.mubr.bf16.mxu0 0
  %147 = vmatmul.mubr.bf16.gmra.mrb[0].mxu0 %v88
  %v148 = vpop.f32.mrb[0].mxu0
  %v149 = vadd.f32 0.0, %v148
  %v150 = vpop.f32.mrb[0].mxu0
  %v151 = vpop.f32.mrb[0].mxu0
  %v152 = vadd.f32 0.0, %v151
  %v153 = vpop.f32.mrb[0].mxu0
  %154 = vdwg.mxu0
  %v163 = vunpack.c.l.b16 %v21
  %v164 = vunpack.c.l.b16 %v22
  %v165 = vunpack.c.l.b16 %v23
  %v166 = vunpack.c.l.b16 %v24
  %v167 = vunpack.c.l.b16 %v25
  %v168 = vunpack.c.l.b16 %v26
  %v169 = vunpack.c.l.b16 %v27
  %v170 = vunpack.c.l.b16 %v28
  %v171 = vpack.c.b16 %v164, %v163
  %v172 = vpack.c.b16 %v166, %v165
  %v173 = vpack.c.b16 %v168, %v167
  %v174 = vpack.c.b16 %v170, %v169
  %v179 = vunpack.c.l.b16 %v29
  %v180 = vunpack.c.l.b16 %v30
  %v181 = vunpack.c.l.b16 %v31
  %v182 = vunpack.c.l.b16 %v32
  %v183 = vpack.c.b16 %v180, %v179
  %v184 = vpack.c.b16 %v182, %v181
  %v188 = vsel %vm77, %v171, 0
  %v191 = vsel %vm77, %v172, 0
  %v194 = vsel %vm77, %v173, 0
  %v197 = vsel %vm77, %v174, 0
  %199 = vmatprep.subr.bf16.mxu0 0
  %200 = vmatpush1.bf16.msra.mxu0 %v183
  %201 = vmatprep.subr.bf16.mxu0 0
  %202 = vmatpush1.bf16.msra.mxu0 %v184
  %203 = vmatprep.subr.bf16.mxu0 0
  %204 = vmatpush1.bf16.msra.mxu0 0
  %205 = vmatprep.subr.bf16.mxu0 0
  %206 = vmatpush1.bf16.msra.mxu0 0
  %207 = vmatprep.subr.bf16.mxu0 0
  %208 = vmatpush1.bf16.msra.mxu0 0
  %209 = vmatprep.subr.bf16.mxu0 0
  %210 = vmatpush1.bf16.msra.mxu0 0
  %211 = vmatprep.subr.bf16.mxu0 0
  %212 = vmatpush1.bf16.msra.mxu0 0
  %213 = vmatprep.subr.bf16.mxu0 0
  %214 = vmatpush1.bf16.msra.mxu0 0
  %215 = vmatprep.subr.bf16.mxu0 0
  %216 = vmatpush1.bf16.msra.mxu0 0
  %217 = vmatprep.subr.bf16.mxu0 0
  %218 = vmatpush1.bf16.msra.mxu0 0
  %219 = vmatprep.subr.bf16.mxu0 0
  %220 = vmatpush1.bf16.msra.mxu0 0
  %221 = vmatprep.subr.bf16.mxu0 0
  %222 = vmatpush1.bf16.msra.mxu0 0
  %223 = vmatprep.subr.bf16.mxu0 0
  %224 = vmatpush1.bf16.msra.mxu0 0
  %225 = vmatprep.subr.bf16.mxu0 0
  %226 = vmatpush1.bf16.msra.mxu0 0
  %227 = vmatprep.subr.bf16.mxu0 0
  %228 = vmatpush1.bf16.msra.mxu0 0
  %229 = vmatprep.subr.bf16.mxu0 0
  %230 = vmatpush1.bf16.msra.mxu0 0
  %231 = vmatprep.mubr.bf16.mxu0 0
  %232 = vmatmul.mubr.bf16.gmra.mrb[0].mxu0 %v188
  %v233 = vpop.f32.mrb[0].mxu0
  %v234 = vadd.f32 %v125, %v233
  %v235 = vpop.f32.mrb[0].mxu0
  %v236 = vpop.f32.mrb[0].mxu0
  %v237 = vadd.f32 %v128, %v236
  %v238 = vpop.f32.mrb[0].mxu0
  %239 = vmatprep.mubr.bf16.mxu0 0
  %240 = vmatmul.mubr.bf16.gmra.mrb[0].mxu0 %v191
  %v241 = vpop.f32.mrb[0].mxu0
  %v242 = vadd.f32 %v133, %v241
  %v243 = vpop.f32.mrb[0].mxu0
  %v244 = vpop.f32.mrb[0].mxu0
  %v245 = vadd.f32 %v136, %v244
  %v246 = vpop.f32.mrb[0].mxu0
  %247 = vmatprep.mubr.bf16.mxu0 0
  %248 = vmatmul.mubr.bf16.gmra.mrb[0].mxu0 %v194
  %v249 = vpop.f32.mrb[0].mxu0
  %v250 = vadd.f32 %v141, %v249
  %v251 = vpop.f32.mrb[0].mxu0
  %v252 = vpop.f32.mrb[0].mxu0
  %v253 = vadd.f32 %v144, %v252
  %v254 = vpop.f32.mrb[0].mxu0
  %255 = vmatprep.mubr.bf16.mxu0 0
  %256 = vmatmul.mubr.bf16.gmra.mrb[0].mxu0 %v197
  %v257 = vpop.f32.mrb[0].mxu0
  %v258 = vadd.f32 %v149, %v257
  %v259 = vpop.f32.mrb[0].mxu0
  %v260 = vpop.f32.mrb[0].mxu0
  %v261 = vadd.f32 %v152, %v260
  %v262 = vpop.f32.mrb[0].mxu0
  %263 = vdwg.mxu0
  %v264 = vld [vmem:[%s4] sm:$0x1]
  %v266 = vlaneseq
  %v267 = vshrl.u32 %v266, 7
  %v268 = vsub.s32 0, %v267
  %v269 = vrot.slane %v264, %v268
  %v271 = vadd.f32 %v234, %v269
  %v272 = vadd.f32 %v237, %v269
  %v273 = vadd.f32 %v242, %v269
  %v274 = vadd.f32 %v245, %v269
  %v275 = vadd.f32 %v250, %v269
  %v276 = vadd.f32 %v253, %v269
  %v277 = vadd.f32 %v258, %v269
  %v278 = vadd.f32 %v261, %v269
  %279 = vst [vmem:[%s5] sm:$0xff] %v271
  %280 = vst [vmem:[%s5 + $0x8] sm:$0xff] %v272
  %281 = vst [vmem:[%s5 + $0x10] sm:$0xff] %v273
  %282 = vst [vmem:[%s5 + $0x18] sm:$0xff] %v274
  %283 = vst [vmem:[%s5 + $0x20] sm:$0xff] %v275
  %284 = vst [vmem:[%s5 + $0x28] sm:$0xff] %v276
  %285 = vst [vmem:[%s5 + $0x30] sm:$0xff] %v277
  %286 = vst [vmem:[%s5 + $0x38] sm:$0xff] %v278
  // Predicated region
  $region22: #{lstm_classifier_forward.5} parent=0 // pred_check
    _
  $region23: #{lstm_classifier_forward.5} parent=0 // pred_check_branch
    %288 = sbr.rel (0) target = $region25
  $region24: #{lstm_classifier_forward.5} parent=0 // pred_region
    _
  $region25: #{lstm_classifier_forward.5} parent=0 // pred_fallthru
    _
  // Predicated region
  $region26: #{lstm_classifier_forward.5} parent=0 // pred_check
    _
  $region27: #{lstm_classifier_forward.5} parent=0 // pred_check_branch
    %290 = sbr.rel (0) target = $region29
  $region28: #{lstm_classifier_forward.5} parent=0 // pred_region
    _
  $region29: #{lstm_classifier_forward.5} parent=0 // pred_fallthru
    _

// kernel: lstm_classifier_forward.3
$region0: #{lstm_classifier_forward.3}
  #allocation0 [shape = 'u32[]', space=smem, size = 0x4, offset = 0x4, fixed_abs, tag = 'smem constant byte address 0x4 - core index']
  #allocation1 [shape = 'u32[144,128]{1,0:T(1,128)}', space=vmem, size = 0x12000, scoped, tag = 'internal scratch']
  #allocation2 [shape = 'f32[2,8,32]{2,1,0:T(8,128)}', space=vmem, size = 0x2000, scoped, tag = 'scratch operand']
  #allocation3 [shape = 'f32[2,8,32]{2,1,0:T(8,128)}', space=vmem, size = 0x2000, scoped, tag = 'scratch operand']
  %s0 = inlined_call_operand.vmem [shape: bf16[64,16], index: 0, kind: input, shape index: {}, may-alias: {0,1}]
  %s1 = inlined_call_operand.vmem [shape: bf16[64,16], index: 1, kind: input, shape index: {}, may-alias: {0,1}]
  %s2 = inlined_call_operand.vmem [shape: bf16[2,16,128], index: 2, kind: input, shape index: {}]
  %s3 = inlined_call_operand.vmem [shape: bf16[2,32,128], index: 3, kind: input, shape index: {}]
  %s4 = inlined_call_operand.vmem [shape: f32[2,1,128], index: 4, kind: input, shape index: {}]
  %s5 = inlined_call_operand.vmem [shape: bf16[64,32], index: 5, kind: output, shape index: {0}]
  %s6 = inlined_call_operand.vmem [shape: bf16[64,32], index: 6, kind: output, shape index: {1}]
  %7 = xla_tuple %s5, %s6
  %s8 = sld [smem:[#allocation0]]
  $region42: #{lstm_classifier_forward.3} parent=0
    _
  %s10 = ssub.s32 1, %s8
  %s11 = scalar_select 0, %s10, %s8
  // Predicated region
  $region2: #{lstm_classifier_forward.3} parent=0 // pred_check
    _
  $region3: #{lstm_classifier_forward.3} parent=0 // pred_check_branch
    %13 = sbr.rel (0) target = $region5
  $region4: #{lstm_classifier_forward.3} parent=0 // pred_region
    _
  $region5: #{lstm_classifier_forward.3} parent=0 // pred_fallthru
    _
  // Predicated region
  $region6: #{lstm_classifier_forward.3} parent=0 // pred_check
    _
  $region7: #{lstm_classifier_forward.3} parent=0 // pred_check_branch
    %15 = sbr.rel (0) target = $region9
  $region8: #{lstm_classifier_forward.3} parent=0 // pred_region
    %s16 = ssub.s32 0, 0
    %s17 = smul.u32 8, %s16
    %p18 = scmp.lt.s32.totalorder %s17, 7
    %s19 = scalar_select %p18, %s17, 7
    %s20 = smul.addr %s19, 4
    %s21 = scalar_lea.vmem %s1, %s20
    %s22 = ssub.s32 0, 0
    %s23 = smul.u32 8, %s22
  $region9: #{lstm_classifier_forward.3} parent=0 // pred_fallthru
    _
  // Predicated region
  $region10: #{lstm_classifier_forward.3} parent=0 // pred_check
    _
  $region11: #{lstm_classifier_forward.3} parent=0 // pred_check_branch
    %25 = sbr.rel (0) target = $region13
  $region12: #{lstm_classifier_forward.3} parent=0 // pred_region
    _
  $region13: #{lstm_classifier_forward.3} parent=0 // pred_fallthru
    _
  // Predicated region
  $region14: #{lstm_classifier_forward.3} parent=0 // pred_check
    _
  $region15: #{lstm_classifier_forward.3} parent=0 // pred_check_branch
    %27 = sbr.rel (0) target = $region17
  $region16: #{lstm_classifier_forward.3} parent=0 // pred_region
    _
  $region17: #{lstm_classifier_forward.3} parent=0 // pred_fallthru
    _
  // Predicated region
  $region18: #{lstm_classifier_forward.3} parent=0 // pred_check
    _
  $region19: #{lstm_classifier_forward.3} parent=0 // pred_check_branch
    %29 = sbr.rel (0) target = $region21
  $region20: #{lstm_classifier_forward.3} parent=0 // pred_region
    _
  $region21: #{lstm_classifier_forward.3} parent=0 // pred_fallthru
    _
  %s30 = ssub.s32 0, 0
  %s31 = smul.u32 8, %s30
  %p32 = scmp.lt.s32.totalorder %s31, 7
  %s33 = scalar_select %p32, %s31, 7
  %s34 = smul.addr %s33, 4
  %s35 = scalar_lea.vmem %s1, %s34
  %s36 = ssub.s32 0, 0
  %s37 = smul.u32 8, %s36
  %p38 = scmp.lt.s32.totalorder %s37, 7
  %s39 = scalar_select %p38, %s37, 7
  %s40 = smul.addr %s39, 4
  %s41 = scalar_lea.vmem %s6, %s40
  %s42 = ssub.s32 0, 0
  %s43 = smul.u32 8, %s42
  %p44 = scmp.lt.s32.totalorder %s43, 7
  %s45 = scalar_select %p44, %s43, 7
  %s46 = smul.addr %s45, 4
  %s47 = scalar_lea.vmem %s1, %s46
  %s48 = ssub.s32 0, 0
  %s49 = smul.u32 8, %s48
  %s50 = ssub.s32 0, 0
  %s51 = smul.u32 8, %s50
  %p52 = scmp.lt.s32.totalorder %s51, 7
  %s53 = scalar_select %p52, %s51, 7
  %s54 = smul.addr %s53, 4
  %s55 = scalar_lea.vmem %s6, %s54
  %s56 = ssub.s32 0, 0
  %s57 = smul.u32 8, %s56
  %v59 = vld [vmem:[%s0] sm:$0xf]
  %v60 = vld [vmem:[%s0 + $0x4] sm:$0xf]
  %v61 = vld [vmem:[%s0 + $0x8] sm:$0xf]
  %v62 = vld [vmem:[%s0 + $0xc] sm:$0xf]
  %v63 = vld [vmem:[%s0 + $0x10] sm:$0xf]
  %v64 = vld [vmem:[%s0 + $0x14] sm:$0xf]
  %v65 = vld [vmem:[%s0 + $0x18] sm:$0xf]
  %v66 = vld [vmem:[%s0 + $0x1c] sm:$0xf]
  %v67 = vld [vmem:[%s2] sm:$0xf]
  %v68 = vld [vmem:[%s2 + $0x4] sm:$0xf]
  %v69 = vld [vmem:[%s4] sm:$0x1]
  %v71 = vlaneseq
  %v72 = vshrl.u32 %v71, 7
  %v73 = vsub.s32 0, %v72
  %v74 = vrot.slane %v69, %v73
  %v84 = vunpack.c.l.b16 %v59
  %v85 = vunpack.c.l.b16 %v60
  %v86 = vunpack.c.l.b16 %v61
  %v87 = vunpack.c.l.b16 %v62
  %v88 = vunpack.c.l.b16 %v63
  %v89 = vunpack.c.l.b16 %v64
  %v90 = vunpack.c.l.b16 %v65
  %v91 = vunpack.c.l.b16 %v66
  %v92 = vpack.c.b16 %v85, %v84
  %v93 = vpack.c.b16 %v87, %v86
  %v94 = vpack.c.b16 %v89, %v88
  %v95 = vpack.c.b16 %v91, %v90
  %v98 = vunpack.c.l.b16 %v67
  %v99 = vunpack.c.l.b16 %v68
  %v100 = vpack.c.b16 %v99, %v98
  %vm102 = vcmask 130048
  %v104 = vsel %vm102, %v92, 0
  %v107 = vsel %vm102, %v93, 0
  %v110 = vsel %vm102, %v94, 0
  %v113 = vsel %vm102, %v95, 0
  %115 = vmatprep.subr.bf16.mxu0 0
  %116 = vmatpush1.bf16.msra.mxu0 %v100
  %117 = vmatprep.subr.bf16.mxu0 0
  %118 = vmatpush1.bf16.msra.mxu0 0
  %119 = vmatprep.subr.bf16.mxu0 0
  %120 = vmatpush1.bf16.msra.mxu0 0
  %121 = vmatprep.subr.bf16.mxu0 0
  %122 = vmatpush1.bf16.msra.mxu0 0
  %123 = vmatprep.subr.bf16.mxu0 0
  %124 = vmatpush1.bf16.msra.mxu0 0
  %125 = vmatprep.subr.bf16.mxu0 0
  %126 = vmatpush1.bf16.msra.mxu0 0
  %127 = vmatprep.subr.bf16.mxu0 0
  %128 = vmatpush1.bf16.msra.mxu0 0
  %129 = vmatprep.subr.bf16.mxu0 0
  %130 = vmatpush1.bf16.msra.mxu0 0
  %131 = vmatprep.subr.bf16.mxu0 0
  %132 = vmatpush1.bf16.msra.mxu0 0
  %133 = vmatprep.subr.bf16.mxu0 0
  %134 = vmatpush1.bf16.msra.mxu0 0
  %135 = vmatprep.subr.bf16.mxu0 0
  %136 = vmatpush1.bf16.msra.mxu0 0
  %137 = vmatprep.subr.bf16.mxu0 0
  %138 = vmatpush1.bf16.msra.mxu0 0
  %139 = vmatprep.subr.bf16.mxu0 0
  %140 = vmatpush1.bf16.msra.mxu0 0
  %141 = vmatprep.subr.bf16.mxu0 0
  %142 = vmatpush1.bf16.msra.mxu0 0
  %143 = vmatprep.subr.bf16.mxu0 0
  %144 = vmatpush1.bf16.msra.mxu0 0
  %145 = vmatprep.subr.bf16.mxu0 0
  %146 = vmatpush1.bf16.msra.mxu0 0
  %147 = vmatprep.mubr.bf16.mxu0 0
  %148 = vmatmul.mubr.bf16.gmra.mrb[0].mxu0 %v104
  %v149 = vpop.f32.mrb[0].mxu0
  %v150 = vadd.f32 %v74, %v149
  %v151 = vpop.f32.mrb[0].mxu0
  %v152 = vpop.f32.mrb[0].mxu0
  %v153 = vadd.f32 %v74, %v152
  %v154 = vpop.f32.mrb[0].mxu0
  %155 = vmatprep.mubr.bf16.mxu0 0
  %156 = vmatmul.mubr.bf16.gmra.mrb[0].mxu0 %v107
  %v157 = vpop.f32.mrb[0].mxu0
  %v158 = vadd.f32 %v74, %v157
  %v159 = vpop.f32.mrb[0].mxu0
  %v160 = vpop.f32.mrb[0].mxu0
  %v161 = vadd.f32 %v74, %v160
  %v162 = vpop.f32.mrb[0].mxu0
  %163 = vmatprep.mubr.bf16.mxu0 0
  %164 = vmatmul.mubr.bf16.gmra.mrb[0].mxu0 %v110
  %v165 = vpop.f32.mrb[0].mxu0
  %v166 = vadd.f32 %v74, %v165
  %v167 = vpop.f32.mrb[0].mxu0
  %v168 = vpop.f32.mrb[0].mxu0
  %v169 = vadd.f32 %v74, %v168
  %v170 = vpop.f32.mrb[0].mxu0
  %171 = vmatprep.mubr.bf16.mxu0 0
  %172 = vmatmul.mubr.bf16.gmra.mrb[0].mxu0 %v113
  %v173 = vpop.f32.mrb[0].mxu0
  %v174 = vadd.f32 %v74, %v173
  %v175 = vpop.f32.mrb[0].mxu0
  %v176 = vpop.f32.mrb[0].mxu0
  %v177 = vadd.f32 %v74, %v176
  %v178 = vpop.f32.mrb[0].mxu0
  %179 = vdwg.mxu0
  %v180 = vld [vmem:[%s47] sm:$0xf]
  %v181 = vld [vmem:[%s47 + $0x4] sm:$0xf]
  %v182 = vld [vmem:[%s47 + $0x8] sm:$0xf]
  %v183 = vld [vmem:[%s47 + $0xc] sm:$0xf]
  %v184 = vld [vmem:[%s47 + $0x10] sm:$0xf]
  %v185 = vld [vmem:[%s47 + $0x14] sm:$0xf]
  %v186 = vld [vmem:[%s47 + $0x18] sm:$0xf]
  %v187 = vld [vmem:[%s47 + $0x1c] sm:$0xf]
  %s188 = scalar_lea.vmem %s2, 8
  %v189 = vld [vmem:[%s188] sm:$0xf]
  %v190 = vld [vmem:[%s188 + $0x4] sm:$0xf]
  %s191 = scalar_lea.vmem %s4, 1
  %v192 = vld [vmem:[%s191] sm:$0x1]
  %v194 = vlaneseq
  %v195 = vshrl.u32 %v194, 7
  %v196 = vsub.s32 0, %v195
  %v197 = vrot.slane %v192, %v196
  %v207 = vunpack.c.l.b16 %v180
  %v208 = vunpack.c.l.b16 %v181
  %v209 = vunpack.c.l.b16 %v182
  %v210 = vunpack.c.l.b16 %v183
  %v211 = vunpack.c.l.b16 %v184
  %v212 = vunpack.c.l.b16 %v185
  %v213 = vunpack.c.l.b16 %v186
  %v214 = vunpack.c.l.b16 %v187
  %v215 = vpack.c.b16 %v208, %v207
  %v216 = vpack.c.b16 %v210, %v209
  %v217 = vpack.c.b16 %v212, %v211
  %v218 = vpack.c.b16 %v214, %v213
  %v221 = vunpack.c.l.b16 %v189
  %v222 = vunpack.c.l.b16 %v190
  %v223 = vpack.c.b16 %v222, %v221
  %v226 = vsel %vm102, %v215, 0
  %v229 = vsel %vm102, %v216, 0
  %v232 = vsel %vm102, %v217, 0
  %v235 = vsel %vm102, %v218, 0
  %237 = vmatprep.subr.bf16.mxu0 0
  %238 = vmatpush1.bf16.msra.mxu0 %v223
  %239 = vmatprep.subr.bf16.mxu0 0
  %240 = vmatpush1.bf16.msra.mxu0 0
  %241 = vmatprep.subr.bf16.mxu0 0
  %242 = vmatpush1.bf16.msra.mxu0 0
  %243 = vmatprep.subr.bf16.mxu0 0
  %244 = vmatpush1.bf16.msra.mxu0 0
  %245 = vmatprep.subr.bf16.mxu0 0
  %246 = vmatpush1.bf16.msra.mxu0 0
  %247 = vmatprep.subr.bf16.mxu0 0
  %248 = vmatpush1.bf16.msra.mxu0 0
  %249 = vmatprep.subr.bf16.mxu0 0
  %250 = vmatpush1.bf16.msra.mxu0 0
  %251 = vmatprep.subr.bf16.mxu0 0
  %252 = vmatpush1.bf16.msra.mxu0 0
  %253 = vmatprep.subr.bf16.mxu0 0
  %254 = vmatpush1.bf16.msra.mxu0 0
  %255 = vmatprep.subr.bf16.mxu0 0
  %256 = vmatpush1.bf16.msra.mxu0 0
  %257 = vmatprep.subr.bf16.mxu0 0
  %258 = vmatpush1.bf16.msra.mxu0 0
  %259 = vmatprep.subr.bf16.mxu0 0
  %260 = vmatpush1.bf16.msra.mxu0 0
  %261 = vmatprep.subr.bf16.mxu0 0
  %262 = vmatpush1.bf16.msra.mxu0 0
  %263 = vmatprep.subr.bf16.mxu0 0
  %264 = vmatpush1.bf16.msra.mxu0 0
  %265 = vmatprep.subr.bf16.mxu0 0
  %266 = vmatpush1.bf16.msra.mxu0 0
  %267 = vmatprep.subr.bf16.mxu0 0
  %268 = vmatpush1.bf16.msra.mxu0 0
  %269 = vmatprep.mubr.bf16.mxu0 0
  %270 = vmatmul.mubr.bf16.gmra.mrb[0].mxu0 %v226
  %v271 = vpop.f32.mrb[0].mxu0
  %v272 = vadd.f32 %v197, %v271
  %v273 = vpop.f32.mrb[0].mxu0
  %v274 = vpop.f32.mrb[0].mxu0
  %v275 = vadd.f32 %v197, %v274
  %v276 = vpop.f32.mrb[0].mxu0
  %277 = vmatprep.mubr.bf16.mxu0 0
  %278 = vmatmul.mubr.bf16.gmra.mrb[0].mxu0 %v229
  %v279 = vpop.f32.mrb[0].mxu0
  %v280 = vadd.f32 %v197, %v279
  %v281 = vpop.f32.mrb[0].mxu0
  %v282 = vpop.f32.mrb[0].mxu0
  %v283 = vadd.f32 %v197, %v282
  %v284 = vpop.f32.mrb[0].mxu0
  %285 = vmatprep.mubr.bf16.mxu0 0
  %286 = vmatmul.mubr.bf16.gmra.mrb[0].mxu0 %v232
  %v287 = vpop.f32.mrb[0].mxu0
  %v288 = vadd.f32 %v197, %v287
  %v289 = vpop.f32.mrb[0].mxu0
  %v290 = vpop.f32.mrb[0].mxu0
  %v291 = vadd.f32 %v197, %v290
  %v292 = vpop.f32.mrb[0].mxu0
  %293 = vmatprep.mubr.bf16.mxu0 0
  %294 = vmatmul.mubr.bf16.gmra.mrb[0].mxu0 %v235
  %v295 = vpop.f32.mrb[0].mxu0
  %v296 = vadd.f32 %v197, %v295
  %v297 = vpop.f32.mrb[0].mxu0
  %v298 = vpop.f32.mrb[0].mxu0
  %v299 = vadd.f32 %v197, %v298
  %v300 = vpop.f32.mrb[0].mxu0
  %301 = vdwg.mxu0
  %p302 = scmp.eq.s32.totalorder 0, 0
  // Predicated region
  $region22: #{lstm_classifier_forward.3} parent=0 // pred_check
    %p303 = pneg %p302
  $region23: #{lstm_classifier_forward.3} parent=0 // pred_check_branch
    %305 = sbr.rel (%p303) target = $region25
  $region24: #{lstm_classifier_forward.3} parent=0 // pred_region
    %vm306 = vcmask 261120
    %307 = vst.msk [vmem:[#allocation2] sm:$0xff] %vm306, 0.0
    %308 = vst.msk [vmem:[#allocation2 + $0x8] sm:$0xff] %vm306, 0.0
    %309 = vst.msk [vmem:[#allocation3] sm:$0xff] %vm306, 0.0
    %310 = vst.msk [vmem:[#allocation3 + $0x8] sm:$0xff] %vm306, 0.0
  $region25: #{lstm_classifier_forward.3} parent=0 // pred_fallthru
    _
  %v311 = vld [vmem:[%s3] sm:$0xf]
  %v312 = vld [vmem:[%s3 + $0x4] sm:$0xf]
  %v313 = vld [vmem:[%s3 + $0x8] sm:$0xf]
  %v314 = vld [vmem:[%s3 + $0xc] sm:$0xf]
  %s315 = scalar_lea.vmem %s3, 16
  %v316 = vld [vmem:[%s315] sm:$0xf]
  %v317 = vld [vmem:[%s315 + $0x4] sm:$0xf]
  %v318 = vld [vmem:[%s315 + $0x8] sm:$0xf]
  %v319 = vld [vmem:[%s315 + $0xc] sm:$0xf]
  %v320 = vld [vmem:[#allocation2] sm:$0xff]
  %v321 = vld [vmem:[#allocation3] sm:$0xff]
  %s322 = scalar_lea.vmem [#allocation2], 8
  %v323 = vld [vmem:[%s322] sm:$0xff]
  %s324 = scalar_lea.vmem [#allocation3], 8
  %v325 = vld [vmem:[%s324] sm:$0xff]
  %v326 = vpack.c.bf16 %v320, %v320
  %v331 = vunpack.c.l.b16 %v311
  %v332 = vunpack.c.l.b16 %v312
  %v333 = vunpack.c.l.b16 %v313
  %v334 = vunpack.c.l.b16 %v314
  %v335 = vpack.c.b16 %v332, %v331
  %v336 = vpack.c.b16 %v334, %v333
  %vm339 = vcmask 261120
  %v341 = vsel %vm339, %v326, 0
  %343 = vmatprep.subr.bf16.mxu0 0
  %344 = vmatpush1.bf16.msra.mxu0 %v335
  %345 = vmatprep.subr.bf16.mxu0 0
  %346 = vmatpush1.bf16.msra.mxu0 %v336
  %347 = vmatprep.subr.bf16.mxu0 0
  %348 = vmatpush1.bf16.msra.mxu0 0
  %349 = vmatprep.subr.bf16.mxu0 0
  %350 = vmatpush1.bf16.msra.mxu0 0
  %351 = vmatprep.subr.bf16.mxu0 0
  %352 = vmatpush1.bf16.msra.mxu0 0
  %353 = vmatprep.subr.bf16.mxu0 0
  %354 = vmatpush1.bf16.msra.mxu0 0
  %355 = vmatprep.subr.bf16.mxu0 0
  %356 = vmatpush1.bf16.msra.mxu0 0
  %357 = vmatprep.subr.bf16.mxu0 0
  %358 = vmatpush1.bf16.msra.mxu0 0
  %359 = vmatprep.subr.bf16.mxu0 0
  %360 = vmatpush1.bf16.msra.mxu0 0
  %361 = vmatprep.subr.bf16.mxu0 0
  %362 = vmatpush1.bf16.msra.mxu0 0
  %363 = vmatprep.subr.bf16.mxu0 0
  %364 = vmatpush1.bf16.msra.mxu0 0
  %365 = vmatprep.subr.bf16.mxu0 0
  %366 = vmatpush1.bf16.msra.mxu0 0
  %367 = vmatprep.subr.bf16.mxu0 0
  %368 = vmatpush1.bf16.msra.mxu0 0
  %369 = vmatprep.subr.bf16.mxu0 0
  %370 = vmatpush1.bf16.msra.mxu0 0
  %371 = vmatprep.subr.bf16.mxu0 0
  %372 = vmatpush1.bf16.msra.mxu0 0
  %373 = vmatprep.subr.bf16.mxu0 0
  %374 = vmatpush1.bf16.msra.mxu0 0
  %375 = vmatprep.mubr.bf16.mxu0 0
  %376 = vmatmul.mubr.bf16.gmra.mrb[0].mxu0 %v341
  %v377 = vpop.f32.mrb[0].mxu0
  %v378 = vadd.f32 0.0, %v377
  %v379 = vpop.f32.mrb[0].mxu0
  %v380 = vpop.f32.mrb[0].mxu0
  %v381 = vpop.f32.mrb[0].mxu0
  %382 = vdwg.mxu0
  %v383 = vadd.f32 %v150, %v378
  %v384 = vpack.c.bf16 %v323, %v323
  %v389 = vunpack.c.l.b16 %v316
  %v390 = vunpack.c.l.b16 %v317
  %v391 = vunpack.c.l.b16 %v318
  %v392 = vunpack.c.l.b16 %v319
  %v393 = vpack.c.b16 %v390, %v389
  %v394 = vpack.c.b16 %v392, %v391
  %v398 = vsel %vm339, %v384, 0
  %400 = vmatprep.subr.bf16.mxu0 0
  %401 = vmatpush1.bf16.msra.mxu0 %v393
  %402 = vmatprep.subr.bf16.mxu0 0
  %403 = vmatpush1.bf16.msra.mxu0 %v394
  %404 = vmatprep.subr.bf16.mxu0 0
  %405 = vmatpush1.bf16.msra.mxu0 0
  %406 = vmatprep.subr.bf16.mxu0 0
  %407 = vmatpush1.bf16.msra.mxu0 0
  %408 = vmatprep.subr.bf16.mxu0 0
  %409 = vmatpush1.bf16.msra.mxu0 0
  %410 = vmatprep.subr.bf16.mxu0 0
  %411 = vmatpush1.bf16.msra.mxu0 0
  %412 = vmatprep.subr.bf16.mxu0 0
  %413 = vmatpush1.bf16.msra.mxu0 0
  %414 = vmatprep.subr.bf16.mxu0 0
  %415 = vmatpush1.bf16.msra.mxu0 0
  %416 = vmatprep.subr.bf16.mxu0 0
  %417 = vmatpush1.bf16.msra.mxu0 0
  %418 = vmatprep.subr.bf16.mxu0 0
  %419 = vmatpush1.bf16.msra.mxu0 0
  %420 = vmatprep.subr.bf16.mxu0 0
  %421 = vmatpush1.bf16.msra.mxu0 0
  %422 = vmatprep.subr.bf16.mxu0 0
  %423 = vmatpush1.bf16.msra.mxu0 0
  %424 = vmatprep.subr.bf16.mxu0 0
  %425 = vmatpush1.bf16.msra.mxu0 0
  %426 = vmatprep.subr.bf16.mxu0 0
  %427 = vmatpush1.bf16.msra.mxu0 0
  %428 = vmatprep.subr.bf16.mxu0 0
  %429 = vmatpush1.bf16.msra.mxu0 0
  %430 = vmatprep.subr.bf16.mxu0 0
  %431 = vmatpush1.bf16.msra.mxu0 0
  %432 = vmatprep.mubr.bf16.mxu0 0
  %433 = vmatmul.mubr.bf16.gmra.mrb[0].mxu0 %v398
  %v434 = vpop.f32.mrb[0].mxu0
  %v435 = vadd.f32 0.0, %v434
  %v436 = vpop.f32.mrb[0].mxu0
  %v437 = vpop.f32.mrb[0].mxu0
  %v438 = vpop.f32.mrb[0].mxu0
  %439 = vdwg.mxu0
  %v440 = vadd.f32 %v299, %v435
  %v441 = vxor.u32 %v383, 2147483648
  %v442 = vmul.f32 %v441, 1.442695
  %v443 = vpow.pop %v442
  %v444 = vadd.f32 %v443, 1.0
  %v445 = vrcp.pop %v444
  %v446 = vmul.f32 1.0, %v445
  %v447 = vtanh.pop %v383
  %449 = vrot.lane.b32.xlu0 %v321, 32
  %v450 = vpop.permute.xlu0 %449
  %v452 = vmul.f32 %v446, %v450
  %454 = vrot.lane.b32.xlu0 %v447, 32
  %v455 = vpop.permute.xlu0 %454
  %v457 = vmul.f32 %v446, %v455
  %459 = vrot.lane.b32.xlu0 %v457, 32
  %v460 = vpop.permute.xlu0 %459
  %v462 = vadd.f32 %v452, %v460
  %v463 = vtanh.pop %v462
  %465 = vrot.lane.b32.xlu0 %v463, 32
  %v466 = vpop.permute.xlu0 %465
  %v468 = vmul.f32 %v446, %v466
  %v469 = vxor.u32 %v440, 2147483648
  %v470 = vmul.f32 %v469, 1.442695
  %v471 = vpow.pop %v470
  %v472 = vadd.f32 %v471, 1.0
  %v473 = vrcp.pop %v472
  %v474 = vmul.f32 1.0, %v473
  %v475 = vtanh.pop %v440
  %477 = vrot.lane.b32.xlu0 %v325, 32
  %v478 = vpop.permute.xlu0 %477
  %v480 = vmul.f32 %v474, %v478
  %482 = vrot.lane.b32.xlu0 %v475, 32
  %v483 = vpop.permute.xlu0 %482
  %v485 = vmul.f32 %v474, %v483
  %487 = vrot.lane.b32.xlu0 %v485, 32
  %v488 = vpop.permute.xlu0 %487
  %v490 = vadd.f32 %v480, %v488
  %v491 = vtanh.pop %v490
  %493 = vrot.lane.b32.xlu0 %v491, 32
  %v494 = vpop.permute.xlu0 %493
  %v496 = vmul.f32 %v474, %v494
  %v497 = vpack.c.bf16 %v468, %v468
  %v499 = vunpack.c.l.b16 %v497
  %v500 = vpack.c.b16 %v499, %v499
  %501 = vrot.lane.b32.xlu0 %v500, 64
  %v502 = vpop.permute.xlu0 %501
  %vm504 = vcmask 257024
  %505 = vst.msk [vmem:[%s5] sm:$0xf] %vm504, %v502
  %v506 = vpack.c.bf16 %v496, %v496
  %v508 = vunpack.c.l.b16 %v506
  %v509 = vpack.c.b16 %v508, %v508
  %510 = vrot.lane.b32.xlu0 %v509, 64
  %v511 = vpop.permute.xlu0 %510
  %513 = vst.msk [vmem:[%s55 + $0x1c] sm:$0xf] %vm504, %v511
  %514 = vrot.lane.b32.xlu0 %v497, 64
  %v515 = vpop.permute.xlu0 %514
  %v517 = vsel %vm339, %v515, 0
  %519 = vmatprep.subr.bf16.mxu0 0
  %520 = vmatpush1.bf16.msra.mxu0 %v335
  %521 = vmatprep.subr.bf16.mxu0 0
  %522 = vmatpush1.bf16.msra.mxu0 %v336
  %523 = vmatprep.subr.bf16.mxu0 0
  %524 = vmatpush1.bf16.msra.mxu0 0
  %525 = vmatprep.subr.bf16.mxu0 0
  %526 = vmatpush1.bf16.msra.mxu0 0
  %527 = vmatprep.subr.bf16.mxu0 0
  %528 = vmatpush1.bf16.msra.mxu0 0
  %529 = vmatprep.subr.bf16.mxu0 0
  %530 = vmatpush1.bf16.msra.mxu0 0
  %531 = vmatprep.subr.bf16.mxu0 0
  %532 = vmatpush1.bf16.msra.mxu0 0
  %533 = vmatprep.subr.bf16.mxu0 0
  %534 = vmatpush1.bf16.msra.mxu0 0
  %535 = vmatprep.subr.bf16.mxu0 0
  %536 = vmatpush1.bf16.msra.mxu0 0
  %537 = vmatprep.subr.bf16.mxu0 0
  %538 = vmatpush1.bf16.msra.mxu0 0
  %539 = vmatprep.subr.bf16.mxu0 0
  %540 = vmatpush1.bf16.msra.mxu0 0
  %541 = vmatprep.subr.bf16.mxu0 0
  %542 = vmatpush1.bf16.msra.mxu0 0
  %543 = vmatprep.subr.bf16.mxu0 0
  %544 = vmatpush1.bf16.msra.mxu0 0
  %545 = vmatprep.subr.bf16.mxu0 0
  %546 = vmatpush1.bf16.msra.mxu0 0
  %547 = vmatprep.subr.bf16.mxu0 0
  %548 = vmatpush1.bf16.msra.mxu0 0
  %549 = vmatprep.subr.bf16.mxu0 0
  %550 = vmatpush1.bf16.msra.mxu0 0
  %551 = vmatprep.mubr.bf16.mxu0 0
  %552 = vmatmul.mubr.bf16.gmra.mrb[0].mxu0 %v517
  %v553 = vpop.f32.mrb[0].mxu0
  %v554 = vadd.f32 0.0, %v553
  %v555 = vpop.f32.mrb[0].mxu0
  %v556 = vpop.f32.mrb[0].mxu0
  %v557 = vpop.f32.mrb[0].mxu0
  %558 = vdwg.mxu0
  %v559 = vadd.f32 %v153, %v554
  %560 = vrot.lane.b32.xlu0 %v506, 64
  %v561 = vpop.permute.xlu0 %560
  %v563 = vsel %vm339, %v561, 0
  %565 = vmatprep.subr.bf16.mxu0 0
  %566 = vmatpush1.bf16.msra.mxu0 %v393
  %567 = vmatprep.subr.bf16.mxu0 0
  %568 = vmatpush1.bf16.msra.mxu0 %v394
  %569 = vmatprep.subr.bf16.mxu0 0
  %570 = vmatpush1.bf16.msra.mxu0 0
  %571 = vmatprep.subr.bf16.mxu0 0
  %572 = vmatpush1.bf16.msra.mxu0 0
  %573 = vmatprep.subr.bf16.mxu0 0
  %574 = vmatpush1.bf16.msra.mxu0 0
  %575 = vmatprep.subr.bf16.mxu0 0
  %576 = vmatpush1.bf16.msra.mxu0 0
  %577 = vmatprep.subr.bf16.mxu0 0
  %578 = vmatpush1.bf16.msra.mxu0 0
  %579 = vmatprep.subr.bf16.mxu0 0
  %580 = vmatpush1.bf16.msra.mxu0 0
  %581 = vmatprep.subr.bf16.mxu0 0
  %582 = vmatpush1.bf16.msra.mxu0 0
  %583 = vmatprep.subr.bf16.mxu0 0
  %584 = vmatpush1.bf16.msra.mxu0 0
  %585 = vmatprep.subr.bf16.mxu0 0
  %586 = vmatpush1.bf16.msra.mxu0 0
  %587 = vmatprep.subr.bf16.mxu0 0
  %588 = vmatpush1.bf16.msra.mxu0 0
  %589 = vmatprep.subr.bf16.mxu0 0
  %590 = vmatpush1.bf16.msra.mxu0 0
  %591 = vmatprep.subr.bf16.mxu0 0
  %592 = vmatpush1.bf16.msra.mxu0 0
  %593 = vmatprep.subr.bf16.mxu0 0
  %594 = vmatpush1.bf16.msra.mxu0 0
  %595 = vmatprep.subr.bf16.mxu0 0
  %596 = vmatpush1.bf16.msra.mxu0 0
  %597 = vmatprep.mubr.bf16.mxu0 0
  %598 = vmatmul.mubr.bf16.gmra.mrb[0].mxu0 %v563
  %v599 = vpop.f32.mrb[0].mxu0
  %v600 = vadd.f32 0.0, %v599
  %v601 = vpop.f32.mrb[0].mxu0
  %v602 = vpop.f32.mrb[0].mxu0
  %v603 = vpop.f32.mrb[0].mxu0
  %604 = vdwg.mxu0
  %v605 = vadd.f32 %v296, %v600
  %v606 = vxor.u32 %v559, 2147483648
  %v607 = vmul.f32 %v606, 1.442695
  %v608 = vpow.pop %v607
  %v609 = vadd.f32 %v608, 1.0
  %v610 = vrcp.pop %v609
  %v611 = vmul.f32 1.0, %v610
  %v612 = vtanh.pop %v559
  %v613 = vmul.f32 %v611, %v462
  %615 = vrot.lane.b32.xlu0 %v612, 32
  %v616 = vpop.permute.xlu0 %615
  %v618 = vmul.f32 %v611, %v616
  %620 = vrot.lane.b32.xlu0 %v618, 32
  %v621 = vpop.permute.xlu0 %620
  %v623 = vadd.f32 %v613, %v621
  %v624 = vtanh.pop %v623
  %626 = vrot.lane.b32.xlu0 %v624, 32
  %v627 = vpop.permute.xlu0 %626
  %v629 = vmul.f32 %v611, %v627
  %v630 = vxor.u32 %v605, 2147483648
  %v631 = vmul.f32 %v630, 1.442695
  %v632 = vpow.pop %v631
  %v633 = vadd.f32 %v632, 1.0
  %v634 = vrcp.pop %v633
  %v635 = vmul.f32 1.0, %v634
  %v636 = vtanh.pop %v605
  %v637 = vmul.f32 %v635, %v490
  %639 = vrot.lane.b32.xlu0 %v636, 32
  %v640 = vpop.permute.xlu0 %639
  %v642 = vmul.f32 %v635, %v640
  %644 = vrot.lane.b32.xlu0 %v642, 32
  %v645 = vpop.permute.xlu0 %644
  %v647 = vadd.f32 %v637, %v645
  %v648 = vtanh.pop %v647
  %650 = vrot.lane.b32.xlu0 %v648, 32
  %v651 = vpop.permute.xlu0 %650
  %v653 = vmul.f32 %v635, %v651
  %v654 = vpack.c.bf16 %v629, %v629
  %v656 = vunpack.c.l.b16 %v654
  %v657 = vpack.c.b16 %v656, %v656
  %658 = vrot.lane.b32.xlu0 %v657, 64
  %v659 = vpop.permute.xlu0 %658
  %661 = vst.msk [vmem:[%s5 + $0x4] sm:$0xf] %vm504, %v659
  %v662 = vpack.c.bf16 %v653, %v653
  %v664 = vunpack.c.l.b16 %v662
  %v665 = vpack.c.b16 %v664, %v664
  %666 = vrot.lane.b32.xlu0 %v665, 64
  %v667 = vpop.permute.xlu0 %666
  %669 = vst.msk [vmem:[%s55 + $0x18] sm:$0xf] %vm504, %v667
  %670 = vrot.lane.b32.xlu0 %v654, 64
  %v671 = vpop.permute.xlu0 %670
  %v673 = vsel %vm339, %v671, 0
  %675 = vmatprep.subr.bf16.mxu0 0
  %676 = vmatpush1.bf16.msra.mxu0 %v335
  %677 = vmatprep.subr.bf16.mxu0 0
  %678 = vmatpush1.bf16.msra.mxu0 %v336
  %679 = vmatprep.subr.bf16.mxu0 0
  %680 = vmatpush1.bf16.msra.mxu0 0
  %681 = vmatprep.subr.bf16.mxu0 0
  %682 = vmatpush1.bf16.msra.mxu0 0
  %683 = vmatprep.subr.bf16.mxu0 0
  %684 = vmatpush1.bf16.msra.mxu0 0
  %685 = vmatprep.subr.bf16.mxu0 0
  %686 = vmatpush1.bf16.msra.mxu0 0
  %687 = vmatprep.subr.bf16.mxu0 0
  %688 = vmatpush1.bf16.msra.mxu0 0
  %689 = vmatprep.subr.bf16.mxu0 0
  %690 = vmatpush1.bf16.msra.mxu0 0
  %691 = vmatprep.subr.bf16.mxu0 0
  %692 = vmatpush1.bf16.msra.mxu0 0
  %693 = vmatprep.subr.bf16.mxu0 0
  %694 = vmatpush1.bf16.msra.mxu0 0
  %695 = vmatprep.subr.bf16.mxu0 0
  %696 = vmatpush1.bf16.msra.mxu0 0
  %697 = vmatprep.subr.bf16.mxu0 0
  %698 = vmatpush1.bf16.msra.mxu0 0
  %699 = vmatprep.subr.bf16.mxu0 0
  %700 = vmatpush1.bf16.msra.mxu0 0
  %701 = vmatprep.subr.bf16.mxu0 0
  %702 = vmatpush1.bf16.msra.mxu0 0
  %703 = vmatprep.subr.bf16.mxu0 0
  %704 = vmatpush1.bf16.msra.mxu0 0
  %705 = vmatprep.subr.bf16.mxu0 0
  %706 = vmatpush1.bf16.msra.mxu0 0
  %707 = vmatprep.mubr.bf16.mxu0 0
  %708 = vmatmul.mubr.bf16.gmra.mrb[0].mxu0 %v673
  %v709 = vpop.f32.mrb[0].mxu0
  %v710 = vadd.f32 0.0, %v709
  %v711 = vpop.f32.mrb[0].mxu0
  %v712 = vpop.f32.mrb[0].mxu0
  %v713 = vpop.f32.mrb[0].mxu0
  %714 = vdwg.mxu0
  %v715 = vadd.f32 %v158, %v710
  %716 = vrot.lane.b32.xlu0 %v662, 64
  %v717 = vpop.permute.xlu0 %716
  %v719 = vsel %vm339, %v717, 0
  %721 = vmatprep.subr.bf16.mxu0 0
  %722 = vmatpush1.bf16.msra.mxu0 %v393
  %723 = vmatprep.subr.bf16.mxu0 0
  %724 = vmatpush1.bf16.msra.mxu0 %v394
  %725 = vmatprep.subr.bf16.mxu0 0
  %726 = vmatpush1.bf16.msra.mxu0 0
  %727 = vmatprep.subr.bf16.mxu0 0
  %728 = vmatpush1.bf16.msra.mxu0 0
  %729 = vmatprep.subr.bf16.mxu0 0
  %730 = vmatpush1.bf16.msra.mxu0 0
  %731 = vmatprep.subr.bf16.mxu0 0
  %732 = vmatpush1.bf16.msra.mxu0 0
  %733 = vmatprep.subr.bf16.mxu0 0
  %734 = vmatpush1.bf16.msra.mxu0 0
  %735 = vmatprep.subr.bf16.mxu0 0
  %736 = vmatpush1.bf16.msra.mxu0 0
  %737 = vmatprep.subr.bf16.mxu0 0
  %738 = vmatpush1.bf16.msra.mxu0 0
  %739 = vmatprep.subr.bf16.mxu0 0
  %740 = vmatpush1.bf16.msra.mxu0 0
  %741 = vmatprep.subr.bf16.mxu0 0
  %742 = vmatpush1.bf16.msra.mxu0 0
  %743 = vmatprep.subr.bf16.mxu0 0
  %744 = vmatpush1.bf16.msra.mxu0 0
  %745 = vmatprep.subr.bf16.mxu0 0
  %746 = vmatpush1.bf16.msra.mxu0 0
  %747 = vmatprep.subr.bf16.mxu0 0
  %748 = vmatpush1.bf16.msra.mxu0 0
  %749 = vmatprep.subr.bf16.mxu0 0
  %750 = vmatpush1.bf16.msra.mxu0 0
  %751 = vmatprep.subr.bf16.mxu0 0
  %752 = vmatpush1.bf16.msra.mxu0 0
  %753 = vmatprep.mubr.bf16.mxu0 0
  %754 = vmatmul.mubr.bf16.gmra.mrb[0].mxu0 %v719
  %v755 = vpop.f32.mrb[0].mxu0
  %v756 = vadd.f32 0.0, %v755
  %v757 = vpop.f32.mrb[0].mxu0
  %v758 = vpop.f32.mrb[0].mxu0
  %v759 = vpop.f32.mrb[0].mxu0
  %760 = vdwg.mxu0
  %v761 = vadd.f32 %v291, %v756
  %v762 = vxor.u32 %v715, 2147483648
  %v763 = vmul.f32 %v762, 1.442695
  %v764 = vpow.pop %v763
  %v765 = vadd.f32 %v764, 1.0
  %v766 = vrcp.pop %v765
  %v767 = vmul.f32 1.0, %v766
  %v768 = vtanh.pop %v715
  %v769 = vmul.f32 %v767, %v623
  %771 = vrot.lane.b32.xlu0 %v768, 32
  %v772 = vpop.permute.xlu0 %771
  %v774 = vmul.f32 %v767, %v772
  %776 = vrot.lane.b32.xlu0 %v774, 32
  %v777 = vpop.permute.xlu0 %776
  %v779 = vadd.f32 %v769, %v777
  %v780 = vtanh.pop %v779
  %782 = vrot.lane.b32.xlu0 %v780, 32
  %v783 = vpop.permute.xlu0 %782
  %v785 = vmul.f32 %v767, %v783
  %v786 = vxor.u32 %v761, 2147483648
  %v787 = vmul.f32 %v786, 1.442695
  %v788 = vpow.pop %v787
  %v789 = vadd.f32 %v788, 1.0
  %v790 = vrcp.pop %v789
  %v791 = vmul.f32 1.0, %v790
  %v792 = vtanh.pop %v761
  %v793 = vmul.f32 %v791, %v647
  %795 = vrot.lane.b32.xlu0 %v792, 32
  %v796 = vpop.permute.xlu0 %795
  %v798 = vmul.f32 %v791, %v796
  %800 = vrot.lane.b32.xlu0 %v798, 32
  %v801 = vpop.permute.xlu0 %800
  %v803 = vadd.f32 %v793, %v801
  %v804 = vtanh.pop %v803
  %806 = vrot.lane.b32.xlu0 %v804, 32
  %v807 = vpop.permute.xlu0 %806
  %v809 = vmul.f32 %v791, %v807
  %v810 = vpack.c.bf16 %v785, %v785
  %v812 = vunpack.c.l.b16 %v810
  %v813 = vpack.c.b16 %v812, %v812
  %814 = vrot.lane.b32.xlu0 %v813, 64
  %v815 = vpop.permute.xlu0 %814
  %817 = vst.msk [vmem:[%s5 + $0x8] sm:$0xf] %vm504, %v815
  %v818 = vpack.c.bf16 %v809, %v809
  %v820 = vunpack.c.l.b16 %v818
  %v821 = vpack.c.b16 %v820, %v820
  %822 = vrot.lane.b32.xlu0 %v821, 64
  %v823 = vpop.permute.xlu0 %822
  %825 = vst.msk [vmem:[%s55 + $0x14] sm:$0xf] %vm504, %v823
  %826 = vrot.lane.b32.xlu0 %v810, 64
  %v827 = vpop.permute.xlu0 %826
  %v829 = vsel %vm339, %v827, 0
  %831 = vmatprep.subr.bf16.mxu0 0
  %832 = vmatpush1.bf16.msra.mxu0 %v335
  %833 = vmatprep.subr.bf16.mxu0 0
  %834 = vmatpush1.bf16.msra.mxu0 %v336
  %835 = vmatprep.subr.bf16.mxu0 0
  %836 = vmatpush1.bf16.msra.mxu0 0
  %837 = vmatprep.subr.bf16.mxu0 0
  %838 = vmatpush1.bf16.msra.mxu0 0
  %839 = vmatprep.subr.bf16.mxu0 0
  %840 = vmatpush1.bf16.msra.mxu0 0
  %841 = vmatprep.subr.bf16.mxu0 0
  %842 = vmatpush1.bf16.msra.mxu0 0
  %843 = vmatprep.subr.bf16.mxu0 0
  %844 = vmatpush1.bf16.msra.mxu0 0
  %845 = vmatprep.subr.bf16.mxu0 0
  %846 = vmatpush1.bf16.msra.mxu0 0
  %847 = vmatprep.subr.bf16.mxu0 0
  %848 = vmatpush1.bf16.msra.mxu0 0
  %849 = vmatprep.subr.bf16.mxu0 0
  %850 = vmatpush1.bf16.msra.mxu0 0
  %851 = vmatprep.subr.bf16.mxu0 0
  %852 = vmatpush1.bf16.msra.mxu0 0
  %853 = vmatprep.subr.bf16.mxu0 0
  %854 = vmatpush1.bf16.msra.mxu0 0
  %855 = vmatprep.subr.bf16.mxu0 0
  %856 = vmatpush1.bf16.msra.mxu0 0
  %857 = vmatprep.subr.bf16.mxu0 0
  %858 = vmatpush1.bf16.msra.mxu0 0
  %859 = vmatprep.subr.bf16.mxu0 0
  %860 = vmatpush1.bf16.msra.mxu0 0
  %861 = vmatprep.subr.bf16.mxu0 0
  %862 = vmatpush1.bf16.msra.mxu0 0
  %863 = vmatprep.mubr.bf16.mxu0 0
  %864 = vmatmul.mubr.bf16.gmra.mrb[0].mxu0 %v829
  %v865 = vpop.f32.mrb[0].mxu0
  %v866 = vadd.f32 0.0, %v865
  %v867 = vpop.f32.mrb[0].mxu0
  %v868 = vpop.f32.mrb[0].mxu0
  %v869 = vpop.f32.mrb[0].mxu0
  %870 = vdwg.mxu0
  %v871 = vadd.f32 %v161, %v866
  %872 = vrot.lane.b32.xlu0 %v818, 64
  %v873 = vpop.permute.xlu0 %872
  %v875 = vsel %vm339, %v873, 0
  %877 = vmatprep.subr.bf16.mxu0 0
  %878 = vmatpush1.bf16.msra.mxu0 %v393
  %879 = vmatprep.subr.bf16.mxu0 0
  %880 = vmatpush1.bf16.msra.mxu0 %v394
  %881 = vmatprep.subr.bf16.mxu0 0
  %882 = vmatpush1.bf16.msra.mxu0 0
  %883 = vmatprep.subr.bf16.mxu0 0
  %884 = vmatpush1.bf16.msra.mxu0 0
  %885 = vmatprep.subr.bf16.mxu0 0
  %886 = vmatpush1.bf16.msra.mxu0 0
  %887 = vmatprep.subr.bf16.mxu0 0
  %888 = vmatpush1.bf16.msra.mxu0 0
  %889 = vmatprep.subr.bf16.mxu0 0
  %890 = vmatpush1.bf16.msra.mxu0 0
  %891 = vmatprep.subr.bf16.mxu0 0
  %892 = vmatpush1.bf16.msra.mxu0 0
  %893 = vmatprep.subr.bf16.mxu0 0
  %894 = vmatpush1.bf16.msra.mxu0 0
  %895 = vmatprep.subr.bf16.mxu0 0
  %896 = vmatpush1.bf16.msra.mxu0 0
  %897 = vmatprep.subr.bf16.mxu0 0
  %898 = vmatpush1.bf16.msra.mxu0 0
  %899 = vmatprep.subr.bf16.mxu0 0
  %900 = vmatpush1.bf16.msra.mxu0 0
  %901 = vmatprep.subr.bf16.mxu0 0
  %902 = vmatpush1.bf16.msra.mxu0 0
  %903 = vmatprep.subr.bf16.mxu0 0
  %904 = vmatpush1.bf16.msra.mxu0 0
  %905 = vmatprep.subr.bf16.mxu0 0
  %906 = vmatpush1.bf16.msra.mxu0 0
  %907 = vmatprep.subr.bf16.mxu0 0
  %908 = vmatpush1.bf16.msra.mxu0 0
  %909 = vmatprep.mubr.bf16.mxu0 0
  %910 = vmatmul.mubr.bf16.gmra.mrb[0].mxu0 %v875
  %v911 = vpop.f32.mrb[0].mxu0
  %v912 = vadd.f32 0.0, %v911
  %v913 = vpop.f32.mrb[0].mxu0
  %v914 = vpop.f32.mrb[0].mxu0
  %v915 = vpop.f32.mrb[0].mxu0
  %916 = vdwg.mxu0
  %v917 = vadd.f32 %v288, %v912
  %v918 = vxor.u32 %v871, 2147483648
  %v919 = vmul.f32 %v918, 1.442695
  %v920 = vpow.pop %v919
  %v921 = vadd.f32 %v920, 1.0
  %v922 = vrcp.pop %v921
  %v923 = vmul.f32 1.0, %v922
  %v924 = vtanh.pop %v871
  %v925 = vmul.f32 %v923, %v779
  %927 = vrot.lane.b32.xlu0 %v924, 32
  %v928 = vpop.permute.xlu0 %927
  %v930 = vmul.f32 %v923, %v928
  %932 = vrot.lane.b32.xlu0 %v930, 32
  %v933 = vpop.permute.xlu0 %932
  %v935 = vadd.f32 %v925, %v933
  %v936 = vtanh.pop %v935
  %938 = vrot.lane.b32.xlu0 %v936, 32
  %v939 = vpop.permute.xlu0 %938
  %v941 = vmul.f32 %v923, %v939
  %v942 = vxor.u32 %v917, 2147483648
  %v943 = vmul.f32 %v942, 1.442695
  %v944 = vpow.pop %v943
  %v945 = vadd.f32 %v944, 1.0
  %v946 = vrcp.pop %v945
  %v947 = vmul.f32 1.0, %v946
  %v948 = vtanh.pop %v917
  %v949 = vmul.f32 %v947, %v803
  %951 = vrot.lane.b32.xlu0 %v948, 32
  %v952 = vpop.permute.xlu0 %951
  %v954 = vmul.f32 %v947, %v952
  %956 = vrot.lane.b32.xlu0 %v954, 32
  %v957 = vpop.permute.xlu0 %956
  %v959 = vadd.f32 %v949, %v957
  %v960 = vtanh.pop %v959
  %962 = vrot.lane.b32.xlu0 %v960, 32
  %v963 = vpop.permute.xlu0 %962
  %v965 = vmul.f32 %v947, %v963
  %v966 = vpack.c.bf16 %v941, %v941
  %v968 = vunpack.c.l.b16 %v966
  %v969 = vpack.c.b16 %v968, %v968
  %970 = vrot.lane.b32.xlu0 %v969, 64
  %v971 = vpop.permute.xlu0 %970
  %973 = vst.msk [vmem:[%s5 + $0xc] sm:$0xf] %vm504, %v971
  %v974 = vpack.c.bf16 %v965, %v965
  %v976 = vunpack.c.l.b16 %v974
  %v977 = vpack.c.b16 %v976, %v976
  %978 = vrot.lane.b32.xlu0 %v977, 64
  %v979 = vpop.permute.xlu0 %978
  %981 = vst.msk [vmem:[%s55 + $0x10] sm:$0xf] %vm504, %v979
  %982 = vrot.lane.b32.xlu0 %v966, 64
  %v983 = vpop.permute.xlu0 %982
  %v985 = vsel %vm339, %v983, 0
  %987 = vmatprep.subr.bf16.mxu0 0
  %988 = vmatpush1.bf16.msra.mxu0 %v335
  %989 = vmatprep.subr.bf16.mxu0 0
  %990 = vmatpush1.bf16.msra.mxu0 %v336
  %991 = vmatprep.subr.bf16.mxu0 0
  %992 = vmatpush1.bf16.msra.mxu0 0
  %993 = vmatprep.subr.bf16.mxu0 0
  %994 = vmatpush1.bf16.msra.mxu0 0
  %995 = vmatprep.subr.bf16.mxu0 0
  %996 = vmatpush1.bf16.msra.mxu0 0
  %997 = vmatprep.subr.bf16.mxu0 0
  %998 = vmatpush1.bf16.msra.mxu0 0
  %999 = vmatprep.subr.bf16.mxu0 0
  %1000 = vmatpush1.bf16.msra.mxu0 0
  %1001 = vmatprep.subr.bf16.mxu0 0
  %1002 = vmatpush1.bf16.msra.mxu0 0
  %1003 = vmatprep.subr.bf16.mxu0 0
  %1004 = vmatpush1.bf16.msra.mxu0 0
  %1005 = vmatprep.subr.bf16.mxu0 0
  %1006 = vmatpush1.bf16.msra.mxu0 0
  %1007 = vmatprep.subr.bf16.mxu0 0
  %1008 = vmatpush1.bf16.msra.mxu0 0
  %1009 = vmatprep.subr.bf16.mxu0 0
  %1010 = vmatpush1.bf16.msra.mxu0 0
  %1011 = vmatprep.subr.bf16.mxu0 0
  %1012 = vmatpush1.bf16.msra.mxu0 0
  %1013 = vmatprep.subr.bf16.mxu0 0
  %1014 = vmatpush1.bf16.msra.mxu0 0
  %1015 = vmatprep.subr.bf16.mxu0 0
  %1016 = vmatpush1.bf16.msra.mxu0 0
  %1017 = vmatprep.subr.bf16.mxu0 0
  %1018 = vmatpush1.bf16.msra.mxu0 0
  %1019 = vmatprep.mubr.bf16.mxu0 0
  %1020 = vmatmul.mubr.bf16.gmra.mrb[0].mxu0 %v985
  %v1021 = vpop.f32.mrb[0].mxu0
  %v1022 = vadd.f32 0.0, %v1021
  %v1023 = vpop.f32.mrb[0].mxu0
  %v1024 = vpop.f32.mrb[0].mxu0
  %v1025 = vpop.f32.mrb[0].mxu0
  %1026 = vdwg.mxu0
  %v1027 = vadd.f32 %v166, %v1022
  %1028 = vrot.lane.b32.xlu0 %v974, 64
  %v1029 = vpop.permute.xlu0 %1028
  %v1031 = vsel %vm339, %v1029, 0
  %1033 = vmatprep.subr.bf16.mxu0 0
  %1034 = vmatpush1.bf16.msra.mxu0 %v393
  %1035 = vmatprep.subr.bf16.mxu0 0
  %1036 = vmatpush1.bf16.msra.mxu0 %v394
  %1037 = vmatprep.subr.bf16.mxu0 0
  %1038 = vmatpush1.bf16.msra.mxu0 0
  %1039 = vmatprep.subr.bf16.mxu0 0
  %1040 = vmatpush1.bf16.msra.mxu0 0
  %1041 = vmatprep.subr.bf16.mxu0 0
  %1042 = vmatpush1.bf16.msra.mxu0 0
  %1043 = vmatprep.subr.bf16.mxu0 0
  %1044 = vmatpush1.bf16.msra.mxu0 0
  %1045 = vmatprep.subr.bf16.mxu0 0
  %1046 = vmatpush1.bf16.msra.mxu0 0
  %1047 = vmatprep.subr.bf16.mxu0 0
  %1048 = vmatpush1.bf16.msra.mxu0 0
  %1049 = vmatprep.subr.bf16.mxu0 0
  %1050 = vmatpush1.bf16.msra.mxu0 0
  %1051 = vmatprep.subr.bf16.mxu0 0
  %1052 = vmatpush1.bf16.msra.mxu0 0
  %1053 = vmatprep.subr.bf16.mxu0 0
  %1054 = vmatpush1.bf16.msra.mxu0 0
  %1055 = vmatprep.subr.bf16.mxu0 0
  %1056 = vmatpush1.bf16.msra.mxu0 0
  %1057 = vmatprep.subr.bf16.mxu0 0
  %1058 = vmatpush1.bf16.msra.mxu0 0
  %1059 = vmatprep.subr.bf16.mxu0 0
  %1060 = vmatpush1.bf16.msra.mxu0 0
  %1061 = vmatprep.subr.bf16.mxu0 0
  %1062 = vmatpush1.bf16.msra.mxu0 0
  %1063 = vmatprep.subr.bf16.mxu0 0
  %1064 = vmatpush1.bf16.msra.mxu0 0
  %1065 = vmatprep.mubr.bf16.mxu0 0
  %1066 = vmatmul.mubr.bf16.gmra.mrb[0].mxu0 %v1031
  %v1067 = vpop.f32.mrb[0].mxu0
  %v1068 = vadd.f32 0.0, %v1067
  %v1069 = vpop.f32.mrb[0].mxu0
  %v1070 = vpop.f32.mrb[0].mxu0
  %v1071 = vpop.f32.mrb[0].mxu0
  %1072 = vdwg.mxu0
  %v1073 = vadd.f32 %v283, %v1068
  %v1074 = vxor.u32 %v1027, 2147483648
  %v1075 = vmul.f32 %v1074, 1.442695
  %v1076 = vpow.pop %v1075
  %v1077 = vadd.f32 %v1076, 1.0
  %v1078 = vrcp.pop %v1077
  %v1079 = vmul.f32 1.0, %v1078
  %v1080 = vtanh.pop %v1027
  %v1081 = vmul.f32 %v1079, %v935
  %1083 = vrot.lane.b32.xlu0 %v1080, 32
  %v1084 = vpop.permute.xlu0 %1083
  %v1086 = vmul.f32 %v1079, %v1084
  %1088 = vrot.lane.b32.xlu0 %v1086, 32
  %v1089 = vpop.permute.xlu0 %1088
  %v1091 = vadd.f32 %v1081, %v1089
  %v1092 = vtanh.pop %v1091
  %1094 = vrot.lane.b32.xlu0 %v1092, 32
  %v1095 = vpop.permute.xlu0 %1094
  %v1097 = vmul.f32 %v1079, %v1095
  %v1098 = vxor.u32 %v1073, 2147483648
  %v1099 = vmul.f32 %v1098, 1.442695
  %v1100 = vpow.pop %v1099
  %v1101 = vadd.f32 %v1100, 1.0
  %v1102 = vrcp.pop %v1101
  %v1103 = vmul.f32 1.0, %v1102
  %v1104 = vtanh.pop %v1073
  %v1105 = vmul.f32 %v1103, %v959
  %1107 = vrot.lane.b32.xlu0 %v1104, 32
  %v1108 = vpop.permute.xlu0 %1107
  %v1110 = vmul.f32 %v1103, %v1108
  %1112 = vrot.lane.b32.xlu0 %v1110, 32
  %v1113 = vpop.permute.xlu0 %1112
  %v1115 = vadd.f32 %v1105, %v1113
  %v1116 = vtanh.pop %v1115
  %1118 = vrot.lane.b32.xlu0 %v1116, 32
  %v1119 = vpop.permute.xlu0 %1118
  %v1121 = vmul.f32 %v1103, %v1119
  %v1122 = vpack.c.bf16 %v1097, %v1097
  %v1124 = vunpack.c.l.b16 %v1122
  %v1125 = vpack.c.b16 %v1124, %v1124
  %1126 = vrot.lane.b32.xlu0 %v1125, 64
  %v1127 = vpop.permute.xlu0 %1126
  %1129 = vst.msk [vmem:[%s5 + $0x10] sm:$0xf] %vm504, %v1127
  %v1130 = vpack.c.bf16 %v1121, %v1121
  %v1132 = vunpack.c.l.b16 %v1130
  %v1133 = vpack.c.b16 %v1132, %v1132
  %1134 = vrot.lane.b32.xlu0 %v1133, 64
  %v1135 = vpop.permute.xlu0 %1134
  %1137 = vst.msk [vmem:[%s55 + $0xc] sm:$0xf] %vm504, %v1135
  %1138 = vrot.lane.b32.xlu0 %v1122, 64
  %v1139 = vpop.permute.xlu0 %1138
  %v1141 = vsel %vm339, %v1139, 0
  %1143 = vmatprep.subr.bf16.mxu0 0
  %1144 = vmatpush1.bf16.msra.mxu0 %v335
  %1145 = vmatprep.subr.bf16.mxu0 0
  %1146 = vmatpush1.bf16.msra.mxu0 %v336
  %1147 = vmatprep.subr.bf16.mxu0 0
  %1148 = vmatpush1.bf16.msra.mxu0 0
  %1149 = vmatprep.subr.bf16.mxu0 0
  %1150 = vmatpush1.bf16.msra.mxu0 0
  %1151 = vmatprep.subr.bf16.mxu0 0
  %1152 = vmatpush1.bf16.msra.mxu0 0
  %1153 = vmatprep.subr.bf16.mxu0 0
  %1154 = vmatpush1.bf16.msra.mxu0 0
  %1155 = vmatprep.subr.bf16.mxu0 0
  %1156 = vmatpush1.bf16.msra.mxu0 0
  %1157 = vmatprep.subr.bf16.mxu0 0
  %1158 = vmatpush1.bf16.msra.mxu0 0
  %1159 = vmatprep.subr.bf16.mxu0 0
  %1160 = vmatpush1.bf16.msra.mxu0 0
  %1161 = vmatprep.subr.bf16.mxu0 0
  %1162 = vmatpush1.bf16.msra.mxu0 0
  %1163 = vmatprep.subr.bf16.mxu0 0
  %1164 = vmatpush1.bf16.msra.mxu0 0
  %1165 = vmatprep.subr.bf16.mxu0 0
  %1166 = vmatpush1.bf16.msra.mxu0 0
  %1167 = vmatprep.subr.bf16.mxu0 0
  %1168 = vmatpush1.bf16.msra.mxu0 0
  %1169 = vmatprep.subr.bf16.mxu0 0
  %1170 = vmatpush1.bf16.msra.mxu0 0
  %1171 = vmatprep.subr.bf16.mxu0 0
  %1172 = vmatpush1.bf16.msra.mxu0 0
  %1173 = vmatprep.subr.bf16.mxu0 0
  %1174 = vmatpush1.bf16.msra.mxu0 0
  %1175 = vmatprep.mubr.bf16.mxu0 0
  %1176 = vmatmul.mubr.bf16.gmra.mrb[0].mxu0 %v1141
  %v1177 = vpop.f32.mrb[0].mxu0
  %v1178 = vadd.f32 0.0, %v1177
  %v1179 = vpop.f32.mrb[0].mxu0
  %v1180 = vpop.f32.mrb[0].mxu0
  %v1181 = vpop.f32.mrb[0].mxu0
  %1182 = vdwg.mxu0
  %v1183 = vadd.f32 %v169, %v1178
  %1184 = vrot.lane.b32.xlu0 %v1130, 64
  %v1185 = vpop.permute.xlu0 %1184
  %v1187 = vsel %vm339, %v1185, 0
  %1189 = vmatprep.subr.bf16.mxu0 0
  %1190 = vmatpush1.bf16.msra.mxu0 %v393
  %1191 = vmatprep.subr.bf16.mxu0 0
  %1192 = vmatpush1.bf16.msra.mxu0 %v394
  %1193 = vmatprep.subr.bf16.mxu0 0
  %1194 = vmatpush1.bf16.msra.mxu0 0
  %1195 = vmatprep.subr.bf16.mxu0 0
  %1196 = vmatpush1.bf16.msra.mxu0 0
  %1197 = vmatprep.subr.bf16.mxu0 0
  %1198 = vmatpush1.bf16.msra.mxu0 0
  %1199 = vmatprep.subr.bf16.mxu0 0
  %1200 = vmatpush1.bf16.msra.mxu0 0
  %1201 = vmatprep.subr.bf16.mxu0 0
  %1202 = vmatpush1.bf16.msra.mxu0 0
  %1203 = vmatprep.subr.bf16.mxu0 0
  %1204 = vmatpush1.bf16.msra.mxu0 0
  %1205 = vmatprep.subr.bf16.mxu0 0
  %1206 = vmatpush1.bf16.msra.mxu0 0
  %1207 = vmatprep.subr.bf16.mxu0 0
  %1208 = vmatpush1.bf16.msra.mxu0 0
  %1209 = vmatprep.subr.bf16.mxu0 0
  %1210 = vmatpush1.bf16.msra.mxu0 0
  %1211 = vmatprep.subr.bf16.mxu0 0
  %1212 = vmatpush1.bf16.msra.mxu0 0
  %1213 = vmatprep.subr.bf16.mxu0 0
  %1214 = vmatpush1.bf16.msra.mxu0 0
  %1215 = vmatprep.subr.bf16.mxu0 0
  %1216 = vmatpush1.bf16.msra.mxu0 0
  %1217 = vmatprep.subr.bf16.mxu0 0
  %1218 = vmatpush1.bf16.msra.mxu0 0
  %1219 = vmatprep.subr.bf16.mxu0 0
  %1220 = vmatpush1.bf16.msra.mxu0 0
  %1221 = vmatprep.mubr.bf16.mxu0 0
  %1222 = vmatmul.mubr.bf16.gmra.mrb[0].mxu0 %v1187
  %v1223 = vpop.f32.mrb[0].mxu0
  %v1224 = vadd.f32 0.0, %v1223
  %v1225 = vpop.f32.mrb[0].mxu0
  %v1226 = vpop.f32.mrb[0].mxu0
  %v1227 = vpop.f32.mrb[0].mxu0
  %1228 = vdwg.mxu0
  %v1229 = vadd.f32 %v280, %v1224
  %v1230 = vxor.u32 %v1183, 2147483648
  %v1231 = vmul.f32 %v1230, 1.442695
  %v1232 = vpow.pop %v1231
  %v1233 = vadd.f32 %v1232, 1.0
  %v1234 = vrcp.pop %v1233
  %v1235 = vmul.f32 1.0, %v1234
  %v1236 = vtanh.pop %v1183
  %v1237 = vmul.f32 %v1235, %v1091
  %1239 = vrot.lane.b32.xlu0 %v1236, 32
  %v1240 = vpop.permute.xlu0 %1239
  %v1242 = vmul.f32 %v1235, %v1240
  %1244 = vrot.lane.b32.xlu0 %v1242, 32
  %v1245 = vpop.permute.xlu0 %1244
  %v1247 = vadd.f32 %v1237, %v1245
  %v1248 = vtanh.pop %v1247
  %1250 = vrot.lane.b32.xlu0 %v1248, 32
  %v1251 = vpop.permute.xlu0 %1250
  %v1253 = vmul.f32 %v1235, %v1251
  %v1254 = vxor.u32 %v1229, 2147483648
  %v1255 = vmul.f32 %v1254, 1.442695
  %v1256 = vpow.pop %v1255
  %v1257 = vadd.f32 %v1256, 1.0
  %v1258 = vrcp.pop %v1257
  %v1259 = vmul.f32 1.0, %v1258
  %v1260 = vtanh.pop %v1229
  %v1261 = vmul.f32 %v1259, %v1115
  %1263 = vrot.lane.b32.xlu0 %v1260, 32
  %v1264 = vpop.permute.xlu0 %1263
  %v1266 = vmul.f32 %v1259, %v1264
  %1268 = vrot.lane.b32.xlu0 %v1266, 32
  %v1269 = vpop.permute.xlu0 %1268
  %v1271 = vadd.f32 %v1261, %v1269
  %v1272 = vtanh.pop %v1271
  %1274 = vrot.lane.b32.xlu0 %v1272, 32
  %v1275 = vpop.permute.xlu0 %1274
  %v1277 = vmul.f32 %v1259, %v1275
  %v1278 = vpack.c.bf16 %v1253, %v1253
  %v1280 = vunpack.c.l.b16 %v1278
  %v1281 = vpack.c.b16 %v1280, %v1280
  %1282 = vrot.lane.b32.xlu0 %v1281, 64
  %v1283 = vpop.permute.xlu0 %1282
  %1285 = vst.msk [vmem:[%s5 + $0x14] sm:$0xf] %vm504, %v1283
  %v1286 = vpack.c.bf16 %v1277, %v1277
  %v1288 = vunpack.c.l.b16 %v1286
  %v1289 = vpack.c.b16 %v1288, %v1288
  %1290 = vrot.lane.b32.xlu0 %v1289, 64
  %v1291 = vpop.permute.xlu0 %1290
  %1293 = vst.msk [vmem:[%s55 + $0x8] sm:$0xf] %vm504, %v1291
  %1294 = vrot.lane.b32.xlu0 %v1278, 64
  %v1295 = vpop.permute.xlu0 %1294
  %v1297 = vsel %vm339, %v1295, 0
  %1299 = vmatprep.subr.bf16.mxu0 0
  %1300 = vmatpush1.bf16.msra.mxu0 %v335
  %1301 = vmatprep.subr.bf16.mxu0 0
  %1302 = vmatpush1.bf16.msra.mxu0 %v336
  %1303 = vmatprep.subr.bf16.mxu0 0
  %1304 = vmatpush1.bf16.msra.mxu0 0
  %1305 = vmatprep.subr.bf16.mxu0 0
  %1306 = vmatpush1.bf16.msra.mxu0 0
  %1307 = vmatprep.subr.bf16.mxu0 0
  %1308 = vmatpush1.bf16.msra.mxu0 0
  %1309 = vmatprep.subr.bf16.mxu0 0
  %1310 = vmatpush1.bf16.msra.mxu0 0
  %1311 = vmatprep.subr.bf16.mxu0 0
  %1312 = vmatpush1.bf16.msra.mxu0 0
  %1313 = vmatprep.subr.bf16.mxu0 0
  %1314 = vmatpush1.bf16.msra.mxu0 0
  %1315 = vmatprep.subr.bf16.mxu0 0
  %1316 = vmatpush1.bf16.msra.mxu0 0
  %1317 = vmatprep.subr.bf16.mxu0 0
  %1318 = vmatpush1.bf16.msra.mxu0 0
  %1319 = vmatprep.subr.bf16.mxu0 0
  %1320 = vmatpush1.bf16.msra.mxu0 0
  %1321 = vmatprep.subr.bf16.mxu0 0
  %1322 = vmatpush1.bf16.msra.mxu0 0
  %1323 = vmatprep.subr.bf16.mxu0 0
  %1324 = vmatpush1.bf16.msra.mxu0 0
  %1325 = vmatprep.subr.bf16.mxu0 0
  %1326 = vmatpush1.bf16.msra.mxu0 0
  %1327 = vmatprep.subr.bf16.mxu0 0
  %1328 = vmatpush1.bf16.msra.mxu0 0
  %1329 = vmatprep.subr.bf16.mxu0 0
  %1330 = vmatpush1.bf16.msra.mxu0 0
  %1331 = vmatprep.mubr.bf16.mxu0 0
  %1332 = vmatmul.mubr.bf16.gmra.mrb[0].mxu0 %v1297
  %v1333 = vpop.f32.mrb[0].mxu0
  %v1334 = vadd.f32 0.0, %v1333
  %v1335 = vpop.f32.mrb[0].mxu0
  %v1336 = vpop.f32.mrb[0].mxu0
  %v1337 = vpop.f32.mrb[0].mxu0
  %1338 = vdwg.mxu0
  %v1339 = vadd.f32 %v174, %v1334
  %1340 = vrot.lane.b32.xlu0 %v1286, 64
  %v1341 = vpop.permute.xlu0 %1340
  %v1343 = vsel %vm339, %v1341, 0
  %1345 = vmatprep.subr.bf16.mxu0 0
  %1346 = vmatpush1.bf16.msra.mxu0 %v393
  %1347 = vmatprep.subr.bf16.mxu0 0
  %1348 = vmatpush1.bf16.msra.mxu0 %v394
  %1349 = vmatprep.subr.bf16.mxu0 0
  %1350 = vmatpush1.bf16.msra.mxu0 0
  %1351 = vmatprep.subr.bf16.mxu0 0
  %1352 = vmatpush1.bf16.msra.mxu0 0
  %1353 = vmatprep.subr.bf16.mxu0 0
  %1354 = vmatpush1.bf16.msra.mxu0 0
  %1355 = vmatprep.subr.bf16.mxu0 0
  %1356 = vmatpush1.bf16.msra.mxu0 0
  %1357 = vmatprep.subr.bf16.mxu0 0
  %1358 = vmatpush1.bf16.msra.mxu0 0
  %1359 = vmatprep.subr.bf16.mxu0 0
  %1360 = vmatpush1.bf16.msra.mxu0 0
  %1361 = vmatprep.subr.bf16.mxu0 0
  %1362 = vmatpush1.bf16.msra.mxu0 0
  %1363 = vmatprep.subr.bf16.mxu0 0
  %1364 = vmatpush1.bf16.msra.mxu0 0
  %1365 = vmatprep.subr.bf16.mxu0 0
  %1366 = vmatpush1.bf16.msra.mxu0 0
  %1367 = vmatprep.subr.bf16.mxu0 0
  %1368 = vmatpush1.bf16.msra.mxu0 0
  %1369 = vmatprep.subr.bf16.mxu0 0
  %1370 = vmatpush1.bf16.msra.mxu0 0
  %1371 = vmatprep.subr.bf16.mxu0 0
  %1372 = vmatpush1.bf16.msra.mxu0 0
  %1373 = vmatprep.subr.bf16.mxu0 0
  %1374 = vmatpush1.bf16.msra.mxu0 0
  %1375 = vmatprep.subr.bf16.mxu0 0
  %1376 = vmatpush1.bf16.msra.mxu0 0
  %1377 = vmatprep.mubr.bf16.mxu0 0
  %1378 = vmatmul.mubr.bf16.gmra.mrb[0].mxu0 %v1343
  %v1379 = vpop.f32.mrb[0].mxu0
  %v1380 = vadd.f32 0.0, %v1379
  %v1381 = vpop.f32.mrb[0].mxu0
  %v1382 = vpop.f32.mrb[0].mxu0
  %v1383 = vpop.f32.mrb[0].mxu0
  %1384 = vdwg.mxu0
  %v1385 = vadd.f32 %v275, %v1380
  %v1386 = vxor.u32 %v1339, 2147483648
  %v1387 = vmul.f32 %v1386, 1.442695
  %v1388 = vpow.pop %v1387
  %v1389 = vadd.f32 %v1388, 1.0
  %v1390 = vrcp.pop %v1389
  %v1391 = vmul.f32 1.0, %v1390
  %v1392 = vtanh.pop %v1339
  %v1393 = vmul.f32 %v1391, %v1247
  %1395 = vrot.lane.b32.xlu0 %v1392, 32
  %v1396 = vpop.permute.xlu0 %1395
  %v1398 = vmul.f32 %v1391, %v1396
  %1400 = vrot.lane.b32.xlu0 %v1398, 32
  %v1401 = vpop.permute.xlu0 %1400
  %v1403 = vadd.f32 %v1393, %v1401
  %v1404 = vtanh.pop %v1403
  %1406 = vrot.lane.b32.xlu0 %v1404, 32
  %v1407 = vpop.permute.xlu0 %1406
  %v1409 = vmul.f32 %v1391, %v1407
  %v1410 = vxor.u32 %v1385, 2147483648
  %v1411 = vmul.f32 %v1410, 1.442695
  %v1412 = vpow.pop %v1411
  %v1413 = vadd.f32 %v1412, 1.0
  %v1414 = vrcp.pop %v1413
  %v1415 = vmul.f32 1.0, %v1414
  %v1416 = vtanh.pop %v1385
  %v1417 = vmul.f32 %v1415, %v1271
  %1419 = vrot.lane.b32.xlu0 %v1416, 32
  %v1420 = vpop.permute.xlu0 %1419
  %v1422 = vmul.f32 %v1415, %v1420
  %1424 = vrot.lane.b32.xlu0 %v1422, 32
  %v1425 = vpop.permute.xlu0 %1424
  %v1427 = vadd.f32 %v1417, %v1425
  %v1428 = vtanh.pop %v1427
  %1430 = vrot.lane.b32.xlu0 %v1428, 32
  %v1431 = vpop.permute.xlu0 %1430
  %v1433 = vmul.f32 %v1415, %v1431
  %v1434 = vpack.c.bf16 %v1409, %v1409
  %v1436 = vunpack.c.l.b16 %v1434
  %v1437 = vpack.c.b16 %v1436, %v1436
  %1438 = vrot.lane.b32.xlu0 %v1437, 64
  %v1439 = vpop.permute.xlu0 %1438
  %1441 = vst.msk [vmem:[%s5 + $0x18] sm:$0xf] %vm504, %v1439
  %v1442 = vpack.c.bf16 %v1433, %v1433
  %v1444 = vunpack.c.l.b16 %v1442
  %v1445 = vpack.c.b16 %v1444, %v1444
  %1446 = vrot.lane.b32.xlu0 %v1445, 64
  %v1447 = vpop.permute.xlu0 %1446
  %1449 = vst.msk [vmem:[%s55 + $0x4] sm:$0xf] %vm504, %v1447
  %1450 = vrot.lane.b32.xlu0 %v1434, 64
  %v1451 = vpop.permute.xlu0 %1450
  %v1453 = vsel %vm339, %v1451, 0
  %1455 = vmatprep.subr.bf16.mxu0 0
  %1456 = vmatpush1.bf16.msra.mxu0 %v335
  %1457 = vmatprep.subr.bf16.mxu0 0
  %1458 = vmatpush1.bf16.msra.mxu0 %v336
  %1459 = vmatprep.subr.bf16.mxu0 0
  %1460 = vmatpush1.bf16.msra.mxu0 0
  %1461 = vmatprep.subr.bf16.mxu0 0
  %1462 = vmatpush1.bf16.msra.mxu0 0
  %1463 = vmatprep.subr.bf16.mxu0 0
  %1464 = vmatpush1.bf16.msra.mxu0 0
  %1465 = vmatprep.subr.bf16.mxu0 0
  %1466 = vmatpush1.bf16.msra.mxu0 0
  %1467 = vmatprep.subr.bf16.mxu0 0
  %1468 = vmatpush1.bf16.msra.mxu0 0
  %1469 = vmatprep.subr.bf16.mxu0 0
  %1470 = vmatpush1.bf16.msra.mxu0 0
  %1471 = vmatprep.subr.bf16.mxu0 0
  %1472 = vmatpush1.bf16.msra.mxu0 0
  %1473 = vmatprep.subr.bf16.mxu0 0
  %1474 = vmatpush1.bf16.msra.mxu0 0
  %1475 = vmatprep.subr.bf16.mxu0 0
  %1476 = vmatpush1.bf16.msra.mxu0 0
  %1477 = vmatprep.subr.bf16.mxu0 0
  %1478 = vmatpush1.bf16.msra.mxu0 0
  %1479 = vmatprep.subr.bf16.mxu0 0
  %1480 = vmatpush1.bf16.msra.mxu0 0
  %1481 = vmatprep.subr.bf16.mxu0 0
  %1482 = vmatpush1.bf16.msra.mxu0 0
  %1483 = vmatprep.subr.bf16.mxu0 0
  %1484 = vmatpush1.bf16.msra.mxu0 0
  %1485 = vmatprep.subr.bf16.mxu0 0
  %1486 = vmatpush1.bf16.msra.mxu0 0
  %1487 = vmatprep.mubr.bf16.mxu0 0
  %1488 = vmatmul.mubr.bf16.gmra.mrb[0].mxu0 %v1453
  %v1489 = vpop.f32.mrb[0].mxu0
  %v1490 = vadd.f32 0.0, %v1489
  %v1491 = vpop.f32.mrb[0].mxu0
  %v1492 = vpop.f32.mrb[0].mxu0
  %v1493 = vpop.f32.mrb[0].mxu0
  %1494 = vdwg.mxu0
  %v1495 = vadd.f32 %v177, %v1490
  %1496 = vrot.lane.b32.xlu0 %v1442, 64
  %v1497 = vpop.permute.xlu0 %1496
  %v1499 = vsel %vm339, %v1497, 0
  %1501 = vmatprep.subr.bf16.mxu0 0
  %1502 = vmatpush1.bf16.msra.mxu0 %v393
  %1503 = vmatprep.subr.bf16.mxu0 0
  %1504 = vmatpush1.bf16.msra.mxu0 %v394
  %1505 = vmatprep.subr.bf16.mxu0 0
  %1506 = vmatpush1.bf16.msra.mxu0 0
  %1507 = vmatprep.subr.bf16.mxu0 0
  %1508 = vmatpush1.bf16.msra.mxu0 0
  %1509 = vmatprep.subr.bf16.mxu0 0
  %1510 = vmatpush1.bf16.msra.mxu0 0
  %1511 = vmatprep.subr.bf16.mxu0 0
  %1512 = vmatpush1.bf16.msra.mxu0 0
  %1513 = vmatprep.subr.bf16.mxu0 0
  %1514 = vmatpush1.bf16.msra.mxu0 0
  %1515 = vmatprep.subr.bf16.mxu0 0
  %1516 = vmatpush1.bf16.msra.mxu0 0
  %1517 = vmatprep.subr.bf16.mxu0 0
  %1518 = vmatpush1.bf16.msra.mxu0 0
  %1519 = vmatprep.subr.bf16.mxu0 0
  %1520 = vmatpush1.bf16.msra.mxu0 0
  %1521 = vmatprep.subr.bf16.mxu0 0
  %1522 = vmatpush1.bf16.msra.mxu0 0
  %1523 = vmatprep.subr.bf16.mxu0 0
  %1524 = vmatpush1.bf16.msra.mxu0 0
  %1525 = vmatprep.subr.bf16.mxu0 0
  %1526 = vmatpush1.bf16.msra.mxu0 0
  %1527 = vmatprep.subr.bf16.mxu0 0
  %1528 = vmatpush1.bf16.msra.mxu0 0
  %1529 = vmatprep.subr.bf16.mxu0 0
  %1530 = vmatpush1.bf16.msra.mxu0 0
  %1531 = vmatprep.subr.bf16.mxu0 0
  %1532 = vmatpush1.bf16.msra.mxu0 0
  %1533 = vmatprep.mubr.bf16.mxu0 0
  %1534 = vmatmul.mubr.bf16.gmra.mrb[0].mxu0 %v1499
  %v1535 = vpop.f32.mrb[0].mxu0
  %v1536 = vadd.f32 0.0, %v1535
  %v1537 = vpop.f32.mrb[0].mxu0
  %v1538 = vpop.f32.mrb[0].mxu0
  %v1539 = vpop.f32.mrb[0].mxu0
  %1540 = vdwg.mxu0
  %v1541 = vadd.f32 %v272, %v1536
  %v1542 = vxor.u32 %v1495, 2147483648
  %v1543 = vmul.f32 %v1542, 1.442695
  %v1544 = vpow.pop %v1543
  %v1545 = vadd.f32 %v1544, 1.0
  %v1546 = vrcp.pop %v1545
  %v1547 = vmul.f32 1.0, %v1546
  %v1548 = vtanh.pop %v1495
  %v1549 = vmul.f32 %v1547, %v1403
  %1551 = vrot.lane.b32.xlu0 %v1548, 32
  %v1552 = vpop.permute.xlu0 %1551
  %v1554 = vmul.f32 %v1547, %v1552
  %1556 = vrot.lane.b32.xlu0 %v1554, 32
  %v1557 = vpop.permute.xlu0 %1556
  %v1559 = vadd.f32 %v1549, %v1557
  %v1560 = vtanh.pop %v1559
  %1562 = vrot.lane.b32.xlu0 %v1560, 32
  %v1563 = vpop.permute.xlu0 %1562
  %v1565 = vmul.f32 %v1547, %v1563
  %v1566 = vxor.u32 %v1541, 2147483648
  %v1567 = vmul.f32 %v1566, 1.442695
  %v1568 = vpow.pop %v1567
  %v1569 = vadd.f32 %v1568, 1.0
  %v1570 = vrcp.pop %v1569
  %v1571 = vmul.f32 1.0, %v1570
  %v1572 = vtanh.pop %v1541
  %v1573 = vmul.f32 %v1571, %v1427
  %1575 = vrot.lane.b32.xlu0 %v1572, 32
  %v1576 = vpop.permute.xlu0 %1575
  %v1578 = vmul.f32 %v1571, %v1576
  %1580 = vrot.lane.b32.xlu0 %v1578, 32
  %v1581 = vpop.permute.xlu0 %1580
  %v1583 = vadd.f32 %v1573, %v1581
  %v1584 = vtanh.pop %v1583
  %1586 = vrot.lane.b32.xlu0 %v1584, 32
  %v1587 = vpop.permute.xlu0 %1586
  %v1589 = vmul.f32 %v1571, %v1587
  %v1590 = vpack.c.bf16 %v1565, %v1565
  %v1592 = vunpack.c.l.b16 %v1590
  %v1593 = vpack.c.b16 %v1592, %v1592
  %1594 = vrot.lane.b32.xlu0 %v1593, 64
  %v1595 = vpop.permute.xlu0 %1594
  %1597 = vst.msk [vmem:[%s5 + $0x1c] sm:$0xf] %vm504, %v1595
  %v1598 = vpack.c.bf16 %v1589, %v1589
  %v1600 = vunpack.c.l.b16 %v1598
  %v1601 = vpack.c.b16 %v1600, %v1600
  %1602 = vrot.lane.b32.xlu0 %v1601, 64
  %v1603 = vpop.permute.xlu0 %1602
  %1605 = vst.msk [vmem:[%s55] sm:$0xf] %vm504, %v1603
  %1607 = vrot.lane.b32.xlu0 %v1565, 64
  %v1608 = vpop.permute.xlu0 %1607
  %1610 = vst.msk [vmem:[#allocation2] sm:$0xff] %vm339, %v1608
  %1612 = vrot.lane.b32.xlu0 %v1559, 96
  %v1613 = vpop.permute.xlu0 %1612
  %1615 = vst.msk [vmem:[#allocation3] sm:$0xff] %vm339, %v1613
  %1617 = vrot.lane.b32.xlu0 %v1589, 64
  %v1618 = vpop.permute.xlu0 %1617
  %1620 = vst.msk [vmem:[%s322] sm:$0xff] %vm339, %v1618
  %1622 = vrot.lane.b32.xlu0 %v1583, 96
  %v1623 = vpop.permute.xlu0 %1622
  %1625 = vst.msk [vmem:[%s324] sm:$0xff] %vm339, %v1623
  %s1626 = ssub.s32 0, 0
  %s1627 = smul.u32 8, %s1626
  %p1628 = scmp.lt.s32.totalorder %s1627, 7
  %s1629 = scalar_select %p1628, %s1627, 7
  %s1630 = smul.addr %s1629, 4
  %s1631 = scalar_lea.vmem %s6, %s1630
  // Predicated region
  $region26: #{lstm_classifier_forward.3} parent=0 // pred_check
    _
  $region27: #{lstm_classifier_forward.3} parent=0 // pred_check_branch
    %1633 = sbr.rel (0) target = $region29
  $region28: #{lstm_classifier_forward.3} parent=0 // pred_region
    _
  $region29: #{lstm_classifier_forward.3} parent=0 // pred_fallthru
    _
  // Predicated region
  $region30: #{lstm_classifier_forward.3} parent=0 // pred_check
    _
  $region31: #{lstm_classifier_forward.3} parent=0 // pred_check_branch
    %1635 = sbr.rel (0) target = $region33
  $region32: #{lstm_classifier_forward.3} parent=0 // pred_region
    %s1636 = ssub.s32 0, 0
    %s1637 = smul.u32 8, %s1636
  $region33: #{lstm_classifier_forward.3} parent=0 // pred_fallthru
    _
  // Predicated region
  $region34: #{lstm_classifier_forward.3} parent=0 // pred_check
    _
  $region35: #{lstm_classifier_forward.3} parent=0 // pred_check_branch
    %1639 = sbr.rel (0) target = $region37
  $region36: #{lstm_classifier_forward.3} parent=0 // pred_region
    _
  $region37: #{lstm_classifier_forward.3} parent=0 // pred_fallthru
    _
  // Predicated region
  $region38: #{lstm_classifier_forward.3} parent=0 // pred_check
    _
  $region39: #{lstm_classifier_forward.3} parent=0 // pred_check_branch
    %1641 = sbr.rel (0) target = $region41
  $region40: #{lstm_classifier_forward.3} parent=0 // pred_region
    %s1642 = ssub.s32 0, 0
    %s1643 = smul.u32 8, %s1642
    %p1644 = scmp.lt.s32.totalorder %s1643, 7
    %s1645 = scalar_select %p1644, %s1643, 7
    %s1646 = smul.addr %s1645, 4
    %s1647 = scalar_lea.vmem %s6, %s1646
  $region41: #{lstm_classifier_forward.3} parent=0 // pred_fallthru
    _

// kernel: lstm_classifier_forward.4
$region0: #{lstm_classifier_forward.4}
  #allocation0 [shape = 'u32[]', space=smem, size = 0x4, offset = 0x4, fixed_abs, tag = 'smem constant byte address 0x4 - core index']
  #allocation1 [shape = 'u32[144,128]{1,0:T(1,128)}', space=vmem, size = 0x12000, scoped, tag = 'internal scratch']
  #allocation2 [shape = 'f32[2,8,32]{2,1,0:T(8,128)}', space=vmem, size = 0x2000, scoped, tag = 'scratch operand']
  #allocation3 [shape = 'f32[2,8,32]{2,1,0:T(8,128)}', space=vmem, size = 0x2000, scoped, tag = 'scratch operand']
  %s0 = inlined_call_operand.vmem [shape: bf16[64,32], index: 0, kind: input, shape index: {}, may-alias: {0,2}]
  %s1 = inlined_call_operand.vmem [shape: bf16[64,32], index: 1, kind: input, shape index: {}, may-alias: {1,3}]
  %s2 = inlined_call_operand.vmem [shape: bf16[64,32], index: 2, kind: input, shape index: {}, may-alias: {0,2}]
  %s3 = inlined_call_operand.vmem [shape: bf16[64,32], index: 3, kind: input, shape index: {}, may-alias: {1,3}]
  %s4 = inlined_call_operand.vmem [shape: bf16[2,32,128], index: 4, kind: input, shape index: {}]
  %s5 = inlined_call_operand.vmem [shape: bf16[2,32,128], index: 5, kind: input, shape index: {}]
  %s6 = inlined_call_operand.vmem [shape: bf16[2,32,128], index: 6, kind: input, shape index: {}]
  %s7 = inlined_call_operand.vmem [shape: f32[2,1,128], index: 7, kind: input, shape index: {}]
  %s8 = inlined_call_operand.vmem [shape: bf16[64,32], index: 8, kind: output, shape index: {0}]
  %s9 = inlined_call_operand.vmem [shape: bf16[64,32], index: 9, kind: output, shape index: {1}]
  %10 = xla_tuple %s8, %s9
  %s11 = sld [smem:[#allocation0]]
  $region54: #{lstm_classifier_forward.4} parent=0
    _
  %s13 = ssub.s32 1, %s11
  %s14 = scalar_select 0, %s13, %s11
  // Predicated region
  $region2: #{lstm_classifier_forward.4} parent=0 // pred_check
    _
  $region3: #{lstm_classifier_forward.4} parent=0 // pred_check_branch
    %16 = sbr.rel (0) target = $region5
  $region4: #{lstm_classifier_forward.4} parent=0 // pred_region
    _
  $region5: #{lstm_classifier_forward.4} parent=0 // pred_fallthru
    _
  // Predicated region
  $region6: #{lstm_classifier_forward.4} parent=0 // pred_check
    _
  $region7: #{lstm_classifier_forward.4} parent=0 // pred_check_branch
    %18 = sbr.rel (0) target = $region9
  $region8: #{lstm_classifier_forward.4} parent=0 // pred_region
    _
  $region9: #{lstm_classifier_forward.4} parent=0 // pred_fallthru
    _
  // Predicated region
  $region10: #{lstm_classifier_forward.4} parent=0 // pred_check
    _
  $region11: #{lstm_classifier_forward.4} parent=0 // pred_check_branch
    %20 = sbr.rel (0) target = $region13
  $region12: #{lstm_classifier_forward.4} parent=0 // pred_region
    %s21 = ssub.s32 0, 0
    %s22 = smul.u32 8, %s21
    %p23 = scmp.lt.s32.totalorder %s22, 7
    %s24 = scalar_select %p23, %s22, 7
    %s25 = smul.addr %s24, 4
    %s26 = scalar_lea.vmem %s2, %s25
    %s27 = ssub.s32 0, 0
    %s28 = smul.u32 8, %s27
  $region13: #{lstm_classifier_forward.4} parent=0 // pred_fallthru
    _
  // Predicated region
  $region14: #{lstm_classifier_forward.4} parent=0 // pred_check
    _
  $region15: #{lstm_classifier_forward.4} parent=0 // pred_check_branch
    %30 = sbr.rel (0) target = $region17
  $region16: #{lstm_classifier_forward.4} parent=0 // pred_region
    %s31 = ssub.s32 0, 0
    %s32 = smul.u32 8, %s31
    %p33 = scmp.lt.s32.totalorder %s32, 7
    %s34 = scalar_select %p33, %s32, 7
    %s35 = smul.addr %s34, 4
    %s36 = scalar_lea.vmem %s3, %s35
    %s37 = ssub.s32 0, 0
    %s38 = smul.u32 8, %s37
  $region17: #{lstm_classifier_forward.4} parent=0 // pred_fallthru
    _
  // Predicated region
  $region18: #{lstm_classifier_forward.4} parent=0 // pred_check
    _
  $region19: #{lstm_classifier_forward.4} parent=0 // pred_check_branch
    %40 = sbr.rel (0) target = $region21
  $region20: #{lstm_classifier_forward.4} parent=0 // pred_region
    _
  $region21: #{lstm_classifier_forward.4} parent=0 // pred_fallthru
    _
  // Predicated region
  $region22: #{lstm_classifier_forward.4} parent=0 // pred_check
    _
  $region23: #{lstm_classifier_forward.4} parent=0 // pred_check_branch
    %42 = sbr.rel (0) target = $region25
  $region24: #{lstm_classifier_forward.4} parent=0 // pred_region
    _
  $region25: #{lstm_classifier_forward.4} parent=0 // pred_fallthru
    _
  // Predicated region
  $region26: #{lstm_classifier_forward.4} parent=0 // pred_check
    _
  $region27: #{lstm_classifier_forward.4} parent=0 // pred_check_branch
    %44 = sbr.rel (0) target = $region29
  $region28: #{lstm_classifier_forward.4} parent=0 // pred_region
    _
  $region29: #{lstm_classifier_forward.4} parent=0 // pred_fallthru
    _
  // Predicated region
  $region30: #{lstm_classifier_forward.4} parent=0 // pred_check
    _
  $region31: #{lstm_classifier_forward.4} parent=0 // pred_check_branch
    %46 = sbr.rel (0) target = $region33
  $region32: #{lstm_classifier_forward.4} parent=0 // pred_region
    _
  $region33: #{lstm_classifier_forward.4} parent=0 // pred_fallthru
    _
  %s47 = ssub.s32 0, 0
  %s48 = smul.u32 8, %s47
  %p49 = scmp.lt.s32.totalorder %s48, 7
  %s50 = scalar_select %p49, %s48, 7
  %s51 = smul.addr %s50, 4
  %s52 = scalar_lea.vmem %s2, %s51
  %s53 = ssub.s32 0, 0
  %s54 = smul.u32 8, %s53
  %p55 = scmp.lt.s32.totalorder %s54, 7
  %s56 = scalar_select %p55, %s54, 7
  %s57 = smul.addr %s56, 4
  %s58 = scalar_lea.vmem %s3, %s57
  %s59 = ssub.s32 0, 0
  %s60 = smul.u32 8, %s59
  %p61 = scmp.lt.s32.totalorder %s60, 7
  %s62 = scalar_select %p61, %s60, 7
  %s63 = smul.addr %s62, 4
  %s64 = scalar_lea.vmem %s9, %s63
  %s65 = ssub.s32 0, 0
  %s66 = smul.u32 8, %s65
  %p67 = scmp.lt.s32.totalorder %s66, 7
  %s68 = scalar_select %p67, %s66, 7
  %s69 = smul.addr %s68, 4
  %s70 = scalar_lea.vmem %s2, %s69
  %s71 = ssub.s32 0, 0
  %s72 = smul.u32 8, %s71
  %s73 = ssub.s32 0, 0
  %s74 = smul.u32 8, %s73
  %p75 = scmp.lt.s32.totalorder %s74, 7
  %s76 = scalar_select %p75, %s74, 7
  %s77 = smul.addr %s76, 4
  %s78 = scalar_lea.vmem %s3, %s77
  %s79 = ssub.s32 0, 0
  %s80 = smul.u32 8, %s79
  %s81 = ssub.s32 0, 0
  %s82 = smul.u32 8, %s81
  %p83 = scmp.lt.s32.totalorder %s82, 7
  %s84 = scalar_select %p83, %s82, 7
  %s85 = smul.addr %s84, 4
  %s86 = scalar_lea.vmem %s9, %s85
  %s87 = ssub.s32 0, 0
  %s88 = smul.u32 8, %s87
  %v90 = vld [vmem:[%s0] sm:$0xf]
  %v91 = vld [vmem:[%s0 + $0x4] sm:$0xf]
  %v92 = vld [vmem:[%s0 + $0x8] sm:$0xf]
  %v93 = vld [vmem:[%s0 + $0xc] sm:$0xf]
  %v94 = vld [vmem:[%s0 + $0x10] sm:$0xf]
  %v95 = vld [vmem:[%s0 + $0x14] sm:$0xf]
  %v96 = vld [vmem:[%s0 + $0x18] sm:$0xf]
  %v97 = vld [vmem:[%s0 + $0x1c] sm:$0xf]
  %v98 = vld [vmem:[%s4] sm:$0xf]
  %v99 = vld [vmem:[%s4 + $0x4] sm:$0xf]
  %v100 = vld [vmem:[%s4 + $0x8] sm:$0xf]
  %v101 = vld [vmem:[%s4 + $0xc] sm:$0xf]
  %v102 = vld [vmem:[%s1] sm:$0xf]
  %v103 = vld [vmem:[%s1 + $0x4] sm:$0xf]
  %v104 = vld [vmem:[%s1 + $0x8] sm:$0xf]
  %v105 = vld [vmem:[%s1 + $0xc] sm:$0xf]
  %v106 = vld [vmem:[%s1 + $0x10] sm:$0xf]
  %v107 = vld [vmem:[%s1 + $0x14] sm:$0xf]
  %v108 = vld [vmem:[%s1 + $0x18] sm:$0xf]
  %v109 = vld [vmem:[%s1 + $0x1c] sm:$0xf]
  %v110 = vld [vmem:[%s5] sm:$0xf]
  %v111 = vld [vmem:[%s5 + $0x4] sm:$0xf]
  %v112 = vld [vmem:[%s5 + $0x8] sm:$0xf]
  %v113 = vld [vmem:[%s5 + $0xc] sm:$0xf]
  %v122 = vunpack.c.l.b16 %v102
  %v123 = vunpack.c.l.b16 %v103
  %v124 = vunpack.c.l.b16 %v104
  %v125 = vunpack.c.l.b16 %v105
  %v126 = vunpack.c.l.b16 %v106
  %v127 = vunpack.c.l.b16 %v107
  %v128 = vunpack.c.l.b16 %v108
  %v129 = vunpack.c.l.b16 %v109
  %v130 = vpack.c.b16 %v123, %v122
  %v131 = vpack.c.b16 %v125, %v124
  %v132 = vpack.c.b16 %v127, %v126
  %v133 = vpack.c.b16 %v129, %v128
  %v138 = vunpack.c.l.b16 %v110
  %v139 = vunpack.c.l.b16 %v111
  %v140 = vunpack.c.l.b16 %v112
  %v141 = vunpack.c.l.b16 %v113
  %v142 = vpack.c.b16 %v139, %v138
  %v143 = vpack.c.b16 %v141, %v140
  %vm146 = vcmask 261120
  %v148 = vsel %vm146, %v130, 0
  %v151 = vsel %vm146, %v131, 0
  %v154 = vsel %vm146, %v132, 0
  %v157 = vsel %vm146, %v133, 0
  %159 = vmatprep.subr.bf16.mxu0 0
  %160 = vmatpush1.bf16.msra.mxu0 %v142
  %161 = vmatprep.subr.bf16.mxu0 0
  %162 = vmatpush1.bf16.msra.mxu0 %v143
  %163 = vmatprep.subr.bf16.mxu0 0
  %164 = vmatpush1.bf16.msra.mxu0 0
  %165 = vmatprep.subr.bf16.mxu0 0
  %166 = vmatpush1.bf16.msra.mxu0 0
  %167 = vmatprep.subr.bf16.mxu0 0
  %168 = vmatpush1.bf16.msra.mxu0 0
  %169 = vmatprep.subr.bf16.mxu0 0
  %170 = vmatpush1.bf16.msra.mxu0 0
  %171 = vmatprep.subr.bf16.mxu0 0
  %172 = vmatpush1.bf16.msra.mxu0 0
  %173 = vmatprep.subr.bf16.mxu0 0
  %174 = vmatpush1.bf16.msra.mxu0 0
  %175 = vmatprep.subr.bf16.mxu0 0
  %176 = vmatpush1.bf16.msra.mxu0 0
  %177 = vmatprep.subr.bf16.mxu0 0
  %178 = vmatpush1.bf16.msra.mxu0 0
  %179 = vmatprep.subr.bf16.mxu0 0
  %180 = vmatpush1.bf16.msra.mxu0 0
  %181 = vmatprep.subr.bf16.mxu0 0
  %182 = vmatpush1.bf16.msra.mxu0 0
  %183 = vmatprep.subr.bf16.mxu0 0
  %184 = vmatpush1.bf16.msra.mxu0 0
  %185 = vmatprep.subr.bf16.mxu0 0
  %186 = vmatpush1.bf16.msra.mxu0 0
  %187 = vmatprep.subr.bf16.mxu0 0
  %188 = vmatpush1.bf16.msra.mxu0 0
  %189 = vmatprep.subr.bf16.mxu0 0
  %190 = vmatpush1.bf16.msra.mxu0 0
  %191 = vmatprep.mubr.bf16.mxu0 0
  %192 = vmatmul.mubr.bf16.gmra.mrb[0].mxu0 %v148
  %v193 = vpop.f32.mrb[0].mxu0
  %v194 = vadd.f32 0.0, %v193
  %v195 = vpop.f32.mrb[0].mxu0
  %v196 = vpop.f32.mrb[0].mxu0
  %v197 = vadd.f32 0.0, %v196
  %v198 = vpop.f32.mrb[0].mxu0
  %199 = vmatprep.mubr.bf16.mxu0 0
  %200 = vmatmul.mubr.bf16.gmra.mrb[0].mxu0 %v151
  %v201 = vpop.f32.mrb[0].mxu0
  %v202 = vadd.f32 0.0, %v201
  %v203 = vpop.f32.mrb[0].mxu0
  %v204 = vpop.f32.mrb[0].mxu0
  %v205 = vadd.f32 0.0, %v204
  %v206 = vpop.f32.mrb[0].mxu0
  %207 = vmatprep.mubr.bf16.mxu0 0
  %208 = vmatmul.mubr.bf16.gmra.mrb[0].mxu0 %v154
  %v209 = vpop.f32.mrb[0].mxu0
  %v210 = vadd.f32 0.0, %v209
  %v211 = vpop.f32.mrb[0].mxu0
  %v212 = vpop.f32.mrb[0].mxu0
  %v213 = vadd.f32 0.0, %v212
  %v214 = vpop.f32.mrb[0].mxu0
  %215 = vmatprep.mubr.bf16.mxu0 0
  %216 = vmatmul.mubr.bf16.gmra.mrb[0].mxu0 %v157
  %v217 = vpop.f32.mrb[0].mxu0
  %v218 = vadd.f32 0.0, %v217
  %v219 = vpop.f32.mrb[0].mxu0
  %v220 = vpop.f32.mrb[0].mxu0
  %v221 = vadd.f32 0.0, %v220
  %v222 = vpop.f32.mrb[0].mxu0
  %223 = vdwg.mxu0
  %v232 = vunpack.c.l.b16 %v90
  %v233 = vunpack.c.l.b16 %v91
  %v234 = vunpack.c.l.b16 %v92
  %v235 = vunpack.c.l.b16 %v93
  %v236 = vunpack.c.l.b16 %v94
  %v237 = vunpack.c.l.b16 %v95
  %v238 = vunpack.c.l.b16 %v96
  %v239 = vunpack.c.l.b16 %v97
  %v240 = vpack.c.b16 %v233, %v232
  %v241 = vpack.c.b16 %v235, %v234
  %v242 = vpack.c.b16 %v237, %v236
  %v243 = vpack.c.b16 %v239, %v238
  %v248 = vunpack.c.l.b16 %v98
  %v249 = vunpack.c.l.b16 %v99
  %v250 = vunpack.c.l.b16 %v100
  %v251 = vunpack.c.l.b16 %v101
  %v252 = vpack.c.b16 %v249, %v248
  %v253 = vpack.c.b16 %v251, %v250
  %v257 = vsel %vm146, %v240, 0
  %v260 = vsel %vm146, %v241, 0
  %v263 = vsel %vm146, %v242, 0
  %v266 = vsel %vm146, %v243, 0
  %268 = vmatprep.subr.bf16.mxu0 0
  %269 = vmatpush1.bf16.msra.mxu0 %v252
  %270 = vmatprep.subr.bf16.mxu0 0
  %271 = vmatpush1.bf16.msra.mxu0 %v253
  %272 = vmatprep.subr.bf16.mxu0 0
  %273 = vmatpush1.bf16.msra.mxu0 0
  %274 = vmatprep.subr.bf16.mxu0 0
  %275 = vmatpush1.bf16.msra.mxu0 0
  %276 = vmatprep.subr.bf16.mxu0 0
  %277 = vmatpush1.bf16.msra.mxu0 0
  %278 = vmatprep.subr.bf16.mxu0 0
  %279 = vmatpush1.bf16.msra.mxu0 0
  %280 = vmatprep.subr.bf16.mxu0 0
  %281 = vmatpush1.bf16.msra.mxu0 0
  %282 = vmatprep.subr.bf16.mxu0 0
  %283 = vmatpush1.bf16.msra.mxu0 0
  %284 = vmatprep.subr.bf16.mxu0 0
  %285 = vmatpush1.bf16.msra.mxu0 0
  %286 = vmatprep.subr.bf16.mxu0 0
  %287 = vmatpush1.bf16.msra.mxu0 0
  %288 = vmatprep.subr.bf16.mxu0 0
  %289 = vmatpush1.bf16.msra.mxu0 0
  %290 = vmatprep.subr.bf16.mxu0 0
  %291 = vmatpush1.bf16.msra.mxu0 0
  %292 = vmatprep.subr.bf16.mxu0 0
  %293 = vmatpush1.bf16.msra.mxu0 0
  %294 = vmatprep.subr.bf16.mxu0 0
  %295 = vmatpush1.bf16.msra.mxu0 0
  %296 = vmatprep.subr.bf16.mxu0 0
  %297 = vmatpush1.bf16.msra.mxu0 0
  %298 = vmatprep.subr.bf16.mxu0 0
  %299 = vmatpush1.bf16.msra.mxu0 0
  %300 = vmatprep.mubr.bf16.mxu0 0
  %301 = vmatmul.mubr.bf16.gmra.mrb[0].mxu0 %v257
  %v302 = vpop.f32.mrb[0].mxu0
  %v303 = vadd.f32 %v194, %v302
  %v304 = vpop.f32.mrb[0].mxu0
  %v305 = vpop.f32.mrb[0].mxu0
  %v306 = vadd.f32 %v197, %v305
  %v307 = vpop.f32.mrb[0].mxu0
  %308 = vmatprep.mubr.bf16.mxu0 0
  %309 = vmatmul.mubr.bf16.gmra.mrb[0].mxu0 %v260
  %v310 = vpop.f32.mrb[0].mxu0
  %v311 = vadd.f32 %v202, %v310
  %v312 = vpop.f32.mrb[0].mxu0
  %v313 = vpop.f32.mrb[0].mxu0
  %v314 = vadd.f32 %v205, %v313
  %v315 = vpop.f32.mrb[0].mxu0
  %316 = vmatprep.mubr.bf16.mxu0 0
  %317 = vmatmul.mubr.bf16.gmra.mrb[0].mxu0 %v263
  %v318 = vpop.f32.mrb[0].mxu0
  %v319 = vadd.f32 %v210, %v318
  %v320 = vpop.f32.mrb[0].mxu0
  %v321 = vpop.f32.mrb[0].mxu0
  %v322 = vadd.f32 %v213, %v321
  %v323 = vpop.f32.mrb[0].mxu0
  %324 = vmatprep.mubr.bf16.mxu0 0
  %325 = vmatmul.mubr.bf16.gmra.mrb[0].mxu0 %v266
  %v326 = vpop.f32.mrb[0].mxu0
  %v327 = vadd.f32 %v218, %v326
  %v328 = vpop.f32.mrb[0].mxu0
  %v329 = vpop.f32.mrb[0].mxu0
  %v330 = vadd.f32 %v221, %v329
  %v331 = vpop.f32.mrb[0].mxu0
  %332 = vdwg.mxu0
  %v333 = vld [vmem:[%s7] sm:$0x1]
  %v335 = vlaneseq
  %v336 = vshrl.u32 %v335, 7
  %v337 = vsub.s32 0, %v336
  %v338 = vrot.slane %v333, %v337
  %v340 = vadd.f32 %v303, %v338
  %v341 = vadd.f32 %v306, %v338
  %v342 = vadd.f32 %v311, %v338
  %v343 = vadd.f32 %v314, %v338
  %v344 = vadd.f32 %v319, %v338
  %v345 = vadd.f32 %v322, %v338
  %v346 = vadd.f32 %v327, %v338
  %v347 = vadd.f32 %v330, %v338
  %v348 = vld [vmem:[%s70] sm:$0xf]
  %v349 = vld [vmem:[%s70 + $0x4] sm:$0xf]
  %v350 = vld [vmem:[%s70 + $0x8] sm:$0xf]
  %v351 = vld [vmem:[%s70 + $0xc] sm:$0xf]
  %v352 = vld [vmem:[%s70 + $0x10] sm:$0xf]
  %v353 = vld [vmem:[%s70 + $0x14] sm:$0xf]
  %v354 = vld [vmem:[%s70 + $0x18] sm:$0xf]
  %v355 = vld [vmem:[%s70 + $0x1c] sm:$0xf]
  %s356 = scalar_lea.vmem %s4, 16
  %v357 = vld [vmem:[%s356] sm:$0xf]
  %v358 = vld [vmem:[%s356 + $0x4] sm:$0xf]
  %v359 = vld [vmem:[%s356 + $0x8] sm:$0xf]
  %v360 = vld [vmem:[%s356 + $0xc] sm:$0xf]
  %v361 = vld [vmem:[%s78] sm:$0xf]
  %v362 = vld [vmem:[%s78 + $0x4] sm:$0xf]
  %v363 = vld [vmem:[%s78 + $0x8] sm:$0xf]
  %v364 = vld [vmem:[%s78 + $0xc] sm:$0xf]
  %v365 = vld [vmem:[%s78 + $0x10] sm:$0xf]
  %v366 = vld [vmem:[%s78 + $0x14] sm:$0xf]
  %v367 = vld [vmem:[%s78 + $0x18] sm:$0xf]
  %v368 = vld [vmem:[%s78 + $0x1c] sm:$0xf]
  %s369 = scalar_lea.vmem %s5, 16
  %v370 = vld [vmem:[%s369] sm:$0xf]
  %v371 = vld [vmem:[%s369 + $0x4] sm:$0xf]
  %v372 = vld [vmem:[%s369 + $0x8] sm:$0xf]
  %v373 = vld [vmem:[%s369 + $0xc] sm:$0xf]
  %v382 = vunpack.c.l.b16 %v361
  %v383 = vunpack.c.l.b16 %v362
  %v384 = vunpack.c.l.b16 %v363
  %v385 = vunpack.c.l.b16 %v364
  %v386 = vunpack.c.l.b16 %v365
  %v387 = vunpack.c.l.b16 %v366
  %v388 = vunpack.c.l.b16 %v367
  %v389 = vunpack.c.l.b16 %v368
  %v390 = vpack.c.b16 %v383, %v382
  %v391 = vpack.c.b16 %v385, %v384
  %v392 = vpack.c.b16 %v387, %v386
  %v393 = vpack.c.b16 %v389, %v388
  %v398 = vunpack.c.l.b16 %v370
  %v399 = vunpack.c.l.b16 %v371
  %v400 = vunpack.c.l.b16 %v372
  %v401 = vunpack.c.l.b16 %v373
  %v402 = vpack.c.b16 %v399, %v398
  %v403 = vpack.c.b16 %v401, %v400
  %v407 = vsel %vm146, %v390, 0
  %v410 = vsel %vm146, %v391, 0
  %v413 = vsel %vm146, %v392, 0
  %v416 = vsel %vm146, %v393, 0
  %418 = vmatprep.subr.bf16.mxu0 0
  %419 = vmatpush1.bf16.msra.mxu0 %v402
  %420 = vmatprep.subr.bf16.mxu0 0
  %421 = vmatpush1.bf16.msra.mxu0 %v403
  %422 = vmatprep.subr.bf16.mxu0 0
  %423 = vmatpush1.bf16.msra.mxu0 0
  %424 = vmatprep.subr.bf16.mxu0 0
  %425 = vmatpush1.bf16.msra.mxu0 0
  %426 = vmatprep.subr.bf16.mxu0 0
  %427 = vmatpush1.bf16.msra.mxu0 0
  %428 = vmatprep.subr.bf16.mxu0 0
  %429 = vmatpush1.bf16.msra.mxu0 0
  %430 = vmatprep.subr.bf16.mxu0 0
  %431 = vmatpush1.bf16.msra.mxu0 0
  %432 = vmatprep.subr.bf16.mxu0 0
  %433 = vmatpush1.bf16.msra.mxu0 0
  %434 = vmatprep.subr.bf16.mxu0 0
  %435 = vmatpush1.bf16.msra.mxu0 0
  %436 = vmatprep.subr.bf16.mxu0 0
  %437 = vmatpush1.bf16.msra.mxu0 0
  %438 = vmatprep.subr.bf16.mxu0 0
  %439 = vmatpush1.bf16.msra.mxu0 0
  %440 = vmatprep.subr.bf16.mxu0 0
  %441 = vmatpush1.bf16.msra.mxu0 0
  %442 = vmatprep.subr.bf16.mxu0 0
  %443 = vmatpush1.bf16.msra.mxu0 0
  %444 = vmatprep.subr.bf16.mxu0 0
  %445 = vmatpush1.bf16.msra.mxu0 0
  %446 = vmatprep.subr.bf16.mxu0 0
  %447 = vmatpush1.bf16.msra.mxu0 0
  %448 = vmatprep.subr.bf16.mxu0 0
  %449 = vmatpush1.bf16.msra.mxu0 0
  %450 = vmatprep.mubr.bf16.mxu0 0
  %451 = vmatmul.mubr.bf16.gmra.mrb[0].mxu0 %v407
  %v452 = vpop.f32.mrb[0].mxu0
  %v453 = vadd.f32 0.0, %v452
  %v454 = vpop.f32.mrb[0].mxu0
  %v455 = vpop.f32.mrb[0].mxu0
  %v456 = vadd.f32 0.0, %v455
  %v457 = vpop.f32.mrb[0].mxu0
  %458 = vmatprep.mubr.bf16.mxu0 0
  %459 = vmatmul.mubr.bf16.gmra.mrb[0].mxu0 %v410
  %v460 = vpop.f32.mrb[0].mxu0
  %v461 = vadd.f32 0.0, %v460
  %v462 = vpop.f32.mrb[0].mxu0
  %v463 = vpop.f32.mrb[0].mxu0
  %v464 = vadd.f32 0.0, %v463
  %v465 = vpop.f32.mrb[0].mxu0
  %466 = vmatprep.mubr.bf16.mxu0 0
  %467 = vmatmul.mubr.bf16.gmra.mrb[0].mxu0 %v413
  %v468 = vpop.f32.mrb[0].mxu0
  %v469 = vadd.f32 0.0, %v468
  %v470 = vpop.f32.mrb[0].mxu0
  %v471 = vpop.f32.mrb[0].mxu0
  %v472 = vadd.f32 0.0, %v471
  %v473 = vpop.f32.mrb[0].mxu0
  %474 = vmatprep.mubr.bf16.mxu0 0
  %475 = vmatmul.mubr.bf16.gmra.mrb[0].mxu0 %v416
  %v476 = vpop.f32.mrb[0].mxu0
  %v477 = vadd.f32 0.0, %v476
  %v478 = vpop.f32.mrb[0].mxu0
  %v479 = vpop.f32.mrb[0].mxu0
  %v480 = vadd.f32 0.0, %v479
  %v481 = vpop.f32.mrb[0].mxu0
  %482 = vdwg.mxu0
  %v491 = vunpack.c.l.b16 %v348
  %v492 = vunpack.c.l.b16 %v349
  %v493 = vunpack.c.l.b16 %v350
  %v494 = vunpack.c.l.b16 %v351
  %v495 = vunpack.c.l.b16 %v352
  %v496 = vunpack.c.l.b16 %v353
  %v497 = vunpack.c.l.b16 %v354
  %v498 = vunpack.c.l.b16 %v355
  %v499 = vpack.c.b16 %v492, %v491
  %v500 = vpack.c.b16 %v494, %v493
  %v501 = vpack.c.b16 %v496, %v495
  %v502 = vpack.c.b16 %v498, %v497
  %v507 = vunpack.c.l.b16 %v357
  %v508 = vunpack.c.l.b16 %v358
  %v509 = vunpack.c.l.b16 %v359
  %v510 = vunpack.c.l.b16 %v360
  %v511 = vpack.c.b16 %v508, %v507
  %v512 = vpack.c.b16 %v510, %v509
  %v516 = vsel %vm146, %v499, 0
  %v519 = vsel %vm146, %v500, 0
  %v522 = vsel %vm146, %v501, 0
  %v525 = vsel %vm146, %v502, 0
  %527 = vmatprep.subr.bf16.mxu0 0
  %528 = vmatpush1.bf16.msra.mxu0 %v511
  %529 = vmatprep.subr.bf16.mxu0 0
  %530 = vmatpush1.bf16.msra.mxu0 %v512
  %531 = vmatprep.subr.bf16.mxu0 0
  %532 = vmatpush1.bf16.msra.mxu0 0
  %533 = vmatprep.subr.bf16.mxu0 0
  %534 = vmatpush1.bf16.msra.mxu0 0
  %535 = vmatprep.subr.bf16.mxu0 0
  %536 = vmatpush1.bf16.msra.mxu0 0
  %537 = vmatprep.subr.bf16.mxu0 0
  %538 = vmatpush1.bf16.msra.mxu0 0
  %539 = vmatprep.subr.bf16.mxu0 0
  %540 = vmatpush1.bf16.msra.mxu0 0
  %541 = vmatprep.subr.bf16.mxu0 0
  %542 = vmatpush1.bf16.msra.mxu0 0
  %543 = vmatprep.subr.bf16.mxu0 0
  %544 = vmatpush1.bf16.msra.mxu0 0
  %545 = vmatprep.subr.bf16.mxu0 0
  %546 = vmatpush1.bf16.msra.mxu0 0
  %547 = vmatprep.subr.bf16.mxu0 0
  %548 = vmatpush1.bf16.msra.mxu0 0
  %549 = vmatprep.subr.bf16.mxu0 0
  %550 = vmatpush1.bf16.msra.mxu0 0
  %551 = vmatprep.subr.bf16.mxu0 0
  %552 = vmatpush1.bf16.msra.mxu0 0
  %553 = vmatprep.subr.bf16.mxu0 0
  %554 = vmatpush1.bf16.msra.mxu0 0
  %555 = vmatprep.subr.bf16.mxu0 0
  %556 = vmatpush1.bf16.msra.mxu0 0
  %557 = vmatprep.subr.bf16.mxu0 0
  %558 = vmatpush1.bf16.msra.mxu0 0
  %559 = vmatprep.mubr.bf16.mxu0 0
  %560 = vmatmul.mubr.bf16.gmra.mrb[0].mxu0 %v516
  %v561 = vpop.f32.mrb[0].mxu0
  %v562 = vadd.f32 %v453, %v561
  %v563 = vpop.f32.mrb[0].mxu0
  %v564 = vpop.f32.mrb[0].mxu0
  %v565 = vadd.f32 %v456, %v564
  %v566 = vpop.f32.mrb[0].mxu0
  %567 = vmatprep.mubr.bf16.mxu0 0
  %568 = vmatmul.mubr.bf16.gmra.mrb[0].mxu0 %v519
  %v569 = vpop.f32.mrb[0].mxu0
  %v570 = vadd.f32 %v461, %v569
  %v571 = vpop.f32.mrb[0].mxu0
  %v572 = vpop.f32.mrb[0].mxu0
  %v573 = vadd.f32 %v464, %v572
  %v574 = vpop.f32.mrb[0].mxu0
  %575 = vmatprep.mubr.bf16.mxu0 0
  %576 = vmatmul.mubr.bf16.gmra.mrb[0].mxu0 %v522
  %v577 = vpop.f32.mrb[0].mxu0
  %v578 = vadd.f32 %v469, %v577
  %v579 = vpop.f32.mrb[0].mxu0
  %v580 = vpop.f32.mrb[0].mxu0
  %v581 = vadd.f32 %v472, %v580
  %v582 = vpop.f32.mrb[0].mxu0
  %583 = vmatprep.mubr.bf16.mxu0 0
  %584 = vmatmul.mubr.bf16.gmra.mrb[0].mxu0 %v525
  %v585 = vpop.f32.mrb[0].mxu0
  %v586 = vadd.f32 %v477, %v585
  %v587 = vpop.f32.mrb[0].mxu0
  %v588 = vpop.f32.mrb[0].mxu0
  %v589 = vadd.f32 %v480, %v588
  %v590 = vpop.f32.mrb[0].mxu0
  %591 = vdwg.mxu0
  %s592 = scalar_lea.vmem %s7, 1
  %v593 = vld [vmem:[%s592] sm:$0x1]
  %v595 = vlaneseq
  %v596 = vshrl.u32 %v595, 7
  %v597 = vsub.s32 0, %v596
  %v598 = vrot.slane %v593, %v597
  %v600 = vadd.f32 %v562, %v598
  %v601 = vadd.f32 %v565, %v598
  %v602 = vadd.f32 %v570, %v598
  %v603 = vadd.f32 %v573, %v598
  %v604 = vadd.f32 %v578, %v598
  %v605 = vadd.f32 %v581, %v598
  %v606 = vadd.f32 %v586, %v598
  %v607 = vadd.f32 %v589, %v598
  %p608 = scmp.eq.s32.totalorder 0, 0
  // Predicated region
  $region34: #{lstm_classifier_forward.4} parent=0 // pred_check
    %p609 = pneg %p608
  $region35: #{lstm_classifier_forward.4} parent=0 // pred_check_branch
    %611 = sbr.rel (%p609) target = $region37
  $region36: #{lstm_classifier_forward.4} parent=0 // pred_region
    %612 = vst.msk [vmem:[#allocation2] sm:$0xff] %vm146, 0.0
    %613 = vst.msk [vmem:[#allocation2 + $0x8] sm:$0xff] %vm146, 0.0
    %614 = vst.msk [vmem:[#allocation3] sm:$0xff] %vm146, 0.0
    %615 = vst.msk [vmem:[#allocation3 + $0x8] sm:$0xff] %vm146, 0.0
  $region37: #{lstm_classifier_forward.4} parent=0 // pred_fallthru
    _
  %v616 = vld [vmem:[%s6] sm:$0xf]
  %v617 = vld [vmem:[%s6 + $0x4] sm:$0xf]
  %v618 = vld [vmem:[%s6 + $0x8] sm:$0xf]
  %v619 = vld [vmem:[%s6 + $0xc] sm:$0xf]
  %s620 = scalar_lea.vmem %s6, 16
  %v621 = vld [vmem:[%s620] sm:$0xf]
  %v622 = vld [vmem:[%s620 + $0x4] sm:$0xf]
  %v623 = vld [vmem:[%s620 + $0x8] sm:$0xf]
  %v624 = vld [vmem:[%s620 + $0xc] sm:$0xf]
  %v625 = vld [vmem:[#allocation2] sm:$0xff]
  %v626 = vld [vmem:[#allocation3] sm:$0xff]
  %s627 = scalar_lea.vmem [#allocation2], 8
  %v628 = vld [vmem:[%s627] sm:$0xff]
  %s629 = scalar_lea.vmem [#allocation3], 8
  %v630 = vld [vmem:[%s629] sm:$0xff]
  %v631 = vpack.c.bf16 %v625, %v625
  %v636 = vunpack.c.l.b16 %v616
  %v637 = vunpack.c.l.b16 %v617
  %v638 = vunpack.c.l.b16 %v618
  %v639 = vunpack.c.l.b16 %v619
  %v640 = vpack.c.b16 %v637, %v636
  %v641 = vpack.c.b16 %v639, %v638
  %v645 = vsel %vm146, %v631, 0
  %647 = vmatprep.subr.bf16.mxu0 0
  %648 = vmatpush1.bf16.msra.mxu0 %v640
  %649 = vmatprep.subr.bf16.mxu0 0
  %650 = vmatpush1.bf16.msra.mxu0 %v641
  %651 = vmatprep.subr.bf16.mxu0 0
  %652 = vmatpush1.bf16.msra.mxu0 0
  %653 = vmatprep.subr.bf16.mxu0 0
  %654 = vmatpush1.bf16.msra.mxu0 0
  %655 = vmatprep.subr.bf16.mxu0 0
  %656 = vmatpush1.bf16.msra.mxu0 0
  %657 = vmatprep.subr.bf16.mxu0 0
  %658 = vmatpush1.bf16.msra.mxu0 0
  %659 = vmatprep.subr.bf16.mxu0 0
  %660 = vmatpush1.bf16.msra.mxu0 0
  %661 = vmatprep.subr.bf16.mxu0 0
  %662 = vmatpush1.bf16.msra.mxu0 0
  %663 = vmatprep.subr.bf16.mxu0 0
  %664 = vmatpush1.bf16.msra.mxu0 0
  %665 = vmatprep.subr.bf16.mxu0 0
  %666 = vmatpush1.bf16.msra.mxu0 0
  %667 = vmatprep.subr.bf16.mxu0 0
  %668 = vmatpush1.bf16.msra.mxu0 0
  %669 = vmatprep.subr.bf16.mxu0 0
  %670 = vmatpush1.bf16.msra.mxu0 0
  %671 = vmatprep.subr.bf16.mxu0 0
  %672 = vmatpush1.bf16.msra.mxu0 0
  %673 = vmatprep.subr.bf16.mxu0 0
  %674 = vmatpush1.bf16.msra.mxu0 0
  %675 = vmatprep.subr.bf16.mxu0 0
  %676 = vmatpush1.bf16.msra.mxu0 0
  %677 = vmatprep.subr.bf16.mxu0 0
  %678 = vmatpush1.bf16.msra.mxu0 0
  %679 = vmatprep.mubr.bf16.mxu0 0
  %680 = vmatmul.mubr.bf16.gmra.mrb[0].mxu0 %v645
  %v681 = vpop.f32.mrb[0].mxu0
  %v682 = vadd.f32 0.0, %v681
  %v683 = vpop.f32.mrb[0].mxu0
  %v684 = vpop.f32.mrb[0].mxu0
  %v685 = vpop.f32.mrb[0].mxu0
  %686 = vdwg.mxu0
  %v687 = vadd.f32 %v340, %v682
  %v688 = vpack.c.bf16 %v628, %v628
  %v693 = vunpack.c.l.b16 %v621
  %v694 = vunpack.c.l.b16 %v622
  %v695 = vunpack.c.l.b16 %v623
  %v696 = vunpack.c.l.b16 %v624
  %v697 = vpack.c.b16 %v694, %v693
  %v698 = vpack.c.b16 %v696, %v695
  %v702 = vsel %vm146, %v688, 0
  %704 = vmatprep.subr.bf16.mxu0 0
  %705 = vmatpush1.bf16.msra.mxu0 %v697
  %706 = vmatprep.subr.bf16.mxu0 0
  %707 = vmatpush1.bf16.msra.mxu0 %v698
  %708 = vmatprep.subr.bf16.mxu0 0
  %709 = vmatpush1.bf16.msra.mxu0 0
  %710 = vmatprep.subr.bf16.mxu0 0
  %711 = vmatpush1.bf16.msra.mxu0 0
  %712 = vmatprep.subr.bf16.mxu0 0
  %713 = vmatpush1.bf16.msra.mxu0 0
  %714 = vmatprep.subr.bf16.mxu0 0
  %715 = vmatpush1.bf16.msra.mxu0 0
  %716 = vmatprep.subr.bf16.mxu0 0
  %717 = vmatpush1.bf16.msra.mxu0 0
  %718 = vmatprep.subr.bf16.mxu0 0
  %719 = vmatpush1.bf16.msra.mxu0 0
  %720 = vmatprep.subr.bf16.mxu0 0
  %721 = vmatpush1.bf16.msra.mxu0 0
  %722 = vmatprep.subr.bf16.mxu0 0
  %723 = vmatpush1.bf16.msra.mxu0 0
  %724 = vmatprep.subr.bf16.mxu0 0
  %725 = vmatpush1.bf16.msra.mxu0 0
  %726 = vmatprep.subr.bf16.mxu0 0
  %727 = vmatpush1.bf16.msra.mxu0 0
  %728 = vmatprep.subr.bf16.mxu0 0
  %729 = vmatpush1.bf16.msra.mxu0 0
  %730 = vmatprep.subr.bf16.mxu0 0
  %731 = vmatpush1.bf16.msra.mxu0 0
  %732 = vmatprep.subr.bf16.mxu0 0
  %733 = vmatpush1.bf16.msra.mxu0 0
  %734 = vmatprep.subr.bf16.mxu0 0
  %735 = vmatpush1.bf16.msra.mxu0 0
  %736 = vmatprep.mubr.bf16.mxu0 0
  %737 = vmatmul.mubr.bf16.gmra.mrb[0].mxu0 %v702
  %v738 = vpop.f32.mrb[0].mxu0
  %v739 = vadd.f32 0.0, %v738
  %v740 = vpop.f32.mrb[0].mxu0
  %v741 = vpop.f32.mrb[0].mxu0
  %v742 = vpop.f32.mrb[0].mxu0
  %743 = vdwg.mxu0
  %v744 = vadd.f32 %v607, %v739
  %v745 = vxor.u32 %v687, 2147483648
  %v746 = vmul.f32 %v745, 1.442695
  %v747 = vpow.pop %v746
  %v748 = vadd.f32 %v747, 1.0
  %v749 = vrcp.pop %v748
  %v750 = vmul.f32 1.0, %v749
  %v751 = vtanh.pop %v687
  %753 = vrot.lane.b32.xlu0 %v626, 32
  %v754 = vpop.permute.xlu0 %753
  %v756 = vmul.f32 %v750, %v754
  %758 = vrot.lane.b32.xlu0 %v751, 32
  %v759 = vpop.permute.xlu0 %758
  %v761 = vmul.f32 %v750, %v759
  %763 = vrot.lane.b32.xlu0 %v761, 32
  %v764 = vpop.permute.xlu0 %763
  %v766 = vadd.f32 %v756, %v764
  %v767 = vtanh.pop %v766
  %769 = vrot.lane.b32.xlu0 %v767, 32
  %v770 = vpop.permute.xlu0 %769
  %v772 = vmul.f32 %v750, %v770
  %v773 = vxor.u32 %v744, 2147483648
  %v774 = vmul.f32 %v773, 1.442695
  %v775 = vpow.pop %v774
  %v776 = vadd.f32 %v775, 1.0
  %v777 = vrcp.pop %v776
  %v778 = vmul.f32 1.0, %v777
  %v779 = vtanh.pop %v744
  %781 = vrot.lane.b32.xlu0 %v630, 32
  %v782 = vpop.permute.xlu0 %781
  %v784 = vmul.f32 %v778, %v782
  %786 = vrot.lane.b32.xlu0 %v779, 32
  %v787 = vpop.permute.xlu0 %786
  %v789 = vmul.f32 %v778, %v787
  %791 = vrot.lane.b32.xlu0 %v789, 32
  %v792 = vpop.permute.xlu0 %791
  %v794 = vadd.f32 %v784, %v792
  %v795 = vtanh.pop %v794
  %797 = vrot.lane.b32.xlu0 %v795, 32
  %v798 = vpop.permute.xlu0 %797
  %v800 = vmul.f32 %v778, %v798
  %v801 = vpack.c.bf16 %v772, %v772
  %v803 = vunpack.c.l.b16 %v801
  %v804 = vpack.c.b16 %v803, %v803
  %805 = vrot.lane.b32.xlu0 %v804, 64
  %v806 = vpop.permute.xlu0 %805
  %vm808 = vcmask 257024
  %809 = vst.msk [vmem:[%s8] sm:$0xf] %vm808, %v806
  %v810 = vpack.c.bf16 %v800, %v800
  %v812 = vunpack.c.l.b16 %v810
  %v813 = vpack.c.b16 %v812, %v812
  %814 = vrot.lane.b32.xlu0 %v813, 64
  %v815 = vpop.permute.xlu0 %814
  %817 = vst.msk [vmem:[%s86 + $0x1c] sm:$0xf] %vm808, %v815
  %818 = vrot.lane.b32.xlu0 %v801, 64
  %v819 = vpop.permute.xlu0 %818
  %v821 = vsel %vm146, %v819, 0
  %823 = vmatprep.subr.bf16.mxu0 0
  %824 = vmatpush1.bf16.msra.mxu0 %v640
  %825 = vmatprep.subr.bf16.mxu0 0
  %826 = vmatpush1.bf16.msra.mxu0 %v641
  %827 = vmatprep.subr.bf16.mxu0 0
  %828 = vmatpush1.bf16.msra.mxu0 0
  %829 = vmatprep.subr.bf16.mxu0 0
  %830 = vmatpush1.bf16.msra.mxu0 0
  %831 = vmatprep.subr.bf16.mxu0 0
  %832 = vmatpush1.bf16.msra.mxu0 0
  %833 = vmatprep.subr.bf16.mxu0 0
  %834 = vmatpush1.bf16.msra.mxu0 0
  %835 = vmatprep.subr.bf16.mxu0 0
  %836 = vmatpush1.bf16.msra.mxu0 0
  %837 = vmatprep.subr.bf16.mxu0 0
  %838 = vmatpush1.bf16.msra.mxu0 0
  %839 = vmatprep.subr.bf16.mxu0 0
  %840 = vmatpush1.bf16.msra.mxu0 0
  %841 = vmatprep.subr.bf16.mxu0 0
  %842 = vmatpush1.bf16.msra.mxu0 0
  %843 = vmatprep.subr.bf16.mxu0 0
  %844 = vmatpush1.bf16.msra.mxu0 0
  %845 = vmatprep.subr.bf16.mxu0 0
  %846 = vmatpush1.bf16.msra.mxu0 0
  %847 = vmatprep.subr.bf16.mxu0 0
  %848 = vmatpush1.bf16.msra.mxu0 0
  %849 = vmatprep.subr.bf16.mxu0 0
  %850 = vmatpush1.bf16.msra.mxu0 0
  %851 = vmatprep.subr.bf16.mxu0 0
  %852 = vmatpush1.bf16.msra.mxu0 0
  %853 = vmatprep.subr.bf16.mxu0 0
  %854 = vmatpush1.bf16.msra.mxu0 0
  %855 = vmatprep.mubr.bf16.mxu0 0
  %856 = vmatmul.mubr.bf16.gmra.mrb[0].mxu0 %v821
  %v857 = vpop.f32.mrb[0].mxu0
  %v858 = vadd.f32 0.0, %v857
  %v859 = vpop.f32.mrb[0].mxu0
  %v860 = vpop.f32.mrb[0].mxu0
  %v861 = vpop.f32.mrb[0].mxu0
  %862 = vdwg.mxu0
  %v863 = vadd.f32 %v341, %v858
  %864 = vrot.lane.b32.xlu0 %v810, 64
  %v865 = vpop.permute.xlu0 %864
  %v867 = vsel %vm146, %v865, 0
  %869 = vmatprep.subr.bf16.mxu0 0
  %870 = vmatpush1.bf16.msra.mxu0 %v697
  %871 = vmatprep.subr.bf16.mxu0 0
  %872 = vmatpush1.bf16.msra.mxu0 %v698
  %873 = vmatprep.subr.bf16.mxu0 0
  %874 = vmatpush1.bf16.msra.mxu0 0
  %875 = vmatprep.subr.bf16.mxu0 0
  %876 = vmatpush1.bf16.msra.mxu0 0
  %877 = vmatprep.subr.bf16.mxu0 0
  %878 = vmatpush1.bf16.msra.mxu0 0
  %879 = vmatprep.subr.bf16.mxu0 0
  %880 = vmatpush1.bf16.msra.mxu0 0
  %881 = vmatprep.subr.bf16.mxu0 0
  %882 = vmatpush1.bf16.msra.mxu0 0
  %883 = vmatprep.subr.bf16.mxu0 0
  %884 = vmatpush1.bf16.msra.mxu0 0
  %885 = vmatprep.subr.bf16.mxu0 0
  %886 = vmatpush1.bf16.msra.mxu0 0
  %887 = vmatprep.subr.bf16.mxu0 0
  %888 = vmatpush1.bf16.msra.mxu0 0
  %889 = vmatprep.subr.bf16.mxu0 0
  %890 = vmatpush1.bf16.msra.mxu0 0
  %891 = vmatprep.subr.bf16.mxu0 0
  %892 = vmatpush1.bf16.msra.mxu0 0
  %893 = vmatprep.subr.bf16.mxu0 0
  %894 = vmatpush1.bf16.msra.mxu0 0
  %895 = vmatprep.subr.bf16.mxu0 0
  %896 = vmatpush1.bf16.msra.mxu0 0
  %897 = vmatprep.subr.bf16.mxu0 0
  %898 = vmatpush1.bf16.msra.mxu0 0
  %899 = vmatprep.subr.bf16.mxu0 0
  %900 = vmatpush1.bf16.msra.mxu0 0
  %901 = vmatprep.mubr.bf16.mxu0 0
  %902 = vmatmul.mubr.bf16.gmra.mrb[0].mxu0 %v867
  %v903 = vpop.f32.mrb[0].mxu0
  %v904 = vadd.f32 0.0, %v903
  %v905 = vpop.f32.mrb[0].mxu0
  %v906 = vpop.f32.mrb[0].mxu0
  %v907 = vpop.f32.mrb[0].mxu0
  %908 = vdwg.mxu0
  %v909 = vadd.f32 %v606, %v904
  %v910 = vxor.u32 %v863, 2147483648
  %v911 = vmul.f32 %v910, 1.442695
  %v912 = vpow.pop %v911
  %v913 = vadd.f32 %v912, 1.0
  %v914 = vrcp.pop %v913
  %v915 = vmul.f32 1.0, %v914
  %v916 = vtanh.pop %v863
  %v917 = vmul.f32 %v915, %v766
  %919 = vrot.lane.b32.xlu0 %v916, 32
  %v920 = vpop.permute.xlu0 %919
  %v922 = vmul.f32 %v915, %v920
  %924 = vrot.lane.b32.xlu0 %v922, 32
  %v925 = vpop.permute.xlu0 %924
  %v927 = vadd.f32 %v917, %v925
  %v928 = vtanh.pop %v927
  %930 = vrot.lane.b32.xlu0 %v928, 32
  %v931 = vpop.permute.xlu0 %930
  %v933 = vmul.f32 %v915, %v931
  %v934 = vxor.u32 %v909, 2147483648
  %v935 = vmul.f32 %v934, 1.442695
  %v936 = vpow.pop %v935
  %v937 = vadd.f32 %v936, 1.0
  %v938 = vrcp.pop %v937
  %v939 = vmul.f32 1.0, %v938
  %v940 = vtanh.pop %v909
  %v941 = vmul.f32 %v939, %v794
  %943 = vrot.lane.b32.xlu0 %v940, 32
  %v944 = vpop.permute.xlu0 %943
  %v946 = vmul.f32 %v939, %v944
  %948 = vrot.lane.b32.xlu0 %v946, 32
  %v949 = vpop.permute.xlu0 %948
  %v951 = vadd.f32 %v941, %v949
  %v952 = vtanh.pop %v951
  %954 = vrot.lane.b32.xlu0 %v952, 32
  %v955 = vpop.permute.xlu0 %954
  %v957 = vmul.f32 %v939, %v955
  %v958 = vpack.c.bf16 %v933, %v933
  %v960 = vunpack.c.l.b16 %v958
  %v961 = vpack.c.b16 %v960, %v960
  %962 = vrot.lane.b32.xlu0 %v961, 64
  %v963 = vpop.permute.xlu0 %962
  %965 = vst.msk [vmem:[%s8 + $0x4] sm:$0xf] %vm808, %v963
  %v966 = vpack.c.bf16 %v957, %v957
  %v968 = vunpack.c.l.b16 %v966
  %v969 = vpack.c.b16 %v968, %v968
  %970 = vrot.lane.b32.xlu0 %v969, 64
  %v971 = vpop.permute.xlu0 %970
  %973 = vst.msk [vmem:[%s86 + $0x18] sm:$0xf] %vm808, %v971
  %974 = vrot.lane.b32.xlu0 %v958, 64
  %v975 = vpop.permute.xlu0 %974
  %v977 = vsel %vm146, %v975, 0
  %979 = vmatprep.subr.bf16.mxu0 0
  %980 = vmatpush1.bf16.msra.mxu0 %v640
  %981 = vmatprep.subr.bf16.mxu0 0
  %982 = vmatpush1.bf16.msra.mxu0 %v641
  %983 = vmatprep.subr.bf16.mxu0 0
  %984 = vmatpush1.bf16.msra.mxu0 0
  %985 = vmatprep.subr.bf16.mxu0 0
  %986 = vmatpush1.bf16.msra.mxu0 0
  %987 = vmatprep.subr.bf16.mxu0 0
  %988 = vmatpush1.bf16.msra.mxu0 0
  %989 = vmatprep.subr.bf16.mxu0 0
  %990 = vmatpush1.bf16.msra.mxu0 0
  %991 = vmatprep.subr.bf16.mxu0 0
  %992 = vmatpush1.bf16.msra.mxu0 0
  %993 = vmatprep.subr.bf16.mxu0 0
  %994 = vmatpush1.bf16.msra.mxu0 0
  %995 = vmatprep.subr.bf16.mxu0 0
  %996 = vmatpush1.bf16.msra.mxu0 0
  %997 = vmatprep.subr.bf16.mxu0 0
  %998 = vmatpush1.bf16.msra.mxu0 0
  %999 = vmatprep.subr.bf16.mxu0 0
  %1000 = vmatpush1.bf16.msra.mxu0 0
  %1001 = vmatprep.subr.bf16.mxu0 0
  %1002 = vmatpush1.bf16.msra.mxu0 0
  %1003 = vmatprep.subr.bf16.mxu0 0
  %1004 = vmatpush1.bf16.msra.mxu0 0
  %1005 = vmatprep.subr.bf16.mxu0 0
  %1006 = vmatpush1.bf16.msra.mxu0 0
  %1007 = vmatprep.subr.bf16.mxu0 0
  %1008 = vmatpush1.bf16.msra.mxu0 0
  %1009 = vmatprep.subr.bf16.mxu0 0
  %1010 = vmatpush1.bf16.msra.mxu0 0
  %1011 = vmatprep.mubr.bf16.mxu0 0
  %1012 = vmatmul.mubr.bf16.gmra.mrb[0].mxu0 %v977
  %v1013 = vpop.f32.mrb[0].mxu0
  %v1014 = vadd.f32 0.0, %v1013
  %v1015 = vpop.f32.mrb[0].mxu0
  %v1016 = vpop.f32.mrb[0].mxu0
  %v1017 = vpop.f32.mrb[0].mxu0
  %1018 = vdwg.mxu0
  %v1019 = vadd.f32 %v342, %v1014
  %1020 = vrot.lane.b32.xlu0 %v966, 64
  %v1021 = vpop.permute.xlu0 %1020
  %v1023 = vsel %vm146, %v1021, 0
  %1025 = vmatprep.subr.bf16.mxu0 0
  %1026 = vmatpush1.bf16.msra.mxu0 %v697
  %1027 = vmatprep.subr.bf16.mxu0 0
  %1028 = vmatpush1.bf16.msra.mxu0 %v698
  %1029 = vmatprep.subr.bf16.mxu0 0
  %1030 = vmatpush1.bf16.msra.mxu0 0
  %1031 = vmatprep.subr.bf16.mxu0 0
  %1032 = vmatpush1.bf16.msra.mxu0 0
  %1033 = vmatprep.subr.bf16.mxu0 0
  %1034 = vmatpush1.bf16.msra.mxu0 0
  %1035 = vmatprep.subr.bf16.mxu0 0
  %1036 = vmatpush1.bf16.msra.mxu0 0
  %1037 = vmatprep.subr.bf16.mxu0 0
  %1038 = vmatpush1.bf16.msra.mxu0 0
  %1039 = vmatprep.subr.bf16.mxu0 0
  %1040 = vmatpush1.bf16.msra.mxu0 0
  %1041 = vmatprep.subr.bf16.mxu0 0
  %1042 = vmatpush1.bf16.msra.mxu0 0
  %1043 = vmatprep.subr.bf16.mxu0 0
  %1044 = vmatpush1.bf16.msra.mxu0 0
  %1045 = vmatprep.subr.bf16.mxu0 0
  %1046 = vmatpush1.bf16.msra.mxu0 0
  %1047 = vmatprep.subr.bf16.mxu0 0
  %1048 = vmatpush1.bf16.msra.mxu0 0
  %1049 = vmatprep.subr.bf16.mxu0 0
  %1050 = vmatpush1.bf16.msra.mxu0 0
  %1051 = vmatprep.subr.bf16.mxu0 0
  %1052 = vmatpush1.bf16.msra.mxu0 0
  %1053 = vmatprep.subr.bf16.mxu0 0
  %1054 = vmatpush1.bf16.msra.mxu0 0
  %1055 = vmatprep.subr.bf16.mxu0 0
  %1056 = vmatpush1.bf16.msra.mxu0 0
  %1057 = vmatprep.mubr.bf16.mxu0 0
  %1058 = vmatmul.mubr.bf16.gmra.mrb[0].mxu0 %v1023
  %v1059 = vpop.f32.mrb[0].mxu0
  %v1060 = vadd.f32 0.0, %v1059
  %v1061 = vpop.f32.mrb[0].mxu0
  %v1062 = vpop.f32.mrb[0].mxu0
  %v1063 = vpop.f32.mrb[0].mxu0
  %1064 = vdwg.mxu0
  %v1065 = vadd.f32 %v605, %v1060
  %v1066 = vxor.u32 %v1019, 2147483648
  %v1067 = vmul.f32 %v1066, 1.442695
  %v1068 = vpow.pop %v1067
  %v1069 = vadd.f32 %v1068, 1.0
  %v1070 = vrcp.pop %v1069
  %v1071 = vmul.f32 1.0, %v1070
  %v1072 = vtanh.pop %v1019
  %v1073 = vmul.f32 %v1071, %v927
  %1075 = vrot.lane.b32.xlu0 %v1072, 32
  %v1076 = vpop.permute.xlu0 %1075
  %v1078 = vmul.f32 %v1071, %v1076
  %1080 = vrot.lane.b32.xlu0 %v1078, 32
  %v1081 = vpop.permute.xlu0 %1080
  %v1083 = vadd.f32 %v1073, %v1081
  %v1084 = vtanh.pop %v1083
  %1086 = vrot.lane.b32.xlu0 %v1084, 32
  %v1087 = vpop.permute.xlu0 %1086
  %v1089 = vmul.f32 %v1071, %v1087
  %v1090 = vxor.u32 %v1065, 2147483648
  %v1091 = vmul.f32 %v1090, 1.442695
  %v1092 = vpow.pop %v1091
  %v1093 = vadd.f32 %v1092, 1.0
  %v1094 = vrcp.pop %v1093
  %v1095 = vmul.f32 1.0, %v1094
  %v1096 = vtanh.pop %v1065
  %v1097 = vmul.f32 %v1095, %v951
  %1099 = vrot.lane.b32.xlu0 %v1096, 32
  %v1100 = vpop.permute.xlu0 %1099
  %v1102 = vmul.f32 %v1095, %v1100
  %1104 = vrot.lane.b32.xlu0 %v1102, 32
  %v1105 = vpop.permute.xlu0 %1104
  %v1107 = vadd.f32 %v1097, %v1105
  %v1108 = vtanh.pop %v1107
  %1110 = vrot.lane.b32.xlu0 %v1108, 32
  %v1111 = vpop.permute.xlu0 %1110
  %v1113 = vmul.f32 %v1095, %v1111
  %v1114 = vpack.c.bf16 %v1089, %v1089
  %v1116 = vunpack.c.l.b16 %v1114
  %v1117 = vpack.c.b16 %v1116, %v1116
  %1118 = vrot.lane.b32.xlu0 %v1117, 64
  %v1119 = vpop.permute.xlu0 %1118
  %1121 = vst.msk [vmem:[%s8 + $0x8] sm:$0xf] %vm808, %v1119
  %v1122 = vpack.c.bf16 %v1113, %v1113
  %v1124 = vunpack.c.l.b16 %v1122
  %v1125 = vpack.c.b16 %v1124, %v1124
  %1126 = vrot.lane.b32.xlu0 %v1125, 64
  %v1127 = vpop.permute.xlu0 %1126
  %1129 = vst.msk [vmem:[%s86 + $0x14] sm:$0xf] %vm808, %v1127
  %1130 = vrot.lane.b32.xlu0 %v1114, 64
  %v1131 = vpop.permute.xlu0 %1130
  %v1133 = vsel %vm146, %v1131, 0
  %1135 = vmatprep.subr.bf16.mxu0 0
  %1136 = vmatpush1.bf16.msra.mxu0 %v640
  %1137 = vmatprep.subr.bf16.mxu0 0
  %1138 = vmatpush1.bf16.msra.mxu0 %v641
  %1139 = vmatprep.subr.bf16.mxu0 0
  %1140 = vmatpush1.bf16.msra.mxu0 0
  %1141 = vmatprep.subr.bf16.mxu0 0
  %1142 = vmatpush1.bf16.msra.mxu0 0
  %1143 = vmatprep.subr.bf16.mxu0 0
  %1144 = vmatpush1.bf16.msra.mxu0 0
  %1145 = vmatprep.subr.bf16.mxu0 0
  %1146 = vmatpush1.bf16.msra.mxu0 0
  %1147 = vmatprep.subr.bf16.mxu0 0
  %1148 = vmatpush1.bf16.msra.mxu0 0
  %1149 = vmatprep.subr.bf16.mxu0 0
  %1150 = vmatpush1.bf16.msra.mxu0 0
  %1151 = vmatprep.subr.bf16.mxu0 0
  %1152 = vmatpush1.bf16.msra.mxu0 0
  %1153 = vmatprep.subr.bf16.mxu0 0
  %1154 = vmatpush1.bf16.msra.mxu0 0
  %1155 = vmatprep.subr.bf16.mxu0 0
  %1156 = vmatpush1.bf16.msra.mxu0 0
  %1157 = vmatprep.subr.bf16.mxu0 0
  %1158 = vmatpush1.bf16.msra.mxu0 0
  %1159 = vmatprep.subr.bf16.mxu0 0
  %1160 = vmatpush1.bf16.msra.mxu0 0
  %1161 = vmatprep.subr.bf16.mxu0 0
  %1162 = vmatpush1.bf16.msra.mxu0 0
  %1163 = vmatprep.subr.bf16.mxu0 0
  %1164 = vmatpush1.bf16.msra.mxu0 0
  %1165 = vmatprep.subr.bf16.mxu0 0
  %1166 = vmatpush1.bf16.msra.mxu0 0
  %1167 = vmatprep.mubr.bf16.mxu0 0
  %1168 = vmatmul.mubr.bf16.gmra.mrb[0].mxu0 %v1133
  %v1169 = vpop.f32.mrb[0].mxu0
  %v1170 = vadd.f32 0.0, %v1169
  %v1171 = vpop.f32.mrb[0].mxu0
  %v1172 = vpop.f32.mrb[0].mxu0
  %v1173 = vpop.f32.mrb[0].mxu0
  %1174 = vdwg.mxu0
  %v1175 = vadd.f32 %v343, %v1170
  %1176 = vrot.lane.b32.xlu0 %v1122, 64
  %v1177 = vpop.permute.xlu0 %1176
  %v1179 = vsel %vm146, %v1177, 0
  %1181 = vmatprep.subr.bf16.mxu0 0
  %1182 = vmatpush1.bf16.msra.mxu0 %v697
  %1183 = vmatprep.subr.bf16.mxu0 0
  %1184 = vmatpush1.bf16.msra.mxu0 %v698
  %1185 = vmatprep.subr.bf16.mxu0 0
  %1186 = vmatpush1.bf16.msra.mxu0 0
  %1187 = vmatprep.subr.bf16.mxu0 0
  %1188 = vmatpush1.bf16.msra.mxu0 0
  %1189 = vmatprep.subr.bf16.mxu0 0
  %1190 = vmatpush1.bf16.msra.mxu0 0
  %1191 = vmatprep.subr.bf16.mxu0 0
  %1192 = vmatpush1.bf16.msra.mxu0 0
  %1193 = vmatprep.subr.bf16.mxu0 0
  %1194 = vmatpush1.bf16.msra.mxu0 0
  %1195 = vmatprep.subr.bf16.mxu0 0
  %1196 = vmatpush1.bf16.msra.mxu0 0
  %1197 = vmatprep.subr.bf16.mxu0 0
  %1198 = vmatpush1.bf16.msra.mxu0 0
  %1199 = vmatprep.subr.bf16.mxu0 0
  %1200 = vmatpush1.bf16.msra.mxu0 0
  %1201 = vmatprep.subr.bf16.mxu0 0
  %1202 = vmatpush1.bf16.msra.mxu0 0
  %1203 = vmatprep.subr.bf16.mxu0 0
  %1204 = vmatpush1.bf16.msra.mxu0 0
  %1205 = vmatprep.subr.bf16.mxu0 0
  %1206 = vmatpush1.bf16.msra.mxu0 0
  %1207 = vmatprep.subr.bf16.mxu0 0
  %1208 = vmatpush1.bf16.msra.mxu0 0
  %1209 = vmatprep.subr.bf16.mxu0 0
  %1210 = vmatpush1.bf16.msra.mxu0 0
  %1211 = vmatprep.subr.bf16.mxu0 0
  %1212 = vmatpush1.bf16.msra.mxu0 0
  %1213 = vmatprep.mubr.bf16.mxu0 0
  %1214 = vmatmul.mubr.bf16.gmra.mrb[0].mxu0 %v1179
  %v1215 = vpop.f32.mrb[0].mxu0
  %v1216 = vadd.f32 0.0, %v1215
  %v1217 = vpop.f32.mrb[0].mxu0
  %v1218 = vpop.f32.mrb[0].mxu0
  %v1219 = vpop.f32.mrb[0].mxu0
  %1220 = vdwg.mxu0
  %v1221 = vadd.f32 %v604, %v1216
  %v1222 = vxor.u32 %v1175, 2147483648
  %v1223 = vmul.f32 %v1222, 1.442695
  %v1224 = vpow.pop %v1223
  %v1225 = vadd.f32 %v1224, 1.0
  %v1226 = vrcp.pop %v1225
  %v1227 = vmul.f32 1.0, %v1226
  %v1228 = vtanh.pop %v1175
  %v1229 = vmul.f32 %v1227, %v1083
  %1231 = vrot.lane.b32.xlu0 %v1228, 32
  %v1232 = vpop.permute.xlu0 %1231
  %v1234 = vmul.f32 %v1227, %v1232
  %1236 = vrot.lane.b32.xlu0 %v1234, 32
  %v1237 = vpop.permute.xlu0 %1236
  %v1239 = vadd.f32 %v1229, %v1237
  %v1240 = vtanh.pop %v1239
  %1242 = vrot.lane.b32.xlu0 %v1240, 32
  %v1243 = vpop.permute.xlu0 %1242
  %v1245 = vmul.f32 %v1227, %v1243
  %v1246 = vxor.u32 %v1221, 2147483648
  %v1247 = vmul.f32 %v1246, 1.442695
  %v1248 = vpow.pop %v1247
  %v1249 = vadd.f32 %v1248, 1.0
  %v1250 = vrcp.pop %v1249
  %v1251 = vmul.f32 1.0, %v1250
  %v1252 = vtanh.pop %v1221
  %v1253 = vmul.f32 %v1251, %v1107
  %1255 = vrot.lane.b32.xlu0 %v1252, 32
  %v1256 = vpop.permute.xlu0 %1255
  %v1258 = vmul.f32 %v1251, %v1256
  %1260 = vrot.lane.b32.xlu0 %v1258, 32
  %v1261 = vpop.permute.xlu0 %1260
  %v1263 = vadd.f32 %v1253, %v1261
  %v1264 = vtanh.pop %v1263
  %1266 = vrot.lane.b32.xlu0 %v1264, 32
  %v1267 = vpop.permute.xlu0 %1266
  %v1269 = vmul.f32 %v1251, %v1267
  %v1270 = vpack.c.bf16 %v1245, %v1245
  %v1272 = vunpack.c.l.b16 %v1270
  %v1273 = vpack.c.b16 %v1272, %v1272
  %1274 = vrot.lane.b32.xlu0 %v1273, 64
  %v1275 = vpop.permute.xlu0 %1274
  %1277 = vst.msk [vmem:[%s8 + $0xc] sm:$0xf] %vm808, %v1275
  %v1278 = vpack.c.bf16 %v1269, %v1269
  %v1280 = vunpack.c.l.b16 %v1278
  %v1281 = vpack.c.b16 %v1280, %v1280
  %1282 = vrot.lane.b32.xlu0 %v1281, 64
  %v1283 = vpop.permute.xlu0 %1282
  %1285 = vst.msk [vmem:[%s86 + $0x10] sm:$0xf] %vm808, %v1283
  %1286 = vrot.lane.b32.xlu0 %v1270, 64
  %v1287 = vpop.permute.xlu0 %1286
  %v1289 = vsel %vm146, %v1287, 0
  %1291 = vmatprep.subr.bf16.mxu0 0
  %1292 = vmatpush1.bf16.msra.mxu0 %v640
  %1293 = vmatprep.subr.bf16.mxu0 0
  %1294 = vmatpush1.bf16.msra.mxu0 %v641
  %1295 = vmatprep.subr.bf16.mxu0 0
  %1296 = vmatpush1.bf16.msra.mxu0 0
  %1297 = vmatprep.subr.bf16.mxu0 0
  %1298 = vmatpush1.bf16.msra.mxu0 0
  %1299 = vmatprep.subr.bf16.mxu0 0
  %1300 = vmatpush1.bf16.msra.mxu0 0
  %1301 = vmatprep.subr.bf16.mxu0 0
  %1302 = vmatpush1.bf16.msra.mxu0 0
  %1303 = vmatprep.subr.bf16.mxu0 0
  %1304 = vmatpush1.bf16.msra.mxu0 0
  %1305 = vmatprep.subr.bf16.mxu0 0
  %1306 = vmatpush1.bf16.msra.mxu0 0
  %1307 = vmatprep.subr.bf16.mxu0 0
  %1308 = vmatpush1.bf16.msra.mxu0 0
  %1309 = vmatprep.subr.bf16.mxu0 0
  %1310 = vmatpush1.bf16.msra.mxu0 0
  %1311 = vmatprep.subr.bf16.mxu0 0
  %1312 = vmatpush1.bf16.msra.mxu0 0
  %1313 = vmatprep.subr.bf16.mxu0 0
  %1314 = vmatpush1.bf16.msra.mxu0 0
  %1315 = vmatprep.subr.bf16.mxu0 0
  %1316 = vmatpush1.bf16.msra.mxu0 0
  %1317 = vmatprep.subr.bf16.mxu0 0
  %1318 = vmatpush1.bf16.msra.mxu0 0
  %1319 = vmatprep.subr.bf16.mxu0 0
  %1320 = vmatpush1.bf16.msra.mxu0 0
  %1321 = vmatprep.subr.bf16.mxu0 0
  %1322 = vmatpush1.bf16.msra.mxu0 0
  %1323 = vmatprep.mubr.bf16.mxu0 0
  %1324 = vmatmul.mubr.bf16.gmra.mrb[0].mxu0 %v1289
  %v1325 = vpop.f32.mrb[0].mxu0
  %v1326 = vadd.f32 0.0, %v1325
  %v1327 = vpop.f32.mrb[0].mxu0
  %v1328 = vpop.f32.mrb[0].mxu0
  %v1329 = vpop.f32.mrb[0].mxu0
  %1330 = vdwg.mxu0
  %v1331 = vadd.f32 %v344, %v1326
  %1332 = vrot.lane.b32.xlu0 %v1278, 64
  %v1333 = vpop.permute.xlu0 %1332
  %v1335 = vsel %vm146, %v1333, 0
  %1337 = vmatprep.subr.bf16.mxu0 0
  %1338 = vmatpush1.bf16.msra.mxu0 %v697
  %1339 = vmatprep.subr.bf16.mxu0 0
  %1340 = vmatpush1.bf16.msra.mxu0 %v698
  %1341 = vmatprep.subr.bf16.mxu0 0
  %1342 = vmatpush1.bf16.msra.mxu0 0
  %1343 = vmatprep.subr.bf16.mxu0 0
  %1344 = vmatpush1.bf16.msra.mxu0 0
  %1345 = vmatprep.subr.bf16.mxu0 0
  %1346 = vmatpush1.bf16.msra.mxu0 0
  %1347 = vmatprep.subr.bf16.mxu0 0
  %1348 = vmatpush1.bf16.msra.mxu0 0
  %1349 = vmatprep.subr.bf16.mxu0 0
  %1350 = vmatpush1.bf16.msra.mxu0 0
  %1351 = vmatprep.subr.bf16.mxu0 0
  %1352 = vmatpush1.bf16.msra.mxu0 0
  %1353 = vmatprep.subr.bf16.mxu0 0
  %1354 = vmatpush1.bf16.msra.mxu0 0
  %1355 = vmatprep.subr.bf16.mxu0 0
  %1356 = vmatpush1.bf16.msra.mxu0 0
  %1357 = vmatprep.subr.bf16.mxu0 0
  %1358 = vmatpush1.bf16.msra.mxu0 0
  %1359 = vmatprep.subr.bf16.mxu0 0
  %1360 = vmatpush1.bf16.msra.mxu0 0
  %1361 = vmatprep.subr.bf16.mxu0 0
  %1362 = vmatpush1.bf16.msra.mxu0 0
  %1363 = vmatprep.subr.bf16.mxu0 0
  %1364 = vmatpush1.bf16.msra.mxu0 0
  %1365 = vmatprep.subr.bf16.mxu0 0
  %1366 = vmatpush1.bf16.msra.mxu0 0
  %1367 = vmatprep.subr.bf16.mxu0 0
  %1368 = vmatpush1.bf16.msra.mxu0 0
  %1369 = vmatprep.mubr.bf16.mxu0 0
  %1370 = vmatmul.mubr.bf16.gmra.mrb[0].mxu0 %v1335
  %v1371 = vpop.f32.mrb[0].mxu0
  %v1372 = vadd.f32 0.0, %v1371
  %v1373 = vpop.f32.mrb[0].mxu0
  %v1374 = vpop.f32.mrb[0].mxu0
  %v1375 = vpop.f32.mrb[0].mxu0
  %1376 = vdwg.mxu0
  %v1377 = vadd.f32 %v603, %v1372
  %v1378 = vxor.u32 %v1331, 2147483648
  %v1379 = vmul.f32 %v1378, 1.442695
  %v1380 = vpow.pop %v1379
  %v1381 = vadd.f32 %v1380, 1.0
  %v1382 = vrcp.pop %v1381
  %v1383 = vmul.f32 1.0, %v1382
  %v1384 = vtanh.pop %v1331
  %v1385 = vmul.f32 %v1383, %v1239
  %1387 = vrot.lane.b32.xlu0 %v1384, 32
  %v1388 = vpop.permute.xlu0 %1387
  %v1390 = vmul.f32 %v1383, %v1388
  %1392 = vrot.lane.b32.xlu0 %v1390, 32
  %v1393 = vpop.permute.xlu0 %1392
  %v1395 = vadd.f32 %v1385, %v1393
  %v1396 = vtanh.pop %v1395
  %1398 = vrot.lane.b32.xlu0 %v1396, 32
  %v1399 = vpop.permute.xlu0 %1398
  %v1401 = vmul.f32 %v1383, %v1399
  %v1402 = vxor.u32 %v1377, 2147483648
  %v1403 = vmul.f32 %v1402, 1.442695
  %v1404 = vpow.pop %v1403
  %v1405 = vadd.f32 %v1404, 1.0
  %v1406 = vrcp.pop %v1405
  %v1407 = vmul.f32 1.0, %v1406
  %v1408 = vtanh.pop %v1377
  %v1409 = vmul.f32 %v1407, %v1263
  %1411 = vrot.lane.b32.xlu0 %v1408, 32
  %v1412 = vpop.permute.xlu0 %1411
  %v1414 = vmul.f32 %v1407, %v1412
  %1416 = vrot.lane.b32.xlu0 %v1414, 32
  %v1417 = vpop.permute.xlu0 %1416
  %v1419 = vadd.f32 %v1409, %v1417
  %v1420 = vtanh.pop %v1419
  %1422 = vrot.lane.b32.xlu0 %v1420, 32
  %v1423 = vpop.permute.xlu0 %1422
  %v1425 = vmul.f32 %v1407, %v1423
  %v1426 = vpack.c.bf16 %v1401, %v1401
  %v1428 = vunpack.c.l.b16 %v1426
  %v1429 = vpack.c.b16 %v1428, %v1428
  %1430 = vrot.lane.b32.xlu0 %v1429, 64
  %v1431 = vpop.permute.xlu0 %1430
  %1433 = vst.msk [vmem:[%s8 + $0x10] sm:$0xf] %vm808, %v1431
  %v1434 = vpack.c.bf16 %v1425, %v1425
  %v1436 = vunpack.c.l.b16 %v1434
  %v1437 = vpack.c.b16 %v1436, %v1436
  %1438 = vrot.lane.b32.xlu0 %v1437, 64
  %v1439 = vpop.permute.xlu0 %1438
  %1441 = vst.msk [vmem:[%s86 + $0xc] sm:$0xf] %vm808, %v1439
  %1442 = vrot.lane.b32.xlu0 %v1426, 64
  %v1443 = vpop.permute.xlu0 %1442
  %v1445 = vsel %vm146, %v1443, 0
  %1447 = vmatprep.subr.bf16.mxu0 0
  %1448 = vmatpush1.bf16.msra.mxu0 %v640
  %1449 = vmatprep.subr.bf16.mxu0 0
  %1450 = vmatpush1.bf16.msra.mxu0 %v641
  %1451 = vmatprep.subr.bf16.mxu0 0
  %1452 = vmatpush1.bf16.msra.mxu0 0
  %1453 = vmatprep.subr.bf16.mxu0 0
  %1454 = vmatpush1.bf16.msra.mxu0 0
  %1455 = vmatprep.subr.bf16.mxu0 0
  %1456 = vmatpush1.bf16.msra.mxu0 0
  %1457 = vmatprep.subr.bf16.mxu0 0
  %1458 = vmatpush1.bf16.msra.mxu0 0
  %1459 = vmatprep.subr.bf16.mxu0 0
  %1460 = vmatpush1.bf16.msra.mxu0 0
  %1461 = vmatprep.subr.bf16.mxu0 0
  %1462 = vmatpush1.bf16.msra.mxu0 0
  %1463 = vmatprep.subr.bf16.mxu0 0
  %1464 = vmatpush1.bf16.msra.mxu0 0
  %1465 = vmatprep.subr.bf16.mxu0 0
  %1466 = vmatpush1.bf16.msra.mxu0 0
  %1467 = vmatprep.subr.bf16.mxu0 0
  %1468 = vmatpush1.bf16.msra.mxu0 0
  %1469 = vmatprep.subr.bf16.mxu0 0
  %1470 = vmatpush1.bf16.msra.mxu0 0
  %1471 = vmatprep.subr.bf16.mxu0 0
  %1472 = vmatpush1.bf16.msra.mxu0 0
  %1473 = vmatprep.subr.bf16.mxu0 0
  %1474 = vmatpush1.bf16.msra.mxu0 0
  %1475 = vmatprep.subr.bf16.mxu0 0
  %1476 = vmatpush1.bf16.msra.mxu0 0
  %1477 = vmatprep.subr.bf16.mxu0 0
  %1478 = vmatpush1.bf16.msra.mxu0 0
  %1479 = vmatprep.mubr.bf16.mxu0 0
  %1480 = vmatmul.mubr.bf16.gmra.mrb[0].mxu0 %v1445
  %v1481 = vpop.f32.mrb[0].mxu0
  %v1482 = vadd.f32 0.0, %v1481
  %v1483 = vpop.f32.mrb[0].mxu0
  %v1484 = vpop.f32.mrb[0].mxu0
  %v1485 = vpop.f32.mrb[0].mxu0
  %1486 = vdwg.mxu0
  %v1487 = vadd.f32 %v345, %v1482
  %1488 = vrot.lane.b32.xlu0 %v1434, 64
  %v1489 = vpop.permute.xlu0 %1488
  %v1491 = vsel %vm146, %v1489, 0
  %1493 = vmatprep.subr.bf16.mxu0 0
  %1494 = vmatpush1.bf16.msra.mxu0 %v697
  %1495 = vmatprep.subr.bf16.mxu0 0
  %1496 = vmatpush1.bf16.msra.mxu0 %v698
  %1497 = vmatprep.subr.bf16.mxu0 0
  %1498 = vmatpush1.bf16.msra.mxu0 0
  %1499 = vmatprep.subr.bf16.mxu0 0
  %1500 = vmatpush1.bf16.msra.mxu0 0
  %1501 = vmatprep.subr.bf16.mxu0 0
  %1502 = vmatpush1.bf16.msra.mxu0 0
  %1503 = vmatprep.subr.bf16.mxu0 0
  %1504 = vmatpush1.bf16.msra.mxu0 0
  %1505 = vmatprep.subr.bf16.mxu0 0
  %1506 = vmatpush1.bf16.msra.mxu0 0
  %1507 = vmatprep.subr.bf16.mxu0 0
  %1508 = vmatpush1.bf16.msra.mxu0 0
  %1509 = vmatprep.subr.bf16.mxu0 0
  %1510 = vmatpush1.bf16.msra.mxu0 0
  %1511 = vmatprep.subr.bf16.mxu0 0
  %1512 = vmatpush1.bf16.msra.mxu0 0
  %1513 = vmatprep.subr.bf16.mxu0 0
  %1514 = vmatpush1.bf16.msra.mxu0 0
  %1515 = vmatprep.subr.bf16.mxu0 0
  %1516 = vmatpush1.bf16.msra.mxu0 0
  %1517 = vmatprep.subr.bf16.mxu0 0
  %1518 = vmatpush1.bf16.msra.mxu0 0
  %1519 = vmatprep.subr.bf16.mxu0 0
  %1520 = vmatpush1.bf16.msra.mxu0 0
  %1521 = vmatprep.subr.bf16.mxu0 0
  %1522 = vmatpush1.bf16.msra.mxu0 0
  %1523 = vmatprep.subr.bf16.mxu0 0
  %1524 = vmatpush1.bf16.msra.mxu0 0
  %1525 = vmatprep.mubr.bf16.mxu0 0
  %1526 = vmatmul.mubr.bf16.gmra.mrb[0].mxu0 %v1491
  %v1527 = vpop.f32.mrb[0].mxu0
  %v1528 = vadd.f32 0.0, %v1527
  %v1529 = vpop.f32.mrb[0].mxu0
  %v1530 = vpop.f32.mrb[0].mxu0
  %v1531 = vpop.f32.mrb[0].mxu0
  %1532 = vdwg.mxu0
  %v1533 = vadd.f32 %v602, %v1528
  %v1534 = vxor.u32 %v1487, 2147483648
  %v1535 = vmul.f32 %v1534, 1.442695
  %v1536 = vpow.pop %v1535
  %v1537 = vadd.f32 %v1536, 1.0
  %v1538 = vrcp.pop %v1537
  %v1539 = vmul.f32 1.0, %v1538
  %v1540 = vtanh.pop %v1487
  %v1541 = vmul.f32 %v1539, %v1395
  %1543 = vrot.lane.b32.xlu0 %v1540, 32
  %v1544 = vpop.permute.xlu0 %1543
  %v1546 = vmul.f32 %v1539, %v1544
  %1548 = vrot.lane.b32.xlu0 %v1546, 32
  %v1549 = vpop.permute.xlu0 %1548
  %v1551 = vadd.f32 %v1541, %v1549
  %v1552 = vtanh.pop %v1551
  %1554 = vrot.lane.b32.xlu0 %v1552, 32
  %v1555 = vpop.permute.xlu0 %1554
  %v1557 = vmul.f32 %v1539, %v1555
  %v1558 = vxor.u32 %v1533, 2147483648
  %v1559 = vmul.f32 %v1558, 1.442695
  %v1560 = vpow.pop %v1559
  %v1561 = vadd.f32 %v1560, 1.0
  %v1562 = vrcp.pop %v1561
  %v1563 = vmul.f32 1.0, %v1562
  %v1564 = vtanh.pop %v1533
  %v1565 = vmul.f32 %v1563, %v1419
  %1567 = vrot.lane.b32.xlu0 %v1564, 32
  %v1568 = vpop.permute.xlu0 %1567
  %v1570 = vmul.f32 %v1563, %v1568
  %1572 = vrot.lane.b32.xlu0 %v1570, 32
  %v1573 = vpop.permute.xlu0 %1572
  %v1575 = vadd.f32 %v1565, %v1573
  %v1576 = vtanh.pop %v1575
  %1578 = vrot.lane.b32.xlu0 %v1576, 32
  %v1579 = vpop.permute.xlu0 %1578
  %v1581 = vmul.f32 %v1563, %v1579
  %v1582 = vpack.c.bf16 %v1557, %v1557
  %v1584 = vunpack.c.l.b16 %v1582
  %v1585 = vpack.c.b16 %v1584, %v1584
  %1586 = vrot.lane.b32.xlu0 %v1585, 64
  %v1587 = vpop.permute.xlu0 %1586
  %1589 = vst.msk [vmem:[%s8 + $0x14] sm:$0xf] %vm808, %v1587
  %v1590 = vpack.c.bf16 %v1581, %v1581
  %v1592 = vunpack.c.l.b16 %v1590
  %v1593 = vpack.c.b16 %v1592, %v1592
  %1594 = vrot.lane.b32.xlu0 %v1593, 64
  %v1595 = vpop.permute.xlu0 %1594
  %1597 = vst.msk [vmem:[%s86 + $0x8] sm:$0xf] %vm808, %v1595
  %1598 = vrot.lane.b32.xlu0 %v1582, 64
  %v1599 = vpop.permute.xlu0 %1598
  %v1601 = vsel %vm146, %v1599, 0
  %1603 = vmatprep.subr.bf16.mxu0 0
  %1604 = vmatpush1.bf16.msra.mxu0 %v640
  %1605 = vmatprep.subr.bf16.mxu0 0
  %1606 = vmatpush1.bf16.msra.mxu0 %v641
  %1607 = vmatprep.subr.bf16.mxu0 0
  %1608 = vmatpush1.bf16.msra.mxu0 0
  %1609 = vmatprep.subr.bf16.mxu0 0
  %1610 = vmatpush1.bf16.msra.mxu0 0
  %1611 = vmatprep.subr.bf16.mxu0 0
  %1612 = vmatpush1.bf16.msra.mxu0 0
  %1613 = vmatprep.subr.bf16.mxu0 0
  %1614 = vmatpush1.bf16.msra.mxu0 0
  %1615 = vmatprep.subr.bf16.mxu0 0
  %1616 = vmatpush1.bf16.msra.mxu0 0
  %1617 = vmatprep.subr.bf16.mxu0 0
  %1618 = vmatpush1.bf16.msra.mxu0 0
  %1619 = vmatprep.subr.bf16.mxu0 0
  %1620 = vmatpush1.bf16.msra.mxu0 0
  %1621 = vmatprep.subr.bf16.mxu0 0
  %1622 = vmatpush1.bf16.msra.mxu0 0
  %1623 = vmatprep.subr.bf16.mxu0 0
  %1624 = vmatpush1.bf16.msra.mxu0 0
  %1625 = vmatprep.subr.bf16.mxu0 0
  %1626 = vmatpush1.bf16.msra.mxu0 0
  %1627 = vmatprep.subr.bf16.mxu0 0
  %1628 = vmatpush1.bf16.msra.mxu0 0
  %1629 = vmatprep.subr.bf16.mxu0 0
  %1630 = vmatpush1.bf16.msra.mxu0 0
  %1631 = vmatprep.subr.bf16.mxu0 0
  %1632 = vmatpush1.bf16.msra.mxu0 0
  %1633 = vmatprep.subr.bf16.mxu0 0
  %1634 = vmatpush1.bf16.msra.mxu0 0
  %1635 = vmatprep.mubr.bf16.mxu0 0
  %1636 = vmatmul.mubr.bf16.gmra.mrb[0].mxu0 %v1601
  %v1637 = vpop.f32.mrb[0].mxu0
  %v1638 = vadd.f32 0.0, %v1637
  %v1639 = vpop.f32.mrb[0].mxu0
  %v1640 = vpop.f32.mrb[0].mxu0
  %v1641 = vpop.f32.mrb[0].mxu0
  %1642 = vdwg.mxu0
  %v1643 = vadd.f32 %v346, %v1638
  %1644 = vrot.lane.b32.xlu0 %v1590, 64
  %v1645 = vpop.permute.xlu0 %1644
  %v1647 = vsel %vm146, %v1645, 0
  %1649 = vmatprep.subr.bf16.mxu0 0
  %1650 = vmatpush1.bf16.msra.mxu0 %v697
  %1651 = vmatprep.subr.bf16.mxu0 0
  %1652 = vmatpush1.bf16.msra.mxu0 %v698
  %1653 = vmatprep.subr.bf16.mxu0 0
  %1654 = vmatpush1.bf16.msra.mxu0 0
  %1655 = vmatprep.subr.bf16.mxu0 0
  %1656 = vmatpush1.bf16.msra.mxu0 0
  %1657 = vmatprep.subr.bf16.mxu0 0
  %1658 = vmatpush1.bf16.msra.mxu0 0
  %1659 = vmatprep.subr.bf16.mxu0 0
  %1660 = vmatpush1.bf16.msra.mxu0 0
  %1661 = vmatprep.subr.bf16.mxu0 0
  %1662 = vmatpush1.bf16.msra.mxu0 0
  %1663 = vmatprep.subr.bf16.mxu0 0
  %1664 = vmatpush1.bf16.msra.mxu0 0
  %1665 = vmatprep.subr.bf16.mxu0 0
  %1666 = vmatpush1.bf16.msra.mxu0 0
  %1667 = vmatprep.subr.bf16.mxu0 0
  %1668 = vmatpush1.bf16.msra.mxu0 0
  %1669 = vmatprep.subr.bf16.mxu0 0
  %1670 = vmatpush1.bf16.msra.mxu0 0
  %1671 = vmatprep.subr.bf16.mxu0 0
  %1672 = vmatpush1.bf16.msra.mxu0 0
  %1673 = vmatprep.subr.bf16.mxu0 0
  %1674 = vmatpush1.bf16.msra.mxu0 0
  %1675 = vmatprep.subr.bf16.mxu0 0
  %1676 = vmatpush1.bf16.msra.mxu0 0
  %1677 = vmatprep.subr.bf16.mxu0 0
  %1678 = vmatpush1.bf16.msra.mxu0 0
  %1679 = vmatprep.subr.bf16.mxu0 0
  %1680 = vmatpush1.bf16.msra.mxu0 0
  %1681 = vmatprep.mubr.bf16.mxu0 0
  %1682 = vmatmul.mubr.bf16.gmra.mrb[0].mxu0 %v1647
  %v1683 = vpop.f32.mrb[0].mxu0
  %v1684 = vadd.f32 0.0, %v1683
  %v1685 = vpop.f32.mrb[0].mxu0
  %v1686 = vpop.f32.mrb[0].mxu0
  %v1687 = vpop.f32.mrb[0].mxu0
  %1688 = vdwg.mxu0
  %v1689 = vadd.f32 %v601, %v1684
  %v1690 = vxor.u32 %v1643, 2147483648
  %v1691 = vmul.f32 %v1690, 1.442695
  %v1692 = vpow.pop %v1691
  %v1693 = vadd.f32 %v1692, 1.0
  %v1694 = vrcp.pop %v1693
  %v1695 = vmul.f32 1.0, %v1694
  %v1696 = vtanh.pop %v1643
  %v1697 = vmul.f32 %v1695, %v1551
  %1699 = vrot.lane.b32.xlu0 %v1696, 32
  %v1700 = vpop.permute.xlu0 %1699
  %v1702 = vmul.f32 %v1695, %v1700
  %1704 = vrot.lane.b32.xlu0 %v1702, 32
  %v1705 = vpop.permute.xlu0 %1704
  %v1707 = vadd.f32 %v1697, %v1705
  %v1708 = vtanh.pop %v1707
  %1710 = vrot.lane.b32.xlu0 %v1708, 32
  %v1711 = vpop.permute.xlu0 %1710
  %v1713 = vmul.f32 %v1695, %v1711
  %v1714 = vxor.u32 %v1689, 2147483648
  %v1715 = vmul.f32 %v1714, 1.442695
  %v1716 = vpow.pop %v1715
  %v1717 = vadd.f32 %v1716, 1.0
  %v1718 = vrcp.pop %v1717
  %v1719 = vmul.f32 1.0, %v1718
  %v1720 = vtanh.pop %v1689
  %v1721 = vmul.f32 %v1719, %v1575
  %1723 = vrot.lane.b32.xlu0 %v1720, 32
  %v1724 = vpop.permute.xlu0 %1723
  %v1726 = vmul.f32 %v1719, %v1724
  %1728 = vrot.lane.b32.xlu0 %v1726, 32
  %v1729 = vpop.permute.xlu0 %1728
  %v1731 = vadd.f32 %v1721, %v1729
  %v1732 = vtanh.pop %v1731
  %1734 = vrot.lane.b32.xlu0 %v1732, 32
  %v1735 = vpop.permute.xlu0 %1734
  %v1737 = vmul.f32 %v1719, %v1735
  %v1738 = vpack.c.bf16 %v1713, %v1713
  %v1740 = vunpack.c.l.b16 %v1738
  %v1741 = vpack.c.b16 %v1740, %v1740
  %1742 = vrot.lane.b32.xlu0 %v1741, 64
  %v1743 = vpop.permute.xlu0 %1742
  %1745 = vst.msk [vmem:[%s8 + $0x18] sm:$0xf] %vm808, %v1743
  %v1746 = vpack.c.bf16 %v1737, %v1737
  %v1748 = vunpack.c.l.b16 %v1746
  %v1749 = vpack.c.b16 %v1748, %v1748
  %1750 = vrot.lane.b32.xlu0 %v1749, 64
  %v1751 = vpop.permute.xlu0 %1750
  %1753 = vst.msk [vmem:[%s86 + $0x4] sm:$0xf] %vm808, %v1751
  %1754 = vrot.lane.b32.xlu0 %v1738, 64
  %v1755 = vpop.permute.xlu0 %1754
  %v1757 = vsel %vm146, %v1755, 0
  %1759 = vmatprep.subr.bf16.mxu0 0
  %1760 = vmatpush1.bf16.msra.mxu0 %v640
  %1761 = vmatprep.subr.bf16.mxu0 0
  %1762 = vmatpush1.bf16.msra.mxu0 %v641
  %1763 = vmatprep.subr.bf16.mxu0 0
  %1764 = vmatpush1.bf16.msra.mxu0 0
  %1765 = vmatprep.subr.bf16.mxu0 0
  %1766 = vmatpush1.bf16.msra.mxu0 0
  %1767 = vmatprep.subr.bf16.mxu0 0
  %1768 = vmatpush1.bf16.msra.mxu0 0
  %1769 = vmatprep.subr.bf16.mxu0 0
  %1770 = vmatpush1.bf16.msra.mxu0 0
  %1771 = vmatprep.subr.bf16.mxu0 0
  %1772 = vmatpush1.bf16.msra.mxu0 0
  %1773 = vmatprep.subr.bf16.mxu0 0
  %1774 = vmatpush1.bf16.msra.mxu0 0
  %1775 = vmatprep.subr.bf16.mxu0 0
  %1776 = vmatpush1.bf16.msra.mxu0 0
  %1777 = vmatprep.subr.bf16.mxu0 0
  %1778 = vmatpush1.bf16.msra.mxu0 0
  %1779 = vmatprep.subr.bf16.mxu0 0
  %1780 = vmatpush1.bf16.msra.mxu0 0
  %1781 = vmatprep.subr.bf16.mxu0 0
  %1782 = vmatpush1.bf16.msra.mxu0 0
  %1783 = vmatprep.subr.bf16.mxu0 0
  %1784 = vmatpush1.bf16.msra.mxu0 0
  %1785 = vmatprep.subr.bf16.mxu0 0
  %1786 = vmatpush1.bf16.msra.mxu0 0
  %1787 = vmatprep.subr.bf16.mxu0 0
  %1788 = vmatpush1.bf16.msra.mxu0 0
  %1789 = vmatprep.subr.bf16.mxu0 0
  %1790 = vmatpush1.bf16.msra.mxu0 0
  %1791 = vmatprep.mubr.bf16.mxu0 0
  %1792 = vmatmul.mubr.bf16.gmra.mrb[0].mxu0 %v1757
  %v1793 = vpop.f32.mrb[0].mxu0
  %v1794 = vadd.f32 0.0, %v1793
  %v1795 = vpop.f32.mrb[0].mxu0
  %v1796 = vpop.f32.mrb[0].mxu0
  %v1797 = vpop.f32.mrb[0].mxu0
  %1798 = vdwg.mxu0
  %v1799 = vadd.f32 %v347, %v1794
  %1800 = vrot.lane.b32.xlu0 %v1746, 64
  %v1801 = vpop.permute.xlu0 %1800
  %v1803 = vsel %vm146, %v1801, 0
  %1805 = vmatprep.subr.bf16.mxu0 0
  %1806 = vmatpush1.bf16.msra.mxu0 %v697
  %1807 = vmatprep.subr.bf16.mxu0 0
  %1808 = vmatpush1.bf16.msra.mxu0 %v698
  %1809 = vmatprep.subr.bf16.mxu0 0
  %1810 = vmatpush1.bf16.msra.mxu0 0
  %1811 = vmatprep.subr.bf16.mxu0 0
  %1812 = vmatpush1.bf16.msra.mxu0 0
  %1813 = vmatprep.subr.bf16.mxu0 0
  %1814 = vmatpush1.bf16.msra.mxu0 0
  %1815 = vmatprep.subr.bf16.mxu0 0
  %1816 = vmatpush1.bf16.msra.mxu0 0
  %1817 = vmatprep.subr.bf16.mxu0 0
  %1818 = vmatpush1.bf16.msra.mxu0 0
  %1819 = vmatprep.subr.bf16.mxu0 0
  %1820 = vmatpush1.bf16.msra.mxu0 0
  %1821 = vmatprep.subr.bf16.mxu0 0
  %1822 = vmatpush1.bf16.msra.mxu0 0
  %1823 = vmatprep.subr.bf16.mxu0 0
  %1824 = vmatpush1.bf16.msra.mxu0 0
  %1825 = vmatprep.subr.bf16.mxu0 0
  %1826 = vmatpush1.bf16.msra.mxu0 0
  %1827 = vmatprep.subr.bf16.mxu0 0
  %1828 = vmatpush1.bf16.msra.mxu0 0
  %1829 = vmatprep.subr.bf16.mxu0 0
  %1830 = vmatpush1.bf16.msra.mxu0 0
  %1831 = vmatprep.subr.bf16.mxu0 0
  %1832 = vmatpush1.bf16.msra.mxu0 0
  %1833 = vmatprep.subr.bf16.mxu0 0
  %1834 = vmatpush1.bf16.msra.mxu0 0
  %1835 = vmatprep.subr.bf16.mxu0 0
  %1836 = vmatpush1.bf16.msra.mxu0 0
  %1837 = vmatprep.mubr.bf16.mxu0 0
  %1838 = vmatmul.mubr.bf16.gmra.mrb[0].mxu0 %v1803
  %v1839 = vpop.f32.mrb[0].mxu0
  %v1840 = vadd.f32 0.0, %v1839
  %v1841 = vpop.f32.mrb[0].mxu0
  %v1842 = vpop.f32.mrb[0].mxu0
  %v1843 = vpop.f32.mrb[0].mxu0
  %1844 = vdwg.mxu0
  %v1845 = vadd.f32 %v600, %v1840
  %v1846 = vxor.u32 %v1799, 2147483648
  %v1847 = vmul.f32 %v1846, 1.442695
  %v1848 = vpow.pop %v1847
  %v1849 = vadd.f32 %v1848, 1.0
  %v1850 = vrcp.pop %v1849
  %v1851 = vmul.f32 1.0, %v1850
  %v1852 = vtanh.pop %v1799
  %v1853 = vmul.f32 %v1851, %v1707
  %1855 = vrot.lane.b32.xlu0 %v1852, 32
  %v1856 = vpop.permute.xlu0 %1855
  %v1858 = vmul.f32 %v1851, %v1856
  %1860 = vrot.lane.b32.xlu0 %v1858, 32
  %v1861 = vpop.permute.xlu0 %1860
  %v1863 = vadd.f32 %v1853, %v1861
  %v1864 = vtanh.pop %v1863
  %1866 = vrot.lane.b32.xlu0 %v1864, 32
  %v1867 = vpop.permute.xlu0 %1866
  %v1869 = vmul.f32 %v1851, %v1867
  %v1870 = vxor.u32 %v1845, 2147483648
  %v1871 = vmul.f32 %v1870, 1.442695
  %v1872 = vpow.pop %v1871
  %v1873 = vadd.f32 %v1872, 1.0
  %v1874 = vrcp.pop %v1873
  %v1875 = vmul.f32 1.0, %v1874
  %v1876 = vtanh.pop %v1845
  %v1877 = vmul.f32 %v1875, %v1731
  %1879 = vrot.lane.b32.xlu0 %v1876, 32
  %v1880 = vpop.permute.xlu0 %1879
  %v1882 = vmul.f32 %v1875, %v1880
  %1884 = vrot.lane.b32.xlu0 %v1882, 32
  %v1885 = vpop.permute.xlu0 %1884
  %v1887 = vadd.f32 %v1877, %v1885
  %v1888 = vtanh.pop %v1887
  %1890 = vrot.lane.b32.xlu0 %v1888, 32
  %v1891 = vpop.permute.xlu0 %1890
  %v1893 = vmul.f32 %v1875, %v1891
  %v1894 = vpack.c.bf16 %v1869, %v1869
  %v1896 = vunpack.c.l.b16 %v1894
  %v1897 = vpack.c.b16 %v1896, %v1896
  %1898 = vrot.lane.b32.xlu0 %v1897, 64
  %v1899 = vpop.permute.xlu0 %1898
  %1901 = vst.msk [vmem:[%s8 + $0x1c] sm:$0xf] %vm808, %v1899
  %v1902 = vpack.c.bf16 %v1893, %v1893
  %v1904 = vunpack.c.l.b16 %v1902
  %v1905 = vpack.c.b16 %v1904, %v1904
  %1906 = vrot.lane.b32.xlu0 %v1905, 64
  %v1907 = vpop.permute.xlu0 %1906
  %1909 = vst.msk [vmem:[%s86] sm:$0xf] %vm808, %v1907
  %1911 = vrot.lane.b32.xlu0 %v1869, 64
  %v1912 = vpop.permute.xlu0 %1911
  %1914 = vst.msk [vmem:[#allocation2] sm:$0xff] %vm146, %v1912
  %1916 = vrot.lane.b32.xlu0 %v1863, 96
  %v1917 = vpop.permute.xlu0 %1916
  %1919 = vst.msk [vmem:[#allocation3] sm:$0xff] %vm146, %v1917
  %1921 = vrot.lane.b32.xlu0 %v1893, 64
  %v1922 = vpop.permute.xlu0 %1921
  %1924 = vst.msk [vmem:[%s627] sm:$0xff] %vm146, %v1922
  %1926 = vrot.lane.b32.xlu0 %v1887, 96
  %v1927 = vpop.permute.xlu0 %1926
  %1929 = vst.msk [vmem:[%s629] sm:$0xff] %vm146, %v1927
  %s1930 = ssub.s32 0, 0
  %s1931 = smul.u32 8, %s1930
  %p1932 = scmp.lt.s32.totalorder %s1931, 7
  %s1933 = scalar_select %p1932, %s1931, 7
  %s1934 = smul.addr %s1933, 4
  %s1935 = scalar_lea.vmem %s9, %s1934
  // Predicated region
  $region38: #{lstm_classifier_forward.4} parent=0 // pred_check
    _
  $region39: #{lstm_classifier_forward.4} parent=0 // pred_check_branch
    %1937 = sbr.rel (0) target = $region41
  $region40: #{lstm_classifier_forward.4} parent=0 // pred_region
    _
  $region41: #{lstm_classifier_forward.4} parent=0 // pred_fallthru
    _
  // Predicated region
  $region42: #{lstm_classifier_forward.4} parent=0 // pred_check
    _
  $region43: #{lstm_classifier_forward.4} parent=0 // pred_check_branch
    %1939 = sbr.rel (0) target = $region45
  $region44: #{lstm_classifier_forward.4} parent=0 // pred_region
    %s1940 = ssub.s32 0, 0
    %s1941 = smul.u32 8, %s1940
  $region45: #{lstm_classifier_forward.4} parent=0 // pred_fallthru
    _
  // Predicated region
  $region46: #{lstm_classifier_forward.4} parent=0 // pred_check
    _
  $region47: #{lstm_classifier_forward.4} parent=0 // pred_check_branch
    %1943 = sbr.rel (0) target = $region49
  $region48: #{lstm_classifier_forward.4} parent=0 // pred_region
    _
  $region49: #{lstm_classifier_forward.4} parent=0 // pred_fallthru
    _
  // Predicated region
  $region50: #{lstm_classifier_forward.4} parent=0 // pred_check
    _
  $region51: #{lstm_classifier_forward.4} parent=0 // pred_check_branch
    %1945 = sbr.rel (0) target = $region53
  $region52: #{lstm_classifier_forward.4} parent=0 // pred_region
    %s1946 = ssub.s32 0, 0
    %s1947 = smul.u32 8, %s1946
    %p1948 = scmp.lt.s32.totalorder %s1947, 7
    %s1949 = scalar_select %p1948, %s1947, 7
    %s1950 = smul.addr %s1949, 4
    %s1951 = scalar_lea.vmem %s9, %s1950
  $region53: #{lstm_classifier_forward.4} parent=0 // pred_fallthru
    _

</llo_original>
